<compile_context>
chip_gen: v7x
topology: tpu7x:2x2x1
jax: 0.10.0
libtpu: 0.0.40
codegen_flags: <defaults>
</compile_context>

<pallas_src>
import functools
import math

import jax
import jax.numpy as jnp
from jax.experimental import pallas as pl
from jax.experimental.pallas import tpu as pltpu

LN_EPS = 1e-5
LABEL_PAD = 128  # pad num_labels to one full lane tile for lane-dense output stores


# ----------------------------- in-kernel helpers -----------------------------

def _layernorm(x, gamma, beta):
    mu = jnp.mean(x, axis=-1, keepdims=True)
    var = jnp.mean((x - mu) ** 2, axis=-1, keepdims=True)
    return (x - mu) * jax.lax.rsqrt(var + LN_EPS) * gamma + beta


def _gelu(x):
    # TODO(synk): HF RoBERTa uses exact erf-GELU; tanh approximation used for robust TPU lowering.
    c = math.sqrt(2.0 / math.pi)
    return 0.5 * x * (1.0 + jnp.tanh(c * (x + 0.044715 * x * x * x)))


# ------------------------------- fused kernel --------------------------------

def roberta_fused_kernel(num_heads, batch,
                         emb_ref, bias_ref, embg_ref, embb_ref,
                         wqkv_ref, bqkv_ref, wo_ref, bo_ref, ln1g_ref, ln1b_ref,
                         w1_ref, b1_ref, w2_ref, b2_ref, ln2g_ref, ln2b_ref,
                         wd_ref, bd_ref, wp_ref, bp_ref,
                         out_ref, x_scr):
    """grid = (layers,); x_scr (B*S, H) f32 carries activations across layers."""
    layer = pl.program_id(0)
    n_layers = pl.num_programs(0)
    BS, H = x_scr.shape
    B = batch
    S = BS // B
    nh = num_heads
    hd = H // nh

    # ---- embedding LayerNorm fused into the first layer step ----
    @pl.when(layer == 0)
    def _():
        x_scr[...] = _layernorm(emb_ref[...], embg_ref[...], embb_ref[...])

    x = x_scr[...]                                          # (B*S, H) f32
    x_bf = x.astype(jnp.bfloat16)

    # ---- fused QKV projection over all B*S rows: one MXU pass, f32 accumulation ----
    # (1/sqrt(hd) is already folded into the Q columns of wqkv/bqkv at init time.)
    qkv = jnp.dot(x_bf, wqkv_ref[0],
                  preferred_element_type=jnp.float32) + bqkv_ref[0]   # (B*S, 3H) f32

    # Split heads into a single (B*nh) batch dim so attention is one batched einsum.
    # TODO(synk): at production sizes replace reshape+swapaxes with pltpu.einshape to
    # avoid the small sublane relayouts (negligible at B*S=16, hd=128).
    def heads(t):                                           # (B*S, H) -> (B*nh, S, hd)
        return jnp.swapaxes(t.reshape(B, S, nh, hd), 1, 2).reshape(B * nh, S, hd)

    q = heads(qkv[:, 0 * H:1 * H]).astype(jnp.bfloat16)
    k = heads(qkv[:, 1 * H:2 * H]).astype(jnp.bfloat16)
    v = heads(qkv[:, 2 * H:3 * H]).astype(jnp.bfloat16)

    # ---- attention: single batched einsum over B*nh, softmax stats in f32 ----
    s = jnp.einsum('nqd,nkd->nqk', q, k,
                   preferred_element_type=jnp.float32)                # (B*nh, S, S)
    s = s + bias_ref[...]                                             # (B*nh, 1, S) additive key mask
    s = s - jnp.max(s, axis=-1, keepdims=True)
    p = jnp.exp(s)
    p = p * pl.reciprocal(jnp.sum(p, axis=-1, keepdims=True), approx=True)
    ctx = jnp.einsum('nqk,nkd->nqd', p.astype(jnp.bfloat16), v,
                     preferred_element_type=jnp.float32)              # (B*nh, S, hd)
    ctx = jnp.swapaxes(ctx.reshape(B, nh, S, hd), 1, 2).reshape(BS, H)

    attn = jnp.dot(ctx.astype(jnp.bfloat16), wo_ref[0],
                   preferred_element_type=jnp.float32) + bo_ref[0]
    x1 = _layernorm(x + attn, ln1g_ref[0], ln1b_ref[0])

    # ---- FFN ----
    h = jnp.dot(x1.astype(jnp.bfloat16), w1_ref[0],
                preferred_element_type=jnp.float32) + b1_ref[0]
    h = _gelu(h)
    ffn = jnp.dot(h.astype(jnp.bfloat16), w2_ref[0],
                  preferred_element_type=jnp.float32) + b2_ref[0]
    x2 = _layernorm(x1 + ffn, ln2g_ref[0], ln2b_ref[0])
    x_scr[...] = x2

    # ---- classification head fused into the last layer: CLS rows only ----
    @pl.when(layer == n_layers - 1)
    def _():
        cls = x2.reshape(B, S, H)[:, 0, :].astype(jnp.bfloat16)       # (B, H)
        hidden = jnp.tanh(jnp.dot(cls, wd_ref[...],
                                  preferred_element_type=jnp.float32) + bd_ref[...])
        logits = jnp.dot(hidden.astype(jnp.bfloat16), wp_ref[...],
                         preferred_element_type=jnp.float32) + bp_ref[...]
        out_ref[...] = logits                                         # lane-dense (B, 128)


# ------------------------------ model definition ------------------------------

def init_params(key, cfg):
    H, F = cfg['hidden'], cfg['ffn']
    L, NL, nh = cfg['layers'], cfg['num_labels'], cfg['heads']
    hd = H // nh
    scale = 1.0 / math.sqrt(hd)
    keys = iter(jax.random.split(key, 64))

    def nrm(shape, s=0.02):
        return s * jax.random.normal(next(keys), shape, jnp.float32)

    # fold 1/sqrt(head_dim) into the Q columns of the fused QKV projection
    wqkv = nrm((L, H, 3 * H))
    wqkv = wqkv.at[:, :, :H].multiply(scale)
    bqkv = jnp.zeros((L, 1, 3 * H), jnp.float32)
    bqkv = bqkv.at[:, :, :H].multiply(scale)   # no-op on zeros; kept for generality

    wp = jnp.zeros((H, LABEL_PAD), jnp.float32).at[:, :NL].set(nrm((H, NL)))

    return {
        # embeddings (gathered in plain JAX outside the kernel)
        'word_emb': nrm((cfg['vocab'], H)),
        'pos_emb': nrm((cfg['max_pos'], H)),
        'type_emb': nrm((1, H)),
        'emb_ln_g': jnp.ones((1, H), jnp.float32),
        'emb_ln_b': jnp.zeros((1, H), jnp.float32),
        # encoder weights stacked on a leading layer axis; matmul weights in bf16
        'wqkv': wqkv.astype(jnp.bfloat16),
        'bqkv': bqkv,
        'wo': nrm((L, H, H)).astype(jnp.bfloat16),
        'bo': jnp.zeros((L, 1, H), jnp.float32),
        'ln1_g': jnp.ones((L, 1, H), jnp.float32),
        'ln1_b': jnp.zeros((L, 1, H), jnp.float32),
        'w1': nrm((L, H, F)).astype(jnp.bfloat16),
        'b1': jnp.zeros((L, 1, F), jnp.float32),
        'w2': nrm((L, F, H)).astype(jnp.bfloat16),
        'b2': jnp.zeros((L, 1, H), jnp.float32),
        'ln2_g': jnp.ones((L, 1, H), jnp.float32),
        'ln2_b': jnp.zeros((L, 1, H), jnp.float32),
        # classification head (out_proj padded to a full 128-lane tile)
        'wd': nrm((H, H)).astype(jnp.bfloat16),
        'bd': jnp.zeros((1, H), jnp.float32),
        'wp': wp.astype(jnp.bfloat16),
        'bp': jnp.zeros((1, LABEL_PAD), jnp.float32),
    }


def sequence_classification_forward(params, input_ids, attention_mask, cfg):
    B, S = input_ids.shape
    H, L, NL, nh = cfg['hidden'], cfg['layers'], cfg['num_labels'], cfg['heads']

    # ---- embeddings (gathers stay in plain JAX; their LayerNorm is fused in-kernel) ----
    mask_i = attention_mask.astype(jnp.int32)
    # RoBERTa position ids: padding_idx=1, real tokens start at 2.
    pos_ids = jnp.cumsum(mask_i, axis=-1) * mask_i + 1
    emb = (params['word_emb'][input_ids]
           + params['pos_emb'][pos_ids]
           + params['type_emb'][0]).astype(jnp.float32)               # (B, S, H)
    emb = emb.reshape(B * S, H)                                        # batch folded into rows

    # additive attention-mask bias, pre-expanded to the (B*nh) attention batch dim
    neg_bias = (1.0 - attention_mask.astype(jnp.float32)) * -1e9       # (B, S)
    neg_bias = jnp.repeat(neg_bias, nh, axis=0)[:, None, :]            # (B*nh, 1, S)

    def const_spec(a):
        nd = a.ndim
        return pl.BlockSpec(a.shape, lambda l, _nd=nd: (0,) * _nd)

    def layer_spec(a):
        nd = a.ndim
        return pl.BlockSpec((1,) + a.shape[1:], lambda l, _nd=nd: (l,) + (0,) * (_nd - 1))

    p = params
    args = (emb, neg_bias, p['emb_ln_g'], p['emb_ln_b'],
            p['wqkv'], p['bqkv'], p['wo'], p['bo'], p['ln1_g'], p['ln1_b'],
            p['w1'], p['b1'], p['w2'], p['b2'], p['ln2_g'], p['ln2_b'],
            p['wd'], p['bd'], p['wp'], p['bp'])
    in_specs = [const_spec(emb), const_spec(neg_bias),
                const_spec(p['emb_ln_g']), const_spec(p['emb_ln_b']),
                layer_spec(p['wqkv']), layer_spec(p['bqkv']),
                layer_spec(p['wo']), layer_spec(p['bo']),
                layer_spec(p['ln1_g']), layer_spec(p['ln1_b']),
                layer_spec(p['w1']), layer_spec(p['b1']),
                layer_spec(p['w2']), layer_spec(p['b2']),
                layer_spec(p['ln2_g']), layer_spec(p['ln2_b']),
                const_spec(p['wd']), const_spec(p['bd']),
                const_spec(p['wp']), const_spec(p['bp'])]

    logits_padded = pl.pallas_call(
        functools.partial(roberta_fused_kernel, nh, B),
        out_shape=jax.ShapeDtypeStruct((B, LABEL_PAD), jnp.float32),
        grid_spec=pltpu.PrefetchScalarGridSpec(
            num_scalar_prefetch=0,
            grid=(L,),                              # weights streamed once per layer
            in_specs=in_specs,
            out_specs=pl.BlockSpec((B, LABEL_PAD), lambda l: (0, 0)),
            scratch_shapes=[pltpu.VMEM((B * S, H), jnp.float32)],
        ),
        compiler_params=pltpu.CompilerParams(
            dimension_semantics=("arbitrary",),     # layer axis carries the activation scratch
            vmem_limit_bytes=48 * 1024 * 1024,      # v7x-safe; raise further on v5e/v6e at scale
        ),
    )(*args)

    return logits_padded[:, :NL]


# ------------------------------------ main ------------------------------------

if __name__ == "__main__":
    # 128-aligned miniature config: head_dim = 256 / 2 = 128
    cfg = dict(vocab=64, max_pos=64, hidden=256, ffn=512,
               layers=2, heads=2, num_labels=3)
    B, S = 2, 8

    key = jax.random.PRNGKey(0)
    k_param, k_ids = jax.random.split(key)
    params = init_params(k_param, cfg)

    input_ids = jax.random.randint(k_ids, (B, S), 0, cfg['vocab'], dtype=jnp.int32)
    attention_mask = jnp.ones((B, S), dtype=jnp.int32)

    forward = jax.jit(functools.partial(sequence_classification_forward, cfg=cfg))
    logits = forward(params, input_ids, attention_mask)
    logits = jax.block_until_ready(logits)

    assert logits.shape == (B, cfg['num_labels'])
    assert jnp.all(jnp.isfinite(logits))
    print("KERNEL_OK")
</pallas_src>

<mosaic_0001>
module attributes {stable_mosaic.version = 11 : i64} {
  func.func @roberta_fused_kernel(%arg0: i32, %arg1: memref<16x256xf32, #tpu.memory_space<vmem>>, %arg2: memref<4x1x8xf32, #tpu.memory_space<vmem>>, %arg3: memref<1x256xf32, #tpu.memory_space<vmem>>, %arg4: memref<1x256xf32, #tpu.memory_space<vmem>>, %arg5: memref<1x256x768xbf16, #tpu.memory_space<vmem>>, %arg6: memref<1x1x768xf32, #tpu.memory_space<vmem>>, %arg7: memref<1x256x256xbf16, #tpu.memory_space<vmem>>, %arg8: memref<1x1x256xf32, #tpu.memory_space<vmem>>, %arg9: memref<1x1x256xf32, #tpu.memory_space<vmem>>, %arg10: memref<1x1x256xf32, #tpu.memory_space<vmem>>, %arg11: memref<1x256x512xbf16, #tpu.memory_space<vmem>>, %arg12: memref<1x1x512xf32, #tpu.memory_space<vmem>>, %arg13: memref<1x512x256xbf16, #tpu.memory_space<vmem>>, %arg14: memref<1x1x256xf32, #tpu.memory_space<vmem>>, %arg15: memref<1x1x256xf32, #tpu.memory_space<vmem>>, %arg16: memref<1x1x256xf32, #tpu.memory_space<vmem>>, %arg17: memref<256x256xbf16, #tpu.memory_space<vmem>>, %arg18: memref<1x256xf32, #tpu.memory_space<vmem>>, %arg19: memref<256x128xbf16, #tpu.memory_space<vmem>>, %arg20: memref<1x128xf32, #tpu.memory_space<vmem>>, %arg21: memref<2x128xf32, #tpu.memory_space<vmem>>, %arg22: memref<16x256xf32, #tpu.memory_space<vmem>>) attributes {dimension_semantics = [#tpu.dimension_semantics<arbitrary>], iteration_bounds = array<i64: 2>, scalar_prefetch = 0 : i64, scratch_operands = 1 : i64, tpu.core_type = #tpu.core_type<tc>, window_params = [{pipeline_mode = #tpu.pipeline_mode<synchronous>, transform_indices = @transform_0, window_bounds = array<i64: 16, 256>}, {pipeline_mode = #tpu.pipeline_mode<synchronous>, transform_indices = @transform_1, window_bounds = array<i64: 4, 1, 8>}, {pipeline_mode = #tpu.pipeline_mode<synchronous>, transform_indices = @transform_2, window_bounds = array<i64: 1, 256>}, {pipeline_mode = #tpu.pipeline_mode<synchronous>, transform_indices = @transform_3, window_bounds = array<i64: 1, 256>}, {transform_indices = @transform_4, window_bounds = array<i64: 1, 256, 768>}, {transform_indices = @transform_5, window_bounds = array<i64: 1, 1, 768>}, {transform_indices = @transform_6, window_bounds = array<i64: 1, 256, 256>}, {transform_indices = @transform_7, window_bounds = array<i64: 1, 1, 256>}, {transform_indices = @transform_8, window_bounds = array<i64: 1, 1, 256>}, {transform_indices = @transform_9, window_bounds = array<i64: 1, 1, 256>}, {transform_indices = @transform_10, window_bounds = array<i64: 1, 256, 512>}, {transform_indices = @transform_11, window_bounds = array<i64: 1, 1, 512>}, {transform_indices = @transform_12, window_bounds = array<i64: 1, 512, 256>}, {transform_indices = @transform_13, window_bounds = array<i64: 1, 1, 256>}, {transform_indices = @transform_14, window_bounds = array<i64: 1, 1, 256>}, {transform_indices = @transform_15, window_bounds = array<i64: 1, 1, 256>}, {pipeline_mode = #tpu.pipeline_mode<synchronous>, transform_indices = @transform_16, window_bounds = array<i64: 256, 256>}, {pipeline_mode = #tpu.pipeline_mode<synchronous>, transform_indices = @transform_17, window_bounds = array<i64: 1, 256>}, {pipeline_mode = #tpu.pipeline_mode<synchronous>, transform_indices = @transform_18, window_bounds = array<i64: 256, 128>}, {pipeline_mode = #tpu.pipeline_mode<synchronous>, transform_indices = @transform_19, window_bounds = array<i64: 1, 128>}, {pipeline_mode = #tpu.pipeline_mode<synchronous>, transform_indices = @transform_20, window_bounds = array<i64: 2, 128>}]} {
    %c0_i32 = arith.constant 0 : i32
    %0 = arith.cmpi eq, %arg0, %c0_i32 : i32
    %1 = arith.extui %0 : i1 to i32
    %c0_i32_0 = arith.constant 0 : i32
    %2 = arith.cmpi ne, %1, %c0_i32_0 : i32
    scf.if %2 {
      %c0_65 = arith.constant 0 : index
      %c0_66 = arith.constant 0 : index
      %141 = vector.load %arg1[%c0_65, %c0_66] : memref<16x256xf32, #tpu.memory_space<vmem>>, vector<16x256xf32>
      %c0_67 = arith.constant 0 : index
      %c0_68 = arith.constant 0 : index
      %142 = vector.load %arg3[%c0_67, %c0_68] : memref<1x256xf32, #tpu.memory_space<vmem>>, vector<1x256xf32>
      %c0_69 = arith.constant 0 : index
      %c0_70 = arith.constant 0 : index
      %143 = vector.load %arg4[%c0_69, %c0_70] : memref<1x256xf32, #tpu.memory_space<vmem>>, vector<1x256xf32>
      %cst_71 = arith.constant dense<0.000000e+00> : vector<16xf32>
      %144 = vector.multi_reduction <add>, %141, %cst_71 [1] : vector<16x256xf32> to vector<16xf32>
      %145 = vector.shape_cast %144 : vector<16xf32> to vector<16x1xf32>
      %cst_72 = arith.constant 2.560000e+02 : f32
      %146 = vector.broadcast %cst_72 : f32 to vector<16x1xf32>
      %147 = arith.divf %145, %146 : vector<16x1xf32>
      %148 = vector.broadcast %147 : vector<16x1xf32> to vector<16x256xf32>
      %149 = arith.subf %141, %148 : vector<16x256xf32>
      %150 = arith.mulf %149, %149 : vector<16x256xf32>
      %cst_73 = arith.constant dense<0.000000e+00> : vector<16xf32>
      %151 = vector.multi_reduction <add>, %150, %cst_73 [1] : vector<16x256xf32> to vector<16xf32>
      %152 = vector.shape_cast %151 : vector<16xf32> to vector<16x1xf32>
      %cst_74 = arith.constant 2.560000e+02 : f32
      %153 = vector.broadcast %cst_74 : f32 to vector<16x1xf32>
      %154 = arith.divf %152, %153 : vector<16x1xf32>
      %155 = vector.broadcast %147 : vector<16x1xf32> to vector<16x256xf32>
      %156 = arith.subf %141, %155 : vector<16x256xf32>
      %cst_75 = arith.constant 9.99999974E-6 : f32
      %157 = vector.broadcast %cst_75 : f32 to vector<16x1xf32>
      %158 = arith.addf %154, %157 : vector<16x1xf32>
      %159 = math.rsqrt %158 : vector<16x1xf32>
      %160 = vector.broadcast %159 : vector<16x1xf32> to vector<16x256xf32>
      %161 = arith.mulf %156, %160 : vector<16x256xf32>
      %162 = vector.broadcast %142 : vector<1x256xf32> to vector<16x256xf32>
      %163 = arith.mulf %161, %162 : vector<16x256xf32>
      %164 = vector.broadcast %143 : vector<1x256xf32> to vector<16x256xf32>
      %165 = arith.addf %163, %164 : vector<16x256xf32>
      %c0_76 = arith.constant 0 : index
      %c0_77 = arith.constant 0 : index
      %166 = vector.load %arg22[%c0_76, %c0_77] : memref<16x256xf32, #tpu.memory_space<vmem>>, vector<16x256xf32>
      tpu.vector_store %arg22[%c0_76, %c0_77], %165 {strides = array<i32>} : memref<16x256xf32, #tpu.memory_space<vmem>>, vector<16x256xf32>,
    } else {
    }
    %c0 = arith.constant 0 : index
    %c0_1 = arith.constant 0 : index
    %3 = vector.load %arg22[%c0, %c0_1] : memref<16x256xf32, #tpu.memory_space<vmem>>, vector<16x256xf32>
    %4 = arith.truncf %3 : vector<16x256xf32> to vector<16x256xbf16>
    %c0_2 = arith.constant 0 : index
    %c0_3 = arith.constant 0 : index
    %c0_4 = arith.constant 0 : index
    %5 = vector.load %arg5[%c0_2, %c0_3, %c0_4] : memref<1x256x768xbf16, #tpu.memory_space<vmem>>, vector<1x256x768xbf16>
    %6 = vector.shape_cast %5 : vector<1x256x768xbf16> to vector<256x768xbf16>
    %cst = arith.constant dense<0.000000e+00> : vector<16x768xf32>
    %7 = tpu.matmul %4, %6, %cst {dimension_numbers = #tpu.dot_dimension_numbers<[1], [0], [0], [1], [0, 0, 1, 1], [], []>} : vector<16x256xbf16>, vector<256x768xbf16>, vector<16x768xf32> -> vector<16x768xf32>
    %c0_5 = arith.constant 0 : index
    %c0_6 = arith.constant 0 : index
    %c0_7 = arith.constant 0 : index
    %8 = vector.load %arg6[%c0_5, %c0_6, %c0_7] : memref<1x1x768xf32, #tpu.memory_space<vmem>>, vector<1x1x768xf32>
    %9 = vector.shape_cast %8 : vector<1x1x768xf32> to vector<1x768xf32>
    %10 = vector.broadcast %9 : vector<1x768xf32> to vector<16x768xf32>
    %11 = arith.addf %7, %10 : vector<16x768xf32>
    %12 = vector.extract_strided_slice %11 {offsets = [0, 0], sizes = [16, 256], strides = [1, 1]} : vector<16x768xf32> to vector<16x256xf32>
    %13 = vector.shape_cast %12 : vector<16x256xf32> to vector<2x8x2x128xf32>
    %14 = tpu.transpose %13, [0, 2, 1, 3] : vector<2x8x2x128xf32> -> vector<2x2x8x128xf32>
    %15 = vector.shape_cast %14 : vector<2x2x8x128xf32> to vector<4x8x128xf32>
    %16 = arith.truncf %15 : vector<4x8x128xf32> to vector<4x8x128xbf16>
    %17 = vector.extract_strided_slice %11 {offsets = [0, 256], sizes = [16, 256], strides = [1, 1]} : vector<16x768xf32> to vector<16x256xf32>
    %18 = vector.shape_cast %17 : vector<16x256xf32> to vector<2x8x2x128xf32>
    %19 = tpu.transpose %18, [0, 2, 1, 3] : vector<2x8x2x128xf32> -> vector<2x2x8x128xf32>
    %20 = vector.shape_cast %19 : vector<2x2x8x128xf32> to vector<4x8x128xf32>
    %21 = arith.truncf %20 : vector<4x8x128xf32> to vector<4x8x128xbf16>
    %22 = vector.extract_strided_slice %11 {offsets = [0, 512], sizes = [16, 256], strides = [1, 1]} : vector<16x768xf32> to vector<16x256xf32>
    %23 = vector.shape_cast %22 : vector<16x256xf32> to vector<2x8x2x128xf32>
    %24 = tpu.transpose %23, [0, 2, 1, 3] : vector<2x8x2x128xf32> -> vector<2x2x8x128xf32>
    %25 = vector.shape_cast %24 : vector<2x2x8x128xf32> to vector<4x8x128xf32>
    %26 = arith.truncf %25 : vector<4x8x128xf32> to vector<4x8x128xbf16>
    "tpu.trace_start"() <{level = 10 : i32, message = "nqd,nkd->nqk"}> : () -> ()
    %cst_8 = arith.constant dense<0.000000e+00> : vector<4x8x8xf32>
    %27 = tpu.matmul %16, %21, %cst_8 {dimension_numbers = #tpu.dot_dimension_numbers<[2], [2], [1], [1], [0, 0, 0, 1, 1, 1], [0], [0]>} : vector<4x8x128xbf16>, vector<4x8x128xbf16>, vector<4x8x8xf32> -> vector<4x8x8xf32>
    "tpu.trace_stop"() : () -> ()
    %c0_9 = arith.constant 0 : index
    %c0_10 = arith.constant 0 : index
    %c0_11 = arith.constant 0 : index
    %28 = vector.load %arg2[%c0_9, %c0_10, %c0_11] : memref<4x1x8xf32, #tpu.memory_space<vmem>>, vector<4x1x8xf32>
    %29 = vector.broadcast %28 : vector<4x1x8xf32> to vector<4x8x8xf32>
    %30 = arith.addf %27, %29 : vector<4x8x8xf32>
    %cst_12 = arith.constant dense<0xFF800000> : vector<4x8xf32>
    %31 = vector.multi_reduction <maximumf>, %30, %cst_12 [2] : vector<4x8x8xf32> to vector<4x8xf32>
    %32 = vector.shape_cast %31 : vector<4x8xf32> to vector<4x8x1xf32>
    %33 = vector.broadcast %32 : vector<4x8x1xf32> to vector<4x8x8xf32>
    %34 = arith.subf %30, %33 : vector<4x8x8xf32>
    %35 = math.exp %34 : vector<4x8x8xf32>
    %cst_13 = arith.constant dense<0.000000e+00> : vector<4x8xf32>
    %36 = vector.multi_reduction <add>, %35, %cst_13 [2] : vector<4x8x8xf32> to vector<4x8xf32>
    %37 = vector.shape_cast %36 : vector<4x8xf32> to vector<4x8x1xf32>
    %38 = tpu.reciprocal %37 {approx = true} : vector<4x8x1xf32> -> vector<4x8x1xf32>
    %39 = vector.broadcast %38 : vector<4x8x1xf32> to vector<4x8x8xf32>
    %40 = arith.mulf %35, %39 : vector<4x8x8xf32>
    %41 = arith.truncf %40 : vector<4x8x8xf32> to vector<4x8x8xbf16>
    "tpu.trace_start"() <{level = 10 : i32, message = "nqk,nkd->nqd"}> : () -> ()
    %cst_14 = arith.constant dense<0.000000e+00> : vector<4x8x128xf32>
    %42 = tpu.matmul %41, %26, %cst_14 {dimension_numbers = #tpu.dot_dimension_numbers<[2], [1], [1], [2], [0, 0, 0, 1, 1, 2], [0], [0]>} : vector<4x8x8xbf16>, vector<4x8x128xbf16>, vector<4x8x128xf32> -> vector<4x8x128xf32>
    "tpu.trace_stop"() : () -> ()
    %43 = vector.shape_cast %42 : vector<4x8x128xf32> to vector<2x2x8x128xf32>
    %44 = tpu.transpose %43, [0, 2, 1, 3] : vector<2x2x8x128xf32> -> vector<2x8x2x128xf32>
    %45 = vector.shape_cast %44 : vector<2x8x2x128xf32> to vector<16x256xf32>
    %46 = arith.truncf %45 : vector<16x256xf32> to vector<16x256xbf16>
    %c0_15 = arith.constant 0 : index
    %c0_16 = arith.constant 0 : index
    %c0_17 = arith.constant 0 : index
    %47 = vector.load %arg7[%c0_15, %c0_16, %c0_17] : memref<1x256x256xbf16, #tpu.memory_space<vmem>>, vector<1x256x256xbf16>
    %48 = vector.shape_cast %47 : vector<1x256x256xbf16> to vector<256x256xbf16>
    %cst_18 = arith.constant dense<0.000000e+00> : vector<16x256xf32>
    %49 = tpu.matmul %46, %48, %cst_18 {dimension_numbers = #tpu.dot_dimension_numbers<[1], [0], [0], [1], [0, 0, 1, 1], [], []>} : vector<16x256xbf16>, vector<256x256xbf16>, vector<16x256xf32> -> vector<16x256xf32>
    %c0_19 = arith.constant 0 : index
    %c0_20 = arith.constant 0 : index
    %c0_21 = arith.constant 0 : index
    %50 = vector.load %arg8[%c0_19, %c0_20, %c0_21] : memref<1x1x256xf32, #tpu.memory_space<vmem>>, vector<1x1x256xf32>
    %51 = vector.shape_cast %50 : vector<1x1x256xf32> to vector<1x256xf32>
    %52 = vector.broadcast %51 : vector<1x256xf32> to vector<16x256xf32>
    %53 = arith.addf %49, %52 : vector<16x256xf32>
    %54 = arith.addf %3, %53 : vector<16x256xf32>
    %c0_22 = arith.constant 0 : index
    %c0_23 = arith.constant 0 : index
    %c0_24 = arith.constant 0 : index
    %55 = vector.load %arg9[%c0_22, %c0_23, %c0_24] : memref<1x1x256xf32, #tpu.memory_space<vmem>>, vector<1x1x256xf32>
    %56 = vector.shape_cast %55 : vector<1x1x256xf32> to vector<1x256xf32>
    %c0_25 = arith.constant 0 : index
    %c0_26 = arith.constant 0 : index
    %c0_27 = arith.constant 0 : index
    %57 = vector.load %arg10[%c0_25, %c0_26, %c0_27] : memref<1x1x256xf32, #tpu.memory_space<vmem>>, vector<1x1x256xf32>
    %58 = vector.shape_cast %57 : vector<1x1x256xf32> to vector<1x256xf32>
    %cst_28 = arith.constant dense<0.000000e+00> : vector<16xf32>
    %59 = vector.multi_reduction <add>, %54, %cst_28 [1] : vector<16x256xf32> to vector<16xf32>
    %60 = vector.shape_cast %59 : vector<16xf32> to vector<16x1xf32>
    %cst_29 = arith.constant 2.560000e+02 : f32
    %61 = vector.broadcast %cst_29 : f32 to vector<16x1xf32>
    %62 = arith.divf %60, %61 : vector<16x1xf32>
    %63 = vector.broadcast %62 : vector<16x1xf32> to vector<16x256xf32>
    %64 = arith.subf %54, %63 : vector<16x256xf32>
    %65 = arith.mulf %64, %64 : vector<16x256xf32>
    %cst_30 = arith.constant dense<0.000000e+00> : vector<16xf32>
    %66 = vector.multi_reduction <add>, %65, %cst_30 [1] : vector<16x256xf32> to vector<16xf32>
    %67 = vector.shape_cast %66 : vector<16xf32> to vector<16x1xf32>
    %cst_31 = arith.constant 2.560000e+02 : f32
    %68 = vector.broadcast %cst_31 : f32 to vector<16x1xf32>
    %69 = arith.divf %67, %68 : vector<16x1xf32>
    %70 = vector.broadcast %62 : vector<16x1xf32> to vector<16x256xf32>
    %71 = arith.subf %54, %70 : vector<16x256xf32>
    %cst_32 = arith.constant 9.99999974E-6 : f32
    %72 = vector.broadcast %cst_32 : f32 to vector<16x1xf32>
    %73 = arith.addf %69, %72 : vector<16x1xf32>
    %74 = math.rsqrt %73 : vector<16x1xf32>
    %75 = vector.broadcast %74 : vector<16x1xf32> to vector<16x256xf32>
    %76 = arith.mulf %71, %75 : vector<16x256xf32>
    %77 = vector.broadcast %56 : vector<1x256xf32> to vector<16x256xf32>
    %78 = arith.mulf %76, %77 : vector<16x256xf32>
    %79 = vector.broadcast %58 : vector<1x256xf32> to vector<16x256xf32>
    %80 = arith.addf %78, %79 : vector<16x256xf32>
    %81 = arith.truncf %80 : vector<16x256xf32> to vector<16x256xbf16>
    %c0_33 = arith.constant 0 : index
    %c0_34 = arith.constant 0 : index
    %c0_35 = arith.constant 0 : index
    %82 = vector.load %arg11[%c0_33, %c0_34, %c0_35] : memref<1x256x512xbf16, #tpu.memory_space<vmem>>, vector<1x256x512xbf16>
    %83 = vector.shape_cast %82 : vector<1x256x512xbf16> to vector<256x512xbf16>
    %cst_36 = arith.constant dense<0.000000e+00> : vector<16x512xf32>
    %84 = tpu.matmul %81, %83, %cst_36 {dimension_numbers = #tpu.dot_dimension_numbers<[1], [0], [0], [1], [0, 0, 1, 1], [], []>} : vector<16x256xbf16>, vector<256x512xbf16>, vector<16x512xf32> -> vector<16x512xf32>
    %c0_37 = arith.constant 0 : index
    %c0_38 = arith.constant 0 : index
    %c0_39 = arith.constant 0 : index
    %85 = vector.load %arg12[%c0_37, %c0_38, %c0_39] : memref<1x1x512xf32, #tpu.memory_space<vmem>>, vector<1x1x512xf32>
    %86 = vector.shape_cast %85 : vector<1x1x512xf32> to vector<1x512xf32>
    %87 = vector.broadcast %86 : vector<1x512xf32> to vector<16x512xf32>
    %88 = arith.addf %84, %87 : vector<16x512xf32>
    %cst_40 = arith.constant 5.000000e-01 : f32
    %89 = vector.broadcast %cst_40 : f32 to vector<16x512xf32>
    %90 = arith.mulf %89, %88 : vector<16x512xf32>
    %cst_41 = arith.constant 4.471500e-02 : f32
    %91 = vector.broadcast %cst_41 : f32 to vector<16x512xf32>
    %92 = arith.mulf %91, %88 : vector<16x512xf32>
    %93 = arith.mulf %92, %88 : vector<16x512xf32>
    %94 = arith.mulf %93, %88 : vector<16x512xf32>
    %95 = arith.addf %88, %94 : vector<16x512xf32>
    %cst_42 = arith.constant 0.797884583 : f32
    %96 = vector.broadcast %cst_42 : f32 to vector<16x512xf32>
    %97 = arith.mulf %96, %95 : vector<16x512xf32>
    %98 = math.tanh %97 : vector<16x512xf32>
    %cst_43 = arith.constant 1.000000e+00 : f32
    %99 = vector.broadcast %cst_43 : f32 to vector<16x512xf32>
    %100 = arith.addf %99, %98 : vector<16x512xf32>
    %101 = arith.mulf %90, %100 : vector<16x512xf32>
    %102 = arith.truncf %101 : vector<16x512xf32> to vector<16x512xbf16>
    %c0_44 = arith.constant 0 : index
    %c0_45 = arith.constant 0 : index
    %c0_46 = arith.constant 0 : index
    %103 = vector.load %arg13[%c0_44, %c0_45, %c0_46] : memref<1x512x256xbf16, #tpu.memory_space<vmem>>, vector<1x512x256xbf16>
    %104 = vector.shape_cast %103 : vector<1x512x256xbf16> to vector<512x256xbf16>
    %cst_47 = arith.constant dense<0.000000e+00> : vector<16x256xf32>
    %105 = tpu.matmul %102, %104, %cst_47 {dimension_numbers = #tpu.dot_dimension_numbers<[1], [0], [0], [1], [0, 0, 1, 1], [], []>} : vector<16x512xbf16>, vector<512x256xbf16>, vector<16x256xf32> -> vector<16x256xf32>
    %c0_48 = arith.constant 0 : index
    %c0_49 = arith.constant 0 : index
    %c0_50 = arith.constant 0 : index
    %106 = vector.load %arg14[%c0_48, %c0_49, %c0_50] : memref<1x1x256xf32, #tpu.memory_space<vmem>>, vector<1x1x256xf32>
    %107 = vector.shape_cast %106 : vector<1x1x256xf32> to vector<1x256xf32>
    %108 = vector.broadcast %107 : vector<1x256xf32> to vector<16x256xf32>
    %109 = arith.addf %105, %108 : vector<16x256xf32>
    %110 = arith.addf %80, %109 : vector<16x256xf32>
    %c0_51 = arith.constant 0 : index
    %c0_52 = arith.constant 0 : index
    %c0_53 = arith.constant 0 : index
    %111 = vector.load %arg15[%c0_51, %c0_52, %c0_53] : memref<1x1x256xf32, #tpu.memory_space<vmem>>, vector<1x1x256xf32>
    %112 = vector.shape_cast %111 : vector<1x1x256xf32> to vector<1x256xf32>
    %c0_54 = arith.constant 0 : index
    %c0_55 = arith.constant 0 : index
    %c0_56 = arith.constant 0 : index
    %113 = vector.load %arg16[%c0_54, %c0_55, %c0_56] : memref<1x1x256xf32, #tpu.memory_space<vmem>>, vector<1x1x256xf32>
    %114 = vector.shape_cast %113 : vector<1x1x256xf32> to vector<1x256xf32>
    %cst_57 = arith.constant dense<0.000000e+00> : vector<16xf32>
    %115 = vector.multi_reduction <add>, %110, %cst_57 [1] : vector<16x256xf32> to vector<16xf32>
    %116 = vector.shape_cast %115 : vector<16xf32> to vector<16x1xf32>
    %cst_58 = arith.constant 2.560000e+02 : f32
    %117 = vector.broadcast %cst_58 : f32 to vector<16x1xf32>
    %118 = arith.divf %116, %117 : vector<16x1xf32>
    %119 = vector.broadcast %118 : vector<16x1xf32> to vector<16x256xf32>
    %120 = arith.subf %110, %119 : vector<16x256xf32>
    %121 = arith.mulf %120, %120 : vector<16x256xf32>
    %cst_59 = arith.constant dense<0.000000e+00> : vector<16xf32>
    %122 = vector.multi_reduction <add>, %121, %cst_59 [1] : vector<16x256xf32> to vector<16xf32>
    %123 = vector.shape_cast %122 : vector<16xf32> to vector<16x1xf32>
    %cst_60 = arith.constant 2.560000e+02 : f32
    %124 = vector.broadcast %cst_60 : f32 to vector<16x1xf32>
    %125 = arith.divf %123, %124 : vector<16x1xf32>
    %126 = vector.broadcast %118 : vector<16x1xf32> to vector<16x256xf32>
    %127 = arith.subf %110, %126 : vector<16x256xf32>
    %cst_61 = arith.constant 9.99999974E-6 : f32
    %128 = vector.broadcast %cst_61 : f32 to vector<16x1xf32>
    %129 = arith.addf %125, %128 : vector<16x1xf32>
    %130 = math.rsqrt %129 : vector<16x1xf32>
    %131 = vector.broadcast %130 : vector<16x1xf32> to vector<16x256xf32>
    %132 = arith.mulf %127, %131 : vector<16x256xf32>
    %133 = vector.broadcast %112 : vector<1x256xf32> to vector<16x256xf32>
    %134 = arith.mulf %132, %133 : vector<16x256xf32>
    %135 = vector.broadcast %114 : vector<1x256xf32> to vector<16x256xf32>
    %136 = arith.addf %134, %135 : vector<16x256xf32>
    %c0_62 = arith.constant 0 : index
    %c0_63 = arith.constant 0 : index
    %137 = vector.load %arg22[%c0_62, %c0_63] : memref<16x256xf32, #tpu.memory_space<vmem>>, vector<16x256xf32>
    tpu.vector_store %arg22[%c0_62, %c0_63], %136 {strides = array<i32>} : memref<16x256xf32, #tpu.memory_space<vmem>>, vector<16x256xf32>,
    %c1_i32 = arith.constant 1 : i32
    %138 = arith.cmpi eq, %arg0, %c1_i32 : i32
    %139 = arith.extui %138 : i1 to i32
    %c0_i32_64 = arith.constant 0 : i32
    %140 = arith.cmpi ne, %139, %c0_i32_64 : i32
    scf.if %140 {
      %141 = vector.shape_cast %136 : vector<16x256xf32> to vector<2x8x256xf32>
      %142 = vector.extract_strided_slice %141 {offsets = [0, 0, 0], sizes = [2, 1, 256], strides = [1, 1, 1]} : vector<2x8x256xf32> to vector<2x1x256xf32>
      %143 = vector.shape_cast %142 : vector<2x1x256xf32> to vector<2x256xf32>
      %144 = arith.truncf %143 : vector<2x256xf32> to vector<2x256xbf16>
      %c0_65 = arith.constant 0 : index
      %c0_66 = arith.constant 0 : index
      %145 = vector.load %arg17[%c0_65, %c0_66] : memref<256x256xbf16, #tpu.memory_space<vmem>>, vector<256x256xbf16>
      %cst_67 = arith.constant dense<0.000000e+00> : vector<2x256xf32>
      %146 = tpu.matmul %144, %145, %cst_67 {dimension_numbers = #tpu.dot_dimension_numbers<[1], [0], [0], [1], [0, 0, 1, 1], [], []>} : vector<2x256xbf16>, vector<256x256xbf16>, vector<2x256xf32> -> vector<2x256xf32>
      %c0_68 = arith.constant 0 : index
      %c0_69 = arith.constant 0 : index
      %147 = vector.load %arg18[%c0_68, %c0_69] : memref<1x256xf32, #tpu.memory_space<vmem>>, vector<1x256xf32>
      %148 = vector.broadcast %147 : vector<1x256xf32> to vector<2x256xf32>
      %149 = arith.addf %146, %148 : vector<2x256xf32>
      %150 = math.tanh %149 : vector<2x256xf32>
      %151 = arith.truncf %150 : vector<2x256xf32> to vector<2x256xbf16>
      %c0_70 = arith.constant 0 : index
      %c0_71 = arith.constant 0 : index
      %152 = vector.load %arg19[%c0_70, %c0_71] : memref<256x128xbf16, #tpu.memory_space<vmem>>, vector<256x128xbf16>
      %cst_72 = arith.constant dense<0.000000e+00> : vector<2x128xf32>
      %153 = tpu.matmul %151, %152, %cst_72 {dimension_numbers = #tpu.dot_dimension_numbers<[1], [0], [0], [1], [0, 0, 1, 1], [], []>} : vector<2x256xbf16>, vector<256x128xbf16>, vector<2x128xf32> -> vector<2x128xf32>
      %c0_73 = arith.constant 0 : index
      %c0_74 = arith.constant 0 : index
      %154 = vector.load %arg20[%c0_73, %c0_74] : memref<1x128xf32, #tpu.memory_space<vmem>>, vector<1x128xf32>
      %155 = vector.broadcast %154 : vector<1x128xf32> to vector<2x128xf32>
      %156 = arith.addf %153, %155 : vector<2x128xf32>
      %c0_75 = arith.constant 0 : index
      %c0_76 = arith.constant 0 : index
      %157 = vector.load %arg21[%c0_75, %c0_76] : memref<2x128xf32, #tpu.memory_space<vmem>>, vector<2x128xf32>
      tpu.vector_store %arg21[%c0_75, %c0_76], %156 {strides = array<i32>} : memref<2x128xf32, #tpu.memory_space<vmem>>, vector<2x128xf32>,
    } else {
    }
    return
  }
  func.func @transform_0(%arg0: i32) -> (i32, i32) {
    %c0_i32 = arith.constant 0 : i32
    %c0_i32_0 = arith.constant 0 : i32
    %c0_i32_1 = arith.constant 0 : i32
    return %c0_i32, %c0_i32_0 : i32, i32
  }
  func.func @transform_1(%arg0: i32) -> (i32, i32, i32) {
    %c0_i32 = arith.constant 0 : i32
    %c0_i32_0 = arith.constant 0 : i32
    %c0_i32_1 = arith.constant 0 : i32
    %c0_i32_2 = arith.constant 0 : i32
    return %c0_i32, %c0_i32_0, %c0_i32_1 : i32, i32, i32
  }
  func.func @transform_2(%arg0: i32) -> (i32, i32) {
    %c0_i32 = arith.constant 0 : i32
    %c0_i32_0 = arith.constant 0 : i32
    %c0_i32_1 = arith.constant 0 : i32
    return %c0_i32, %c0_i32_0 : i32, i32
  }
  func.func @transform_3(%arg0: i32) -> (i32, i32) {
    %c0_i32 = arith.constant 0 : i32
    %c0_i32_0 = arith.constant 0 : i32
    %c0_i32_1 = arith.constant 0 : i32
    return %c0_i32, %c0_i32_0 : i32, i32
  }
  func.func @transform_4(%arg0: i32) -> (i32, i32, i32) {
    %c0_i32 = arith.constant 0 : i32
    %c0_i32_0 = arith.constant 0 : i32
    %c0_i32_1 = arith.constant 0 : i32
    return %arg0, %c0_i32, %c0_i32_0 : i32, i32, i32
  }
  func.func @transform_5(%arg0: i32) -> (i32, i32, i32) {
    %c0_i32 = arith.constant 0 : i32
    %c0_i32_0 = arith.constant 0 : i32
    %c0_i32_1 = arith.constant 0 : i32
    return %arg0, %c0_i32, %c0_i32_0 : i32, i32, i32
  }
  func.func @transform_6(%arg0: i32) -> (i32, i32, i32) {
    %c0_i32 = arith.constant 0 : i32
    %c0_i32_0 = arith.constant 0 : i32
    %c0_i32_1 = arith.constant 0 : i32
    return %arg0, %c0_i32, %c0_i32_0 : i32, i32, i32
  }
  func.func @transform_7(%arg0: i32) -> (i32, i32, i32) {
    %c0_i32 = arith.constant 0 : i32
    %c0_i32_0 = arith.constant 0 : i32
    %c0_i32_1 = arith.constant 0 : i32
    return %arg0, %c0_i32, %c0_i32_0 : i32, i32, i32
  }
  func.func @transform_8(%arg0: i32) -> (i32, i32, i32) {
    %c0_i32 = arith.constant 0 : i32
    %c0_i32_0 = arith.constant 0 : i32
    %c0_i32_1 = arith.constant 0 : i32
    return %arg0, %c0_i32, %c0_i32_0 : i32, i32, i32
  }
  func.func @transform_9(%arg0: i32) -> (i32, i32, i32) {
    %c0_i32 = arith.constant 0 : i32
    %c0_i32_0 = arith.constant 0 : i32
    %c0_i32_1 = arith.constant 0 : i32
    return %arg0, %c0_i32, %c0_i32_0 : i32, i32, i32
  }
  func.func @transform_10(%arg0: i32) -> (i32, i32, i32) {
    %c0_i32 = arith.constant 0 : i32
    %c0_i32_0 = arith.constant 0 : i32
    %c0_i32_1 = arith.constant 0 : i32
    return %arg0, %c0_i32, %c0_i32_0 : i32, i32, i32
  }
  func.func @transform_11(%arg0: i32) -> (i32, i32, i32) {
    %c0_i32 = arith.constant 0 : i32
    %c0_i32_0 = arith.constant 0 : i32
    %c0_i32_1 = arith.constant 0 : i32
    return %arg0, %c0_i32, %c0_i32_0 : i32, i32, i32
  }
  func.func @transform_12(%arg0: i32) -> (i32, i32, i32) {
    %c0_i32 = arith.constant 0 : i32
    %c0_i32_0 = arith.constant 0 : i32
    %c0_i32_1 = arith.constant 0 : i32
    return %arg0, %c0_i32, %c0_i32_0 : i32, i32, i32
  }
  func.func @transform_13(%arg0: i32) -> (i32, i32, i32) {
    %c0_i32 = arith.constant 0 : i32
    %c0_i32_0 = arith.constant 0 : i32
    %c0_i32_1 = arith.constant 0 : i32
    return %arg0, %c0_i32, %c0_i32_0 : i32, i32, i32
  }
  func.func @transform_14(%arg0: i32) -> (i32, i32, i32) {
    %c0_i32 = arith.constant 0 : i32
    %c0_i32_0 = arith.constant 0 : i32
    %c0_i32_1 = arith.constant 0 : i32
    return %arg0, %c0_i32, %c0_i32_0 : i32, i32, i32
  }
  func.func @transform_15(%arg0: i32) -> (i32, i32, i32) {
    %c0_i32 = arith.constant 0 : i32
    %c0_i32_0 = arith.constant 0 : i32
    %c0_i32_1 = arith.constant 0 : i32
    return %arg0, %c0_i32, %c0_i32_0 : i32, i32, i32
  }
  func.func @transform_16(%arg0: i32) -> (i32, i32) {
    %c0_i32 = arith.constant 0 : i32
    %c0_i32_0 = arith.constant 0 : i32
    %c0_i32_1 = arith.constant 0 : i32
    return %c0_i32, %c0_i32_0 : i32, i32
  }
  func.func @transform_17(%arg0: i32) -> (i32, i32) {
    %c0_i32 = arith.constant 0 : i32
    %c0_i32_0 = arith.constant 0 : i32
    %c0_i32_1 = arith.constant 0 : i32
    return %c0_i32, %c0_i32_0 : i32, i32
  }
  func.func @transform_18(%arg0: i32) -> (i32, i32) {
    %c0_i32 = arith.constant 0 : i32
    %c0_i32_0 = arith.constant 0 : i32
    %c0_i32_1 = arith.constant 0 : i32
    return %c0_i32, %c0_i32_0 : i32, i32
  }
  func.func @transform_19(%arg0: i32) -> (i32, i32) {
    %c0_i32 = arith.constant 0 : i32
    %c0_i32_0 = arith.constant 0 : i32
    %c0_i32_1 = arith.constant 0 : i32
    return %c0_i32, %c0_i32_0 : i32, i32
  }
  func.func @transform_20(%arg0: i32) -> (i32, i32) {
    %c0_i32 = arith.constant 0 : i32
    %c0_i32_0 = arith.constant 0 : i32
    %c0_i32_1 = arith.constant 0 : i32
    return %c0_i32, %c0_i32_0 : i32, i32
  }
}

</mosaic_0001>

<llo_original>
// kernel: sequence_classification_forward.1
$region0: #{sequence_classification_forward.1}
  #allocation0 [shape = 'u32[]', space=smem, size = 0x4, offset = 0x4, fixed_abs, tag = 'smem constant byte address 0x4 - core index']
  #allocation1 [shape = 'u32[144,128]{1,0:T(1,128)}', space=vmem, size = 0x12000, scoped, tag = 'internal scratch']
  #allocation2 [shape = 'f32[16,256]{1,0:T(8,128)}', space=vmem, size = 0x4000, scoped, tag = 'scratch operand']
  %s0 = inlined_call_operand.vmem [shape: f32[16,256], index: 0, kind: input, shape index: {}]
  %s1 = inlined_call_operand.vmem [shape: f32[4,1,8], index: 1, kind: input, shape index: {}]
  %s2 = inlined_call_operand.vmem [shape: f32[1,256], index: 2, kind: input, shape index: {}]
  %s3 = inlined_call_operand.vmem [shape: f32[1,256], index: 3, kind: input, shape index: {}]
  %s4 = inlined_call_operand.hbm [shape: bf16[2,256,768], index: 4, kind: input, shape index: {}]
  %s5 = inlined_call_operand.vmem [shape: f32[2,1,768], index: 5, kind: input, shape index: {}]
  %s6 = inlined_call_operand.vmem [shape: bf16[2,256,256], index: 6, kind: input, shape index: {}]
  %s7 = inlined_call_operand.vmem [shape: f32[2,1,256], index: 7, kind: input, shape index: {}]
  %s8 = inlined_call_operand.vmem [shape: f32[2,1,256], index: 8, kind: input, shape index: {}]
  %s9 = inlined_call_operand.vmem [shape: f32[2,1,256], index: 9, kind: input, shape index: {}]
  %s10 = inlined_call_operand.hbm [shape: bf16[2,256,512], index: 10, kind: input, shape index: {}]
  %s11 = inlined_call_operand.vmem [shape: f32[2,1,512], index: 11, kind: input, shape index: {}]
  %s12 = inlined_call_operand.hbm [shape: bf16[2,512,256], index: 12, kind: input, shape index: {}]
  %s13 = inlined_call_operand.vmem [shape: f32[2,1,256], index: 13, kind: input, shape index: {}]
  %s14 = inlined_call_operand.vmem [shape: f32[2,1,256], index: 14, kind: input, shape index: {}]
  %s15 = inlined_call_operand.vmem [shape: f32[2,1,256], index: 15, kind: input, shape index: {}]
  %s16 = inlined_call_operand.hbm [shape: bf16[256,256], index: 16, kind: input, shape index: {}]
  %s17 = inlined_call_operand.vmem [shape: f32[1,256], index: 17, kind: input, shape index: {}]
  %s18 = inlined_call_operand.hbm [shape: bf16[256,128], index: 18, kind: input, shape index: {}]
  %s19 = inlined_call_operand.vmem [shape: f32[1,128], index: 19, kind: input, shape index: {}]
  %s20 = inlined_call_operand.hbm [shape: f32[2,128], index: 20, kind: output, shape index: {}]
  %s21 = sld [smem:[#allocation0]]
  $region141: #{sequence_classification_forward.1} parent=0
    _
  %s23 = ssub.s32 1, %s21
  %s24 = scalar_select 0, %s23, %s21
  $region1: #{sequence_classification_forward.1} parent=0
    #allocation3 [shape = 'u8[786432]{0}', space=vmem, size = 0xc0000, scoped, tag = 'input window, operand 4']
    #allocation4 [shape = 's32[2]{0}', space=sflag, size = 0x8, scoped, tag = 'scoped memory for sequence_classification_forward.1']
    #allocation5 [shape = 's32[2]{0}', space=sflag, size = 0x8, scoped, tag = 'scoped memory for sequence_classification_forward.1']
    #allocation6 [shape = 'u8[524288]{0}', space=vmem, size = 0x80000, scoped, tag = 'input window, operand 10']
    #allocation7 [shape = 's32[2]{0}', space=sflag, size = 0x8, scoped, tag = 'scoped memory for sequence_classification_forward.1']
    #allocation8 [shape = 'u8[524288]{0}', space=vmem, size = 0x80000, scoped, tag = 'input window, operand 12']
    #allocation9 [shape = 'u8[131072]{0}', space=vmem, size = 0x20000, scoped, tag = 'input window, operand 16, single buffered']
    #allocation10 [shape = 's32[1]{0}', space=sflag, size = 0x4, scoped, tag = 'scoped memory for sequence_classification_forward.1']
    #allocation11 [shape = 'u8[65536]{0}', space=vmem, size = 0x10000, scoped, tag = 'input window, operand 18, single buffered']
    #allocation12 [shape = 'u8[1024]{0}', space=vmem, size = 0x400, scoped, tag = 'output window, operand 0, single buffered']
    %25 = vsyncpa [#allocation4], 0
    %s26 = scalar_lea.sflag [#allocation4], 1
    %27 = vsyncpa %s26, 0
    %28 = vsyncpa [#allocation7], 0
    %s29 = scalar_lea.sflag [#allocation7], 1
    %30 = vsyncpa %s29, 0
    %31 = vsyncpa [#allocation10], 0
    %32 = vsyncpa [#allocation5], 0
    loop: start=0, step=1, limit=4
    $region2: #{sequence_classification_forward.1} parent=1 // loop_pre_header
      _
    $region3: #{sequence_classification_forward.1} parent=1 // loop_header
      %s34 = sphi 0, %s38
      %p35 = scmp.ge.s32.totalorder %s34, 4
      %s42 = sphi 0, %s42
      %s44 = sphi 0, %s42
      %s45 = sphi 0, %s44
      %s59 = sphi 0, %s45
      %s63 = sphi 0, %s63
      %s65 = sphi 0, %s63
      %s66 = sphi 0, %s65
      %s80 = sphi 0, %s66
      %s84 = sphi 0, %s84
      %s86 = sphi 0, %s84
      %s87 = sphi 0, %s86
      %s101 = sphi 0, %s87
      %s105 = sphi 0, %s105
      %s107 = sphi 0, %s105
      %s108 = sphi 0, %s107
      %s122 = sphi 0, %s108
      %s128 = sphi 0, %s130
      %s131 = sphi 0, %s128
      %s132 = sphi 0, %s131
      %s148 = sphi 0, %s132
      %s154 = sphi 0, %s156
      %s157 = sphi 0, %s154
      %s158 = sphi 0, %s157
      %s174 = sphi 0, %s158
      %s180 = sphi 0, %s182
      %s183 = sphi 0, %s180
      %s184 = sphi 0, %s183
      %s200 = sphi 0, %s184
      %s206 = sphi 0, %s208
      %s209 = sphi 0, %s206
      %s210 = sphi 0, %s209
      %s226 = sphi 0, %s210
      %s232 = sphi 0, %s234
      %s235 = sphi 0, %s232
      %s236 = sphi 0, %s235
      %s252 = sphi 0, %s236
      %s258 = sphi 0, %s260
      %s261 = sphi 0, %s258
      %s262 = sphi 0, %s261
      %s278 = sphi 0, %s262
      %s284 = sphi 0, %s286
      %s287 = sphi 0, %s284
      %s288 = sphi 0, %s287
      %s304 = sphi 0, %s288
      %s310 = sphi 0, %s312
      %s313 = sphi 0, %s310
      %s314 = sphi 0, %s313
      %s330 = sphi 0, %s314
      %s336 = sphi 0, %s338
      %s339 = sphi 0, %s336
      %s340 = sphi 0, %s339
      %s356 = sphi 0, %s340
      %s362 = sphi 0, %s364
      %s365 = sphi 0, %s362
      %s366 = sphi 0, %s365
      %s382 = sphi 0, %s366
      %s388 = sphi 0, %s390
      %s391 = sphi 0, %s388
      %s392 = sphi 0, %s391
      %s408 = sphi 0, %s392
      %s414 = sphi 0, %s416
      %s417 = sphi 0, %s414
      %s418 = sphi 0, %s417
      %s434 = sphi 0, %s418
      %s438 = sphi 0, %s438
      %s440 = sphi 0, %s438
      %s441 = sphi 0, %s440
      %s455 = sphi 0, %s441
      %s459 = sphi 0, %s459
      %s461 = sphi 0, %s459
      %s462 = sphi 0, %s461
      %s476 = sphi 0, %s462
      %s480 = sphi 0, %s480
      %s482 = sphi 0, %s480
      %s483 = sphi 0, %s482
      %s497 = sphi 0, %s483
      %s501 = sphi 0, %s501
      %s503 = sphi 0, %s501
      %s504 = sphi 0, %s503
      %s518 = sphi 0, %s504
      %s522 = sphi 0, %s522
      %s524 = sphi 0, %s522
      %s525 = sphi 0, %s524
      %s539 = sphi 0, %s525
    $region4: #{sequence_classification_forward.1} parent=1 // loop_header_branch
      %37 = sbr.rel (%p35) target = $region8
    $region5: #{sequence_classification_forward.1} parent=1 // loop_body
      %s39 = ssub.s32 %s34, 1
      %s40 = ssub.s32 %s34, 2
      %s41 = sadd.s32 %s34, 1
      %s43 = sadd.s32 %s42, 1
      %p46 = scmp.eq.s32.totalorder %s34, 1
      %p47 = scmp.ne.s32.totalorder %s42, %s44
      %p48 = scmp.eq.s32.totalorder %s34, 0
      %p49 = por %p47, %p48
      %p50 = scmp.ne.s32.totalorder %s42, %s44
      %p51 = scmp.eq.s32.totalorder %s39, 1
      %p52 = por %p50, %p51
      %p53 = scmp.ne.s32.totalorder %s44, %s45
      %p54 = scmp.eq.s32.totalorder %s39, 0
      %p55 = por %p53, %p54
      %p56 = scmp.ne.s32.totalorder %s44, %s45
      %p57 = scmp.eq.s32.totalorder %s40, 1
      %p58 = por %p56, %p57
      %p60 = scmp.ne.s32.totalorder %s45, %s59
      %p61 = scmp.eq.s32.totalorder %s40, 0
      %p62 = por %p60, %p61
      %s64 = sadd.s32 %s63, 1
      %p67 = scmp.eq.s32.totalorder %s34, 1
      %p68 = scmp.ne.s32.totalorder %s63, %s65
      %p69 = scmp.eq.s32.totalorder %s34, 0
      %p70 = por %p68, %p69
      %p71 = scmp.ne.s32.totalorder %s63, %s65
      %p72 = scmp.eq.s32.totalorder %s39, 1
      %p73 = por %p71, %p72
      %p74 = scmp.ne.s32.totalorder %s65, %s66
      %p75 = scmp.eq.s32.totalorder %s39, 0
      %p76 = por %p74, %p75
      %p77 = scmp.ne.s32.totalorder %s65, %s66
      %p78 = scmp.eq.s32.totalorder %s40, 1
      %p79 = por %p77, %p78
      %p81 = scmp.ne.s32.totalorder %s66, %s80
      %p82 = scmp.eq.s32.totalorder %s40, 0
      %p83 = por %p81, %p82
      %s85 = sadd.s32 %s84, 1
      %p88 = scmp.eq.s32.totalorder %s34, 1
      %p89 = scmp.ne.s32.totalorder %s84, %s86
      %p90 = scmp.eq.s32.totalorder %s34, 0
      %p91 = por %p89, %p90
      %p92 = scmp.ne.s32.totalorder %s84, %s86
      %p93 = scmp.eq.s32.totalorder %s39, 1
      %p94 = por %p92, %p93
      %p95 = scmp.ne.s32.totalorder %s86, %s87
      %p96 = scmp.eq.s32.totalorder %s39, 0
      %p97 = por %p95, %p96
      %p98 = scmp.ne.s32.totalorder %s86, %s87
      %p99 = scmp.eq.s32.totalorder %s40, 1
      %p100 = por %p98, %p99
      %p102 = scmp.ne.s32.totalorder %s87, %s101
      %p103 = scmp.eq.s32.totalorder %s40, 0
      %p104 = por %p102, %p103
      %s106 = sadd.s32 %s105, 1
      %p109 = scmp.eq.s32.totalorder %s34, 1
      %p110 = scmp.ne.s32.totalorder %s105, %s107
      %p111 = scmp.eq.s32.totalorder %s34, 0
      %p112 = por %p110, %p111
      %p113 = scmp.ne.s32.totalorder %s105, %s107
      %p114 = scmp.eq.s32.totalorder %s39, 1
      %p115 = por %p113, %p114
      %p116 = scmp.ne.s32.totalorder %s107, %s108
      %p117 = scmp.eq.s32.totalorder %s39, 0
      %p118 = por %p116, %p117
      %p119 = scmp.ne.s32.totalorder %s107, %s108
      %p120 = scmp.eq.s32.totalorder %s40, 1
      %p121 = por %p119, %p120
      %p123 = scmp.ne.s32.totalorder %s108, %s122
      %p124 = scmp.eq.s32.totalorder %s40, 0
      %p125 = por %p123, %p124
      %s126 = ssub.s32 %s34, %s41
      %p127 = scmp.eq.s32.totalorder %s126, 0
      %s129 = sadd.s32 %s128, 1
      %s130 = scalar_select %p127, %s128, %s129
      %p133 = pneg %p127
      %p134 = scmp.eq.s32.totalorder %s34, 1
      %p135 = por %p133, %p134
      %p136 = scmp.ne.s32.totalorder %s128, %s131
      %p137 = scmp.eq.s32.totalorder %s34, 0
      %p138 = por %p136, %p137
      %p139 = scmp.ne.s32.totalorder %s128, %s131
      %p140 = scmp.eq.s32.totalorder %s39, 1
      %p141 = por %p139, %p140
      %p142 = scmp.ne.s32.totalorder %s131, %s132
      %p143 = scmp.eq.s32.totalorder %s39, 0
      %p144 = por %p142, %p143
      %p145 = scmp.ne.s32.totalorder %s131, %s132
      %p146 = scmp.eq.s32.totalorder %s40, 1
      %p147 = por %p145, %p146
      %p149 = scmp.ne.s32.totalorder %s132, %s148
      %p150 = scmp.eq.s32.totalorder %s40, 0
      %p151 = por %p149, %p150
      %s152 = ssub.s32 %s34, %s41
      %p153 = scmp.eq.s32.totalorder %s152, 0
      %s155 = sadd.s32 %s154, 1
      %s156 = scalar_select %p153, %s154, %s155
      %p159 = pneg %p153
      %p160 = scmp.eq.s32.totalorder %s34, 1
      %p161 = por %p159, %p160
      %p162 = scmp.ne.s32.totalorder %s154, %s157
      %p163 = scmp.eq.s32.totalorder %s34, 0
      %p164 = por %p162, %p163
      %p165 = scmp.ne.s32.totalorder %s154, %s157
      %p166 = scmp.eq.s32.totalorder %s39, 1
      %p167 = por %p165, %p166
      %p168 = scmp.ne.s32.totalorder %s157, %s158
      %p169 = scmp.eq.s32.totalorder %s39, 0
      %p170 = por %p168, %p169
      %p171 = scmp.ne.s32.totalorder %s157, %s158
      %p172 = scmp.eq.s32.totalorder %s40, 1
      %p173 = por %p171, %p172
      %p175 = scmp.ne.s32.totalorder %s158, %s174
      %p176 = scmp.eq.s32.totalorder %s40, 0
      %p177 = por %p175, %p176
      %s178 = ssub.s32 %s34, %s41
      %p179 = scmp.eq.s32.totalorder %s178, 0
      %s181 = sadd.s32 %s180, 1
      %s182 = scalar_select %p179, %s180, %s181
      %p185 = pneg %p179
      %p186 = scmp.eq.s32.totalorder %s34, 1
      %p187 = por %p185, %p186
      %p188 = scmp.ne.s32.totalorder %s180, %s183
      %p189 = scmp.eq.s32.totalorder %s34, 0
      %p190 = por %p188, %p189
      %p191 = scmp.ne.s32.totalorder %s180, %s183
      %p192 = scmp.eq.s32.totalorder %s39, 1
      %p193 = por %p191, %p192
      %p194 = scmp.ne.s32.totalorder %s183, %s184
      %p195 = scmp.eq.s32.totalorder %s39, 0
      %p196 = por %p194, %p195
      %p197 = scmp.ne.s32.totalorder %s183, %s184
      %p198 = scmp.eq.s32.totalorder %s40, 1
      %p199 = por %p197, %p198
      %p201 = scmp.ne.s32.totalorder %s184, %s200
      %p202 = scmp.eq.s32.totalorder %s40, 0
      %p203 = por %p201, %p202
      %s204 = ssub.s32 %s34, %s41
      %p205 = scmp.eq.s32.totalorder %s204, 0
      %s207 = sadd.s32 %s206, 1
      %s208 = scalar_select %p205, %s206, %s207
      %p211 = pneg %p205
      %p212 = scmp.eq.s32.totalorder %s34, 1
      %p213 = por %p211, %p212
      %p214 = scmp.ne.s32.totalorder %s206, %s209
      %p215 = scmp.eq.s32.totalorder %s34, 0
      %p216 = por %p214, %p215
      %p217 = scmp.ne.s32.totalorder %s206, %s209
      %p218 = scmp.eq.s32.totalorder %s39, 1
      %p219 = por %p217, %p218
      %p220 = scmp.ne.s32.totalorder %s209, %s210
      %p221 = scmp.eq.s32.totalorder %s39, 0
      %p222 = por %p220, %p221
      %p223 = scmp.ne.s32.totalorder %s209, %s210
      %p224 = scmp.eq.s32.totalorder %s40, 1
      %p225 = por %p223, %p224
      %p227 = scmp.ne.s32.totalorder %s210, %s226
      %p228 = scmp.eq.s32.totalorder %s40, 0
      %p229 = por %p227, %p228
      %s230 = ssub.s32 %s34, %s41
      %p231 = scmp.eq.s32.totalorder %s230, 0
      %s233 = sadd.s32 %s232, 1
      %s234 = scalar_select %p231, %s232, %s233
      %p237 = pneg %p231
      %p238 = scmp.eq.s32.totalorder %s34, 1
      %p239 = por %p237, %p238
      %p240 = scmp.ne.s32.totalorder %s232, %s235
      %p241 = scmp.eq.s32.totalorder %s34, 0
      %p242 = por %p240, %p241
      %p243 = scmp.ne.s32.totalorder %s232, %s235
      %p244 = scmp.eq.s32.totalorder %s39, 1
      %p245 = por %p243, %p244
      %p246 = scmp.ne.s32.totalorder %s235, %s236
      %p247 = scmp.eq.s32.totalorder %s39, 0
      %p248 = por %p246, %p247
      %p249 = scmp.ne.s32.totalorder %s235, %s236
      %p250 = scmp.eq.s32.totalorder %s40, 1
      %p251 = por %p249, %p250
      %p253 = scmp.ne.s32.totalorder %s236, %s252
      %p254 = scmp.eq.s32.totalorder %s40, 0
      %p255 = por %p253, %p254
      %s256 = ssub.s32 %s34, %s41
      %p257 = scmp.eq.s32.totalorder %s256, 0
      %s259 = sadd.s32 %s258, 1
      %s260 = scalar_select %p257, %s258, %s259
      %p263 = pneg %p257
      %p264 = scmp.eq.s32.totalorder %s34, 1
      %p265 = por %p263, %p264
      %p266 = scmp.ne.s32.totalorder %s258, %s261
      %p267 = scmp.eq.s32.totalorder %s34, 0
      %p268 = por %p266, %p267
      %p269 = scmp.ne.s32.totalorder %s258, %s261
      %p270 = scmp.eq.s32.totalorder %s39, 1
      %p271 = por %p269, %p270
      %p272 = scmp.ne.s32.totalorder %s261, %s262
      %p273 = scmp.eq.s32.totalorder %s39, 0
      %p274 = por %p272, %p273
      %p275 = scmp.ne.s32.totalorder %s261, %s262
      %p276 = scmp.eq.s32.totalorder %s40, 1
      %p277 = por %p275, %p276
      %p279 = scmp.ne.s32.totalorder %s262, %s278
      %p280 = scmp.eq.s32.totalorder %s40, 0
      %p281 = por %p279, %p280
      %s282 = ssub.s32 %s34, %s41
      %p283 = scmp.eq.s32.totalorder %s282, 0
      %s285 = sadd.s32 %s284, 1
      %s286 = scalar_select %p283, %s284, %s285
      %p289 = pneg %p283
      %p290 = scmp.eq.s32.totalorder %s34, 1
      %p291 = por %p289, %p290
      %p292 = scmp.ne.s32.totalorder %s284, %s287
      %p293 = scmp.eq.s32.totalorder %s34, 0
      %p294 = por %p292, %p293
      %p295 = scmp.ne.s32.totalorder %s284, %s287
      %p296 = scmp.eq.s32.totalorder %s39, 1
      %p297 = por %p295, %p296
      %p298 = scmp.ne.s32.totalorder %s287, %s288
      %p299 = scmp.eq.s32.totalorder %s39, 0
      %p300 = por %p298, %p299
      %p301 = scmp.ne.s32.totalorder %s287, %s288
      %p302 = scmp.eq.s32.totalorder %s40, 1
      %p303 = por %p301, %p302
      %p305 = scmp.ne.s32.totalorder %s288, %s304
      %p306 = scmp.eq.s32.totalorder %s40, 0
      %p307 = por %p305, %p306
      %s308 = ssub.s32 %s34, %s41
      %p309 = scmp.eq.s32.totalorder %s308, 0
      %s311 = sadd.s32 %s310, 1
      %s312 = scalar_select %p309, %s310, %s311
      %p315 = pneg %p309
      %p316 = scmp.eq.s32.totalorder %s34, 1
      %p317 = por %p315, %p316
      %p318 = scmp.ne.s32.totalorder %s310, %s313
      %p319 = scmp.eq.s32.totalorder %s34, 0
      %p320 = por %p318, %p319
      %p321 = scmp.ne.s32.totalorder %s310, %s313
      %p322 = scmp.eq.s32.totalorder %s39, 1
      %p323 = por %p321, %p322
      %p324 = scmp.ne.s32.totalorder %s313, %s314
      %p325 = scmp.eq.s32.totalorder %s39, 0
      %p326 = por %p324, %p325
      %p327 = scmp.ne.s32.totalorder %s313, %s314
      %p328 = scmp.eq.s32.totalorder %s40, 1
      %p329 = por %p327, %p328
      %p331 = scmp.ne.s32.totalorder %s314, %s330
      %p332 = scmp.eq.s32.totalorder %s40, 0
      %p333 = por %p331, %p332
      %s334 = ssub.s32 %s34, %s41
      %p335 = scmp.eq.s32.totalorder %s334, 0
      %s337 = sadd.s32 %s336, 1
      %s338 = scalar_select %p335, %s336, %s337
      %p341 = pneg %p335
      %p342 = scmp.eq.s32.totalorder %s34, 1
      %p343 = por %p341, %p342
      %p344 = scmp.ne.s32.totalorder %s336, %s339
      %p345 = scmp.eq.s32.totalorder %s34, 0
      %p346 = por %p344, %p345
      %p347 = scmp.ne.s32.totalorder %s336, %s339
      %p348 = scmp.eq.s32.totalorder %s39, 1
      %p349 = por %p347, %p348
      %p350 = scmp.ne.s32.totalorder %s339, %s340
      %p351 = scmp.eq.s32.totalorder %s39, 0
      %p352 = por %p350, %p351
      %p353 = scmp.ne.s32.totalorder %s339, %s340
      %p354 = scmp.eq.s32.totalorder %s40, 1
      %p355 = por %p353, %p354
      %p357 = scmp.ne.s32.totalorder %s340, %s356
      %p358 = scmp.eq.s32.totalorder %s40, 0
      %p359 = por %p357, %p358
      %s360 = ssub.s32 %s34, %s41
      %p361 = scmp.eq.s32.totalorder %s360, 0
      %s363 = sadd.s32 %s362, 1
      %s364 = scalar_select %p361, %s362, %s363
      %p367 = pneg %p361
      %p368 = scmp.eq.s32.totalorder %s34, 1
      %p369 = por %p367, %p368
      %p370 = scmp.ne.s32.totalorder %s362, %s365
      %p371 = scmp.eq.s32.totalorder %s34, 0
      %p372 = por %p370, %p371
      %p373 = scmp.ne.s32.totalorder %s362, %s365
      %p374 = scmp.eq.s32.totalorder %s39, 1
      %p375 = por %p373, %p374
      %p376 = scmp.ne.s32.totalorder %s365, %s366
      %p377 = scmp.eq.s32.totalorder %s39, 0
      %p378 = por %p376, %p377
      %p379 = scmp.ne.s32.totalorder %s365, %s366
      %p380 = scmp.eq.s32.totalorder %s40, 1
      %p381 = por %p379, %p380
      %p383 = scmp.ne.s32.totalorder %s366, %s382
      %p384 = scmp.eq.s32.totalorder %s40, 0
      %p385 = por %p383, %p384
      %s386 = ssub.s32 %s34, %s41
      %p387 = scmp.eq.s32.totalorder %s386, 0
      %s389 = sadd.s32 %s388, 1
      %s390 = scalar_select %p387, %s388, %s389
      %p393 = pneg %p387
      %p394 = scmp.eq.s32.totalorder %s34, 1
      %p395 = por %p393, %p394
      %p396 = scmp.ne.s32.totalorder %s388, %s391
      %p397 = scmp.eq.s32.totalorder %s34, 0
      %p398 = por %p396, %p397
      %p399 = scmp.ne.s32.totalorder %s388, %s391
      %p400 = scmp.eq.s32.totalorder %s39, 1
      %p401 = por %p399, %p400
      %p402 = scmp.ne.s32.totalorder %s391, %s392
      %p403 = scmp.eq.s32.totalorder %s39, 0
      %p404 = por %p402, %p403
      %p405 = scmp.ne.s32.totalorder %s391, %s392
      %p406 = scmp.eq.s32.totalorder %s40, 1
      %p407 = por %p405, %p406
      %p409 = scmp.ne.s32.totalorder %s392, %s408
      %p410 = scmp.eq.s32.totalorder %s40, 0
      %p411 = por %p409, %p410
      %s412 = ssub.s32 %s34, %s41
      %p413 = scmp.eq.s32.totalorder %s412, 0
      %s415 = sadd.s32 %s414, 1
      %s416 = scalar_select %p413, %s414, %s415
      %p419 = pneg %p413
      %p420 = scmp.eq.s32.totalorder %s34, 1
      %p421 = por %p419, %p420
      %p422 = scmp.ne.s32.totalorder %s414, %s417
      %p423 = scmp.eq.s32.totalorder %s34, 0
      %p424 = por %p422, %p423
      %p425 = scmp.ne.s32.totalorder %s414, %s417
      %p426 = scmp.eq.s32.totalorder %s39, 1
      %p427 = por %p425, %p426
      %p428 = scmp.ne.s32.totalorder %s417, %s418
      %p429 = scmp.eq.s32.totalorder %s39, 0
      %p430 = por %p428, %p429
      %p431 = scmp.ne.s32.totalorder %s417, %s418
      %p432 = scmp.eq.s32.totalorder %s40, 1
      %p433 = por %p431, %p432
      %p435 = scmp.ne.s32.totalorder %s418, %s434
      %p436 = scmp.eq.s32.totalorder %s40, 0
      %p437 = por %p435, %p436
      %s439 = sadd.s32 %s438, 1
      %p442 = scmp.eq.s32.totalorder %s34, 1
      %p443 = scmp.ne.s32.totalorder %s438, %s440
      %p444 = scmp.eq.s32.totalorder %s34, 0
      %p445 = por %p443, %p444
      %p446 = scmp.ne.s32.totalorder %s438, %s440
      %p447 = scmp.eq.s32.totalorder %s39, 1
      %p448 = por %p446, %p447
      %p449 = scmp.ne.s32.totalorder %s440, %s441
      %p450 = scmp.eq.s32.totalorder %s39, 0
      %p451 = por %p449, %p450
      %p452 = scmp.ne.s32.totalorder %s440, %s441
      %p453 = scmp.eq.s32.totalorder %s40, 1
      %p454 = por %p452, %p453
      %p456 = scmp.ne.s32.totalorder %s441, %s455
      %p457 = scmp.eq.s32.totalorder %s40, 0
      %p458 = por %p456, %p457
      %s460 = sadd.s32 %s459, 1
      %p463 = scmp.eq.s32.totalorder %s34, 1
      %p464 = scmp.ne.s32.totalorder %s459, %s461
      %p465 = scmp.eq.s32.totalorder %s34, 0
      %p466 = por %p464, %p465
      %p467 = scmp.ne.s32.totalorder %s459, %s461
      %p468 = scmp.eq.s32.totalorder %s39, 1
      %p469 = por %p467, %p468
      %p470 = scmp.ne.s32.totalorder %s461, %s462
      %p471 = scmp.eq.s32.totalorder %s39, 0
      %p472 = por %p470, %p471
      %p473 = scmp.ne.s32.totalorder %s461, %s462
      %p474 = scmp.eq.s32.totalorder %s40, 1
      %p475 = por %p473, %p474
      %p477 = scmp.ne.s32.totalorder %s462, %s476
      %p478 = scmp.eq.s32.totalorder %s40, 0
      %p479 = por %p477, %p478
      %s481 = sadd.s32 %s480, 1
      %p484 = scmp.eq.s32.totalorder %s34, 1
      %p485 = scmp.ne.s32.totalorder %s480, %s482
      %p486 = scmp.eq.s32.totalorder %s34, 0
      %p487 = por %p485, %p486
      %p488 = scmp.ne.s32.totalorder %s480, %s482
      %p489 = scmp.eq.s32.totalorder %s39, 1
      %p490 = por %p488, %p489
      %p491 = scmp.ne.s32.totalorder %s482, %s483
      %p492 = scmp.eq.s32.totalorder %s39, 0
      %p493 = por %p491, %p492
      %p494 = scmp.ne.s32.totalorder %s482, %s483
      %p495 = scmp.eq.s32.totalorder %s40, 1
      %p496 = por %p494, %p495
      %p498 = scmp.ne.s32.totalorder %s483, %s497
      %p499 = scmp.eq.s32.totalorder %s40, 0
      %p500 = por %p498, %p499
      %s502 = sadd.s32 %s501, 1
      %p505 = scmp.eq.s32.totalorder %s34, 1
      %p506 = scmp.ne.s32.totalorder %s501, %s503
      %p507 = scmp.eq.s32.totalorder %s34, 0
      %p508 = por %p506, %p507
      %p509 = scmp.ne.s32.totalorder %s501, %s503
      %p510 = scmp.eq.s32.totalorder %s39, 1
      %p511 = por %p509, %p510
      %p512 = scmp.ne.s32.totalorder %s503, %s504
      %p513 = scmp.eq.s32.totalorder %s39, 0
      %p514 = por %p512, %p513
      %p515 = scmp.ne.s32.totalorder %s503, %s504
      %p516 = scmp.eq.s32.totalorder %s40, 1
      %p517 = por %p515, %p516
      %p519 = scmp.ne.s32.totalorder %s504, %s518
      %p520 = scmp.eq.s32.totalorder %s40, 0
      %p521 = por %p519, %p520
      %s523 = sadd.s32 %s522, 1
      %p526 = scmp.eq.s32.totalorder %s34, 1
      %p527 = scmp.ne.s32.totalorder %s522, %s524
      %p528 = scmp.eq.s32.totalorder %s34, 0
      %p529 = por %p527, %p528
      %p530 = scmp.ne.s32.totalorder %s522, %s524
      %p531 = scmp.eq.s32.totalorder %s39, 1
      %p532 = por %p530, %p531
      %p533 = scmp.ne.s32.totalorder %s524, %s525
      %p534 = scmp.eq.s32.totalorder %s39, 0
      %p535 = por %p533, %p534
      %p536 = scmp.ne.s32.totalorder %s524, %s525
      %p537 = scmp.eq.s32.totalorder %s40, 1
      %p538 = por %p536, %p537
      %p540 = scmp.ne.s32.totalorder %s525, %s539
      %p541 = scmp.eq.s32.totalorder %s40, 0
      %p542 = por %p540, %p541
      %p543 = scmp.le.s32.totalorder 1, %s34
      %p544 = scmp.lt.s32.totalorder %s34, 3
      %p545 = pnand %p543, %p544
      %p546 = pneg %p545
      // Predicated region
      $region9: #{sequence_classification_forward.1} parent=5 // pred_check
        _
      $region10: #{sequence_classification_forward.1} parent=5 // pred_check_branch
        %548 = sbr.rel (%p545) target = $region12
      $region11: #{sequence_classification_forward.1} parent=5 // pred_region
        %s549 = ssub.s32 %s34, 1
        // Predicated region
        $region13: #{sequence_classification_forward.1} parent=11 // pred_check
          %p550 = pneg %p55
        $region14: #{sequence_classification_forward.1} parent=11 // pred_check_branch
          %552 = sbr.rel (%p550) target = $region16
        $region15: #{sequence_classification_forward.1} parent=11 // pred_region
          _
        $region16: #{sequence_classification_forward.1} parent=11 // pred_fallthru
          _
        // Predicated region
        $region17: #{sequence_classification_forward.1} parent=11 // pred_check
          %p553 = pneg %p76
        $region18: #{sequence_classification_forward.1} parent=11 // pred_check_branch
          %555 = sbr.rel (%p553) target = $region20
        $region19: #{sequence_classification_forward.1} parent=11 // pred_region
          _
        $region20: #{sequence_classification_forward.1} parent=11 // pred_fallthru
          _
        // Predicated region
        $region21: #{sequence_classification_forward.1} parent=11 // pred_check
          %p556 = pneg %p97
        $region22: #{sequence_classification_forward.1} parent=11 // pred_check_branch
          %558 = sbr.rel (%p556) target = $region24
        $region23: #{sequence_classification_forward.1} parent=11 // pred_region
          _
        $region24: #{sequence_classification_forward.1} parent=11 // pred_fallthru
          _
        // Predicated region
        $region25: #{sequence_classification_forward.1} parent=11 // pred_check
          %p559 = pneg %p118
        $region26: #{sequence_classification_forward.1} parent=11 // pred_check_branch
          %561 = sbr.rel (%p559) target = $region28
        $region27: #{sequence_classification_forward.1} parent=11 // pred_region
          _
        $region28: #{sequence_classification_forward.1} parent=11 // pred_fallthru
          _
        // Predicated region
        $region29: #{sequence_classification_forward.1} parent=11 // pred_check
          %p562 = pneg %p451
        $region30: #{sequence_classification_forward.1} parent=11 // pred_check_branch
          %564 = sbr.rel (%p562) target = $region32
        $region31: #{sequence_classification_forward.1} parent=11 // pred_region
          %s566 = ssub.s32 4096, 4096
          %567 = vsyncadd [#allocation10], %s566
          %s568 = sshll.u32 [#allocation9], 4
          %s569 = int_to_ptr.vmem [resolvable:$true] %s568
          %574 = dma.hbm_to_vmem [thread:$0]  %s16, 4096, %s569, [#allocation10], 128, 128, 8
        $region32: #{sequence_classification_forward.1} parent=11 // pred_fallthru
          _
        // Predicated region
        $region33: #{sequence_classification_forward.1} parent=11 // pred_check
          %p575 = pneg %p472
        $region34: #{sequence_classification_forward.1} parent=11 // pred_check_branch
          %577 = sbr.rel (%p575) target = $region36
        $region35: #{sequence_classification_forward.1} parent=11 // pred_region
          _
        $region36: #{sequence_classification_forward.1} parent=11 // pred_fallthru
          _
        // Predicated region
        $region37: #{sequence_classification_forward.1} parent=11 // pred_check
          %p578 = pneg %p493
        $region38: #{sequence_classification_forward.1} parent=11 // pred_check_branch
          %580 = sbr.rel (%p578) target = $region40
        $region39: #{sequence_classification_forward.1} parent=11 // pred_region
          %s582 = ssub.s32 2048, 2048
          %583 = vsyncadd [#allocation10], %s582
          %s584 = sshll.u32 [#allocation11], 4
          %s585 = int_to_ptr.vmem [resolvable:$true] %s584
          %590 = dma.hbm_to_vmem [thread:$0]  %s18, 2048, %s585, [#allocation10], 64, 64, 4
        $region40: #{sequence_classification_forward.1} parent=11 // pred_fallthru
          _
        // Predicated region
        $region41: #{sequence_classification_forward.1} parent=11 // pred_check
          %p591 = pneg %p514
        $region42: #{sequence_classification_forward.1} parent=11 // pred_check_branch
          %593 = sbr.rel (%p591) target = $region44
        $region43: #{sequence_classification_forward.1} parent=11 // pred_region
          _
        $region44: #{sequence_classification_forward.1} parent=11 // pred_fallthru
          _
      $region12: #{sequence_classification_forward.1} parent=5 // pred_fallthru
        _
      %p594 = scmp.lt.s32.totalorder %s34, 2
      // Predicated region
      $region45: #{sequence_classification_forward.1} parent=5 // pred_check
        %p595 = pneg %p594
      $region46: #{sequence_classification_forward.1} parent=5 // pred_check_branch
        %597 = sbr.rel (%p595) target = $region48
      $region47: #{sequence_classification_forward.1} parent=5 // pred_region
        // Predicated region
        $region49: #{sequence_classification_forward.1} parent=47 // pred_check
          %p598 = pneg %p138
        $region50: #{sequence_classification_forward.1} parent=47 // pred_check_branch
          %600 = sbr.rel (%p598) target = $region52
        $region51: #{sequence_classification_forward.1} parent=47 // pred_region
          %s601 = sand.u32 %s128, 1
          %s602 = scalar_lea.sflag [#allocation4], %s601
          %s603 = sand.u32 %s128, 1
          %s604 = smul.addr %s603, 768
          %s605 = scalar_lea.vmem [#allocation3], %s604
          %s607 = ssub.s32 12288, 12288
          %608 = vsyncadd %s602, %s607
          %s609 = smul.addr %s34, 192
          %s610 = smul.addr %s609, 64
          %s611 = scalar_lea.hbm %s4, %s610
          %s612 = sshll.u32 %s605, 4
          %s613 = int_to_ptr.vmem [resolvable:$true] %s612
          %618 = dma.hbm_to_vmem [thread:$0]  %s611, 12288, %s613, %s602, 384, 384, 24
        $region52: #{sequence_classification_forward.1} parent=47 // pred_fallthru
          _
        // Predicated region
        $region53: #{sequence_classification_forward.1} parent=47 // pred_check
          %p619 = pneg %p164
        $region54: #{sequence_classification_forward.1} parent=47 // pred_check_branch
          %621 = sbr.rel (%p619) target = $region56
        $region55: #{sequence_classification_forward.1} parent=47 // pred_region
          %p622 = scmp.lt.s32.totalorder %s34, 1
          %s623 = scalar_select %p622, %s34, 1
          %s624 = smul.addr %s623, 6
          %s625 = scalar_lea.vmem %s5, %s624
        $region56: #{sequence_classification_forward.1} parent=47 // pred_fallthru
          _
        // Predicated region
        $region57: #{sequence_classification_forward.1} parent=47 // pred_check
          %p626 = pneg %p190
        $region58: #{sequence_classification_forward.1} parent=47 // pred_check_branch
          %628 = sbr.rel (%p626) target = $region60
        $region59: #{sequence_classification_forward.1} parent=47 // pred_region
          %p629 = scmp.lt.s32.totalorder %s34, 1
          %s630 = scalar_select %p629, %s34, 1
          %s631 = smul.addr %s630, 64
          %s632 = smul.addr %s631, 4
          %s633 = scalar_lea.vmem %s6, %s632
        $region60: #{sequence_classification_forward.1} parent=47 // pred_fallthru
          _
        // Predicated region
        $region61: #{sequence_classification_forward.1} parent=47 // pred_check
          %p634 = pneg %p216
        $region62: #{sequence_classification_forward.1} parent=47 // pred_check_branch
          %636 = sbr.rel (%p634) target = $region64
        $region63: #{sequence_classification_forward.1} parent=47 // pred_region
          %p637 = scmp.lt.s32.totalorder %s34, 1
          %s638 = scalar_select %p637, %s34, 1
          %s639 = smul.addr %s638, 2
          %s640 = scalar_lea.vmem %s7, %s639
        $region64: #{sequence_classification_forward.1} parent=47 // pred_fallthru
          _
        // Predicated region
        $region65: #{sequence_classification_forward.1} parent=47 // pred_check
          %p641 = pneg %p242
        $region66: #{sequence_classification_forward.1} parent=47 // pred_check_branch
          %643 = sbr.rel (%p641) target = $region68
        $region67: #{sequence_classification_forward.1} parent=47 // pred_region
          %p644 = scmp.lt.s32.totalorder %s34, 1
          %s645 = scalar_select %p644, %s34, 1
          %s646 = smul.addr %s645, 2
          %s647 = scalar_lea.vmem %s8, %s646
        $region68: #{sequence_classification_forward.1} parent=47 // pred_fallthru
          _
        // Predicated region
        $region69: #{sequence_classification_forward.1} parent=47 // pred_check
          %p648 = pneg %p268
        $region70: #{sequence_classification_forward.1} parent=47 // pred_check_branch
          %650 = sbr.rel (%p648) target = $region72
        $region71: #{sequence_classification_forward.1} parent=47 // pred_region
          %p651 = scmp.lt.s32.totalorder %s34, 1
          %s652 = scalar_select %p651, %s34, 1
          %s653 = smul.addr %s652, 2
          %s654 = scalar_lea.vmem %s9, %s653
        $region72: #{sequence_classification_forward.1} parent=47 // pred_fallthru
          _
        // Predicated region
        $region73: #{sequence_classification_forward.1} parent=47 // pred_check
          %p655 = pneg %p294
        $region74: #{sequence_classification_forward.1} parent=47 // pred_check_branch
          %657 = sbr.rel (%p655) target = $region76
        $region75: #{sequence_classification_forward.1} parent=47 // pred_region
          %s658 = sand.u32 %s34, 1
          %s659 = scalar_lea.sflag [#allocation7], %s658
          %s660 = sand.u32 %s284, 1
          %s661 = smul.addr %s660, 512
          %s662 = scalar_lea.vmem [#allocation6], %s661
          %s664 = ssub.s32 8192, 8192
          %665 = vsyncadd %s659, %s664
          %s666 = smul.addr %s34, 128
          %s667 = smul.addr %s666, 64
          %s668 = scalar_lea.hbm %s10, %s667
          %s669 = sshll.u32 %s662, 4
          %s670 = int_to_ptr.vmem [resolvable:$true] %s669
          %675 = dma.hbm_to_vmem [thread:$0]  %s668, 8192, %s670, %s659, 256, 256, 16
        $region76: #{sequence_classification_forward.1} parent=47 // pred_fallthru
          _
        // Predicated region
        $region77: #{sequence_classification_forward.1} parent=47 // pred_check
          %p676 = pneg %p320
        $region78: #{sequence_classification_forward.1} parent=47 // pred_check_branch
          %678 = sbr.rel (%p676) target = $region80
        $region79: #{sequence_classification_forward.1} parent=47 // pred_region
          %p679 = scmp.lt.s32.totalorder %s34, 1
          %s680 = scalar_select %p679, %s34, 1
          %s681 = smul.addr %s680, 4
          %s682 = scalar_lea.vmem %s11, %s681
        $region80: #{sequence_classification_forward.1} parent=47 // pred_fallthru
          _
        // Predicated region
        $region81: #{sequence_classification_forward.1} parent=47 // pred_check
          %p683 = pneg %p346
        $region82: #{sequence_classification_forward.1} parent=47 // pred_check_branch
          %685 = sbr.rel (%p683) target = $region84
        $region83: #{sequence_classification_forward.1} parent=47 // pred_region
          %s686 = sand.u32 %s34, 1
          %s687 = scalar_lea.sflag [#allocation7], %s686
          %s688 = sand.u32 %s336, 1
          %s689 = smul.addr %s688, 512
          %s690 = scalar_lea.vmem [#allocation8], %s689
          %s692 = ssub.s32 8192, 8192
          %693 = vsyncadd %s687, %s692
          %s694 = smul.addr %s34, 128
          %s695 = smul.addr %s694, 64
          %s696 = scalar_lea.hbm %s12, %s695
          %s697 = sshll.u32 %s690, 4
          %s698 = int_to_ptr.vmem [resolvable:$true] %s697
          %703 = dma.hbm_to_vmem [thread:$0]  %s696, 8192, %s698, %s687, 128, 128, 8
        $region84: #{sequence_classification_forward.1} parent=47 // pred_fallthru
          _
        // Predicated region
        $region85: #{sequence_classification_forward.1} parent=47 // pred_check
          %p704 = pneg %p372
        $region86: #{sequence_classification_forward.1} parent=47 // pred_check_branch
          %706 = sbr.rel (%p704) target = $region88
        $region87: #{sequence_classification_forward.1} parent=47 // pred_region
          %p707 = scmp.lt.s32.totalorder %s34, 1
          %s708 = scalar_select %p707, %s34, 1
          %s709 = smul.addr %s708, 2
          %s710 = scalar_lea.vmem %s13, %s709
        $region88: #{sequence_classification_forward.1} parent=47 // pred_fallthru
          _
        // Predicated region
        $region89: #{sequence_classification_forward.1} parent=47 // pred_check
          %p711 = pneg %p398
        $region90: #{sequence_classification_forward.1} parent=47 // pred_check_branch
          %713 = sbr.rel (%p711) target = $region92
        $region91: #{sequence_classification_forward.1} parent=47 // pred_region
          %p714 = scmp.lt.s32.totalorder %s34, 1
          %s715 = scalar_select %p714, %s34, 1
          %s716 = smul.addr %s715, 2
          %s717 = scalar_lea.vmem %s14, %s716
        $region92: #{sequence_classification_forward.1} parent=47 // pred_fallthru
          _
        // Predicated region
        $region93: #{sequence_classification_forward.1} parent=47 // pred_check
          %p718 = pneg %p424
        $region94: #{sequence_classification_forward.1} parent=47 // pred_check_branch
          %720 = sbr.rel (%p718) target = $region96
        $region95: #{sequence_classification_forward.1} parent=47 // pred_region
          %p721 = scmp.lt.s32.totalorder %s34, 1
          %s722 = scalar_select %p721, %s34, 1
          %s723 = smul.addr %s722, 2
          %s724 = scalar_lea.vmem %s15, %s723
        $region96: #{sequence_classification_forward.1} parent=47 // pred_fallthru
          _
      $region48: #{sequence_classification_forward.1} parent=5 // pred_fallthru
        _
      %p725 = scmp.le.s32.totalorder 1, %s34
      %p726 = scmp.lt.s32.totalorder %s34, 3
      %p727 = pnand %p725, %p726
      %p728 = pneg %p727
      // Predicated region
      $region97: #{sequence_classification_forward.1} parent=5 // pred_check
        _
      $region98: #{sequence_classification_forward.1} parent=5 // pred_check_branch
        %730 = sbr.rel (%p727) target = $region100
      $region99: #{sequence_classification_forward.1} parent=5 // pred_region
        %s731 = ssub.s32 %s34, 1
        %s732 = sand.u32 %s131, 1
        %s733 = scalar_lea.sflag [#allocation4], %s732
        %s734 = sand.u32 %s131, 1
        %s735 = smul.addr %s734, 768
        %s736 = scalar_lea.vmem [#allocation3], %s735
        // Predicated region
        $region101: #{sequence_classification_forward.1} parent=99 // pred_check
          %p737 = pneg %p144
        $region102: #{sequence_classification_forward.1} parent=99 // pred_check_branch
          %739 = sbr.rel (%p737) target = $region104
        $region103: #{sequence_classification_forward.1} parent=99 // pred_region
          %740 = dma.done %s733, 12288
        $region104: #{sequence_classification_forward.1} parent=99 // pred_fallthru
          _
        %s741 = sand.u32 %s39, 1
        %s742 = scalar_lea.sflag [#allocation7], %s741
        %s743 = sand.u32 %s287, 1
        %s744 = smul.addr %s743, 512
        %s745 = scalar_lea.vmem [#allocation6], %s744
        // Predicated region
        $region105: #{sequence_classification_forward.1} parent=99 // pred_check
          %p746 = pneg %p300
        $region106: #{sequence_classification_forward.1} parent=99 // pred_check_branch
          %748 = sbr.rel (%p746) target = $region108
        $region107: #{sequence_classification_forward.1} parent=99 // pred_region
          %749 = dma.done %s742, 8192
        $region108: #{sequence_classification_forward.1} parent=99 // pred_fallthru
          _
        %s750 = sand.u32 %s39, 1
        %s751 = scalar_lea.sflag [#allocation7], %s750
        %s752 = sand.u32 %s339, 1
        %s753 = smul.addr %s752, 512
        %s754 = scalar_lea.vmem [#allocation8], %s753
        // Predicated region
        $region109: #{sequence_classification_forward.1} parent=99 // pred_check
          %p755 = pneg %p352
        $region110: #{sequence_classification_forward.1} parent=99 // pred_check_branch
          %757 = sbr.rel (%p755) target = $region112
        $region111: #{sequence_classification_forward.1} parent=99 // pred_region
          %758 = dma.done %s751, 8192
        $region112: #{sequence_classification_forward.1} parent=99 // pred_fallthru
          _
        // Predicated region
        $region113: #{sequence_classification_forward.1} parent=99 // pred_check
          %p759 = pneg %p451
        $region114: #{sequence_classification_forward.1} parent=99 // pred_check_branch
          %761 = sbr.rel (%p759) target = $region116
        $region115: #{sequence_classification_forward.1} parent=99 // pred_region
          %762 = dma.done [#allocation10], 4096
        $region116: #{sequence_classification_forward.1} parent=99 // pred_fallthru
          _
        // Predicated region
        $region117: #{sequence_classification_forward.1} parent=99 // pred_check
          %p763 = pneg %p493
        $region118: #{sequence_classification_forward.1} parent=99 // pred_check_branch
          %765 = sbr.rel (%p763) target = $region120
        $region119: #{sequence_classification_forward.1} parent=99 // pred_region
          %766 = dma.done [#allocation10], 2048
        $region120: #{sequence_classification_forward.1} parent=99 // pred_fallthru
          _
        %p767 = pneg %p55
        %p768 = pneg %p52
        %p769 = pneg %p76
        %p770 = pneg %p73
        %p771 = pneg %p97
        %p772 = pneg %p94
        %p773 = pneg %p118
        %p774 = pneg %p115
        %s775 = sand.u32 %s131, 1
        %s776 = scalar_lea.sflag [#allocation4], %s775
        %s777 = sand.u32 %s131, 1
        %s778 = smul.addr %s777, 768
        %s779 = scalar_lea.vmem [#allocation3], %s778
        %p780 = pneg %p144
        %p781 = pneg %p141
        %p782 = scmp.lt.s32.totalorder %s39, 1
        %s783 = scalar_select %p782, %s39, 1
        %s784 = smul.addr %s783, 6
        %s785 = scalar_lea.vmem %s5, %s784
        %p786 = pneg %p170
        %p787 = pneg %p167
        %p788 = scmp.lt.s32.totalorder %s39, 1
        %s789 = scalar_select %p788, %s39, 1
        %s790 = smul.addr %s789, 64
        %s791 = smul.addr %s790, 4
        %s792 = scalar_lea.vmem %s6, %s791
        %p793 = pneg %p196
        %p794 = pneg %p193
        %p795 = scmp.lt.s32.totalorder %s39, 1
        %s796 = scalar_select %p795, %s39, 1
        %s797 = smul.addr %s796, 2
        %s798 = scalar_lea.vmem %s7, %s797
        %p799 = pneg %p222
        %p800 = pneg %p219
        %p801 = scmp.lt.s32.totalorder %s39, 1
        %s802 = scalar_select %p801, %s39, 1
        %s803 = smul.addr %s802, 2
        %s804 = scalar_lea.vmem %s8, %s803
        %p805 = pneg %p248
        %p806 = pneg %p245
        %p807 = scmp.lt.s32.totalorder %s39, 1
        %s808 = scalar_select %p807, %s39, 1
        %s809 = smul.addr %s808, 2
        %s810 = scalar_lea.vmem %s9, %s809
        %p811 = pneg %p274
        %p812 = pneg %p271
        %s813 = sand.u32 %s39, 1
        %s814 = scalar_lea.sflag [#allocation7], %s813
        %s815 = sand.u32 %s287, 1
        %s816 = smul.addr %s815, 512
        %s817 = scalar_lea.vmem [#allocation6], %s816
        %p818 = pneg %p300
        %p819 = pneg %p297
        %p820 = scmp.lt.s32.totalorder %s39, 1
        %s821 = scalar_select %p820, %s39, 1
        %s822 = smul.addr %s821, 4
        %s823 = scalar_lea.vmem %s11, %s822
        %p824 = pneg %p326
        %p825 = pneg %p323
        %s826 = sand.u32 %s39, 1
        %s827 = scalar_lea.sflag [#allocation7], %s826
        %s828 = sand.u32 %s339, 1
        %s829 = smul.addr %s828, 512
        %s830 = scalar_lea.vmem [#allocation8], %s829
        %p831 = pneg %p352
        %p832 = pneg %p349
        %p833 = scmp.lt.s32.totalorder %s39, 1
        %s834 = scalar_select %p833, %s39, 1
        %s835 = smul.addr %s834, 2
        %s836 = scalar_lea.vmem %s13, %s835
        %p837 = pneg %p378
        %p838 = pneg %p375
        %p839 = scmp.lt.s32.totalorder %s39, 1
        %s840 = scalar_select %p839, %s39, 1
        %s841 = smul.addr %s840, 2
        %s842 = scalar_lea.vmem %s14, %s841
        %p843 = pneg %p404
        %p844 = pneg %p401
        %p845 = scmp.lt.s32.totalorder %s39, 1
        %s846 = scalar_select %p845, %s39, 1
        %s847 = smul.addr %s846, 2
        %s848 = scalar_lea.vmem %s15, %s847
        %p849 = pneg %p430
        %p850 = pneg %p427
        %p851 = pneg %p451
        %p852 = pneg %p448
        %p853 = pneg %p472
        %p854 = pneg %p469
        %p855 = pneg %p493
        %p856 = pneg %p490
        %p857 = pneg %p514
        %p858 = pneg %p511
        %p859 = pneg %p535
        %p860 = pneg %p532
        %p861 = scmp.lt.s32.totalorder %s39, 1
        %s862 = scalar_select %p861, %s39, 1
        %s863 = smul.addr %s862, 6
        %s864 = scalar_lea.vmem %s5, %s863
        %p865 = scmp.lt.s32.totalorder %s39, 1
        %s866 = scalar_select %p865, %s39, 1
        %s867 = smul.addr %s866, 64
        %s868 = smul.addr %s867, 4
        %s869 = scalar_lea.vmem %s6, %s868
        %p870 = scmp.lt.s32.totalorder %s39, 1
        %s871 = scalar_select %p870, %s39, 1
        %s872 = smul.addr %s871, 2
        %s873 = scalar_lea.vmem %s7, %s872
        %p874 = scmp.lt.s32.totalorder %s39, 1
        %s875 = scalar_select %p874, %s39, 1
        %s876 = smul.addr %s875, 2
        %s877 = scalar_lea.vmem %s8, %s876
        %p878 = scmp.lt.s32.totalorder %s39, 1
        %s879 = scalar_select %p878, %s39, 1
        %s880 = smul.addr %s879, 2
        %s881 = scalar_lea.vmem %s9, %s880
        %p882 = scmp.lt.s32.totalorder %s39, 1
        %s883 = scalar_select %p882, %s39, 1
        %s884 = smul.addr %s883, 4
        %s885 = scalar_lea.vmem %s11, %s884
        %p886 = scmp.lt.s32.totalorder %s39, 1
        %s887 = scalar_select %p886, %s39, 1
        %s888 = smul.addr %s887, 2
        %s889 = scalar_lea.vmem %s13, %s888
        %p890 = scmp.lt.s32.totalorder %s39, 1
        %s891 = scalar_select %p890, %s39, 1
        %s892 = smul.addr %s891, 2
        %s893 = scalar_lea.vmem %s14, %s892
        %p894 = scmp.lt.s32.totalorder %s39, 1
        %s895 = scalar_select %p894, %s39, 1
        %s896 = smul.addr %s895, 2
        %s897 = scalar_lea.vmem %s15, %s896
        %p899 = scmp.eq.s32.totalorder %s39, 0
        // Predicated region
        $region121: #{sequence_classification_forward.1} parent=99 // pred_check
          %p900 = pneg %p899
        $region122: #{sequence_classification_forward.1} parent=99 // pred_check_branch
          %902 = sbr.rel (%p900) target = $region124
        $region123: #{sequence_classification_forward.1} parent=99 // pred_region
          %v903 = vld [vmem:[%s0] sm:$0xff]
          %v904 = vld [vmem:[%s0 + $0x8] sm:$0xff]
          %v905 = vld [vmem:[%s0 + $0x10] sm:$0xff]
          %v906 = vld [vmem:[%s0 + $0x18] sm:$0xff]
          %v907 = vld [vmem:[%s2] sm:$0x3]
          %v908 = vld [vmem:[%s3] sm:$0x3]
          %v909 = vadd.f32 %v903, %v904
          %910 = vadd.xlane.f32.xlu0 %v909
          %v911 = vpop.xlane.xlu0 %910
          %v912 = vadd.f32 %v905, %v906
          %913 = vadd.xlane.f32.xlu0 %v912
          %v914 = vpop.xlane.xlu0 %913
          %v915 = vrcp.pop 256.0
          %v916 = vmul.f32 %v911, %v915
          %v917 = vmul.f32 %v914, %v915
          %v918 = vsub.f32 %v903, %v916
          %v919 = vsub.f32 %v904, %v916
          %v920 = vsub.f32 %v905, %v917
          %v921 = vsub.f32 %v906, %v917
          %v922 = vmul.f32 %v918, %v918
          %v923 = vmul.f32 %v919, %v919
          %v924 = vmul.f32 %v920, %v920
          %v925 = vmul.f32 %v921, %v921
          %v926 = vadd.f32 %v922, %v923
          %927 = vadd.xlane.f32.xlu0 %v926
          %v928 = vpop.xlane.xlu0 %927
          %v929 = vadd.f32 %v924, %v925
          %930 = vadd.xlane.f32.xlu0 %v929
          %v931 = vpop.xlane.xlu0 %930
          %v932 = vmul.f32 %v928, %v915
          %v933 = vmul.f32 %v931, %v915
          %v934 = vadd.f32 %v932, 1e-05
          %v935 = vadd.f32 %v933, 1e-05
          %v936 = vrsqrt.pop %v934
          %v937 = vrsqrt.pop %v935
          %v938 = vmul.f32 %v918, %v936
          %v939 = vmul.f32 %v919, %v936
          %v940 = vmul.f32 %v920, %v937
          %v941 = vmul.f32 %v921, %v937
          %v943 = vlaneseq
          %v944 = vshrl.u32 %v943, 7
          %v945 = vsub.s32 0, %v944
          %v946 = vrot.slane %v907, %v945
          %v947 = vlaneseq
          %v948 = vshrl.u32 %v947, 7
          %v949 = vsub.s32 1, %v948
          %v950 = vrot.slane %v907, %v949
          %v953 = vmul.f32 %v938, %v946
          %v954 = vmul.f32 %v939, %v950
          %v955 = vmul.f32 %v940, %v946
          %v956 = vmul.f32 %v941, %v950
          %v958 = vlaneseq
          %v959 = vshrl.u32 %v958, 7
          %v960 = vsub.s32 0, %v959
          %v961 = vrot.slane %v908, %v960
          %v962 = vlaneseq
          %v963 = vshrl.u32 %v962, 7
          %v964 = vsub.s32 1, %v963
          %v965 = vrot.slane %v908, %v964
          %v968 = vadd.f32 %v953, %v961
          %v969 = vadd.f32 %v954, %v965
          %v970 = vadd.f32 %v955, %v961
          %v971 = vadd.f32 %v956, %v965
          %972 = vst [vmem:[#allocation2] sm:$0xff] %v968
          %973 = vst [vmem:[#allocation2 + $0x8] sm:$0xff] %v969
          %974 = vst [vmem:[#allocation2 + $0x10] sm:$0xff] %v970
          %975 = vst [vmem:[#allocation2 + $0x18] sm:$0xff] %v971
        $region124: #{sequence_classification_forward.1} parent=99 // pred_fallthru
          _
        %v976 = vld [vmem:[#allocation2] sm:$0xff]
        %v977 = vld [vmem:[#allocation2 + $0x8] sm:$0xff]
        %v978 = vld [vmem:[#allocation2 + $0x10] sm:$0xff]
        %v979 = vld [vmem:[#allocation2 + $0x18] sm:$0xff]
        %v980 = vpack.c.bf16 %v978, %v976
        %v981 = vpack.c.bf16 %v979, %v977
        %v982 = vld [vmem:[%s736] sm:$0xff]
        %v983 = vld [vmem:[%s736 + $0x8] sm:$0xff]
        %v984 = vld [vmem:[%s736 + $0x10] sm:$0xff]
        %v985 = vld [vmem:[%s736 + $0x18] sm:$0xff]
        %v986 = vld [vmem:[%s736 + $0x20] sm:$0xff]
        %v987 = vld [vmem:[%s736 + $0x28] sm:$0xff]
        %v988 = vld [vmem:[%s736 + $0x30] sm:$0xff]
        %v989 = vld [vmem:[%s736 + $0x38] sm:$0xff]
        %v990 = vld [vmem:[%s736 + $0x40] sm:$0xff]
        %v991 = vld [vmem:[%s736 + $0x48] sm:$0xff]
        %v992 = vld [vmem:[%s736 + $0x50] sm:$0xff]
        %v993 = vld [vmem:[%s736 + $0x58] sm:$0xff]
        %v994 = vld [vmem:[%s736 + $0x60] sm:$0xff]
        %v995 = vld [vmem:[%s736 + $0x68] sm:$0xff]
        %v996 = vld [vmem:[%s736 + $0x70] sm:$0xff]
        %v997 = vld [vmem:[%s736 + $0x78] sm:$0xff]
        %v998 = vld [vmem:[%s736 + $0x80] sm:$0xff]
        %v999 = vld [vmem:[%s736 + $0x88] sm:$0xff]
        %v1000 = vld [vmem:[%s736 + $0x90] sm:$0xff]
        %v1001 = vld [vmem:[%s736 + $0x98] sm:$0xff]
        %v1002 = vld [vmem:[%s736 + $0xa0] sm:$0xff]
        %v1003 = vld [vmem:[%s736 + $0xa8] sm:$0xff]
        %v1004 = vld [vmem:[%s736 + $0xb0] sm:$0xff]
        %v1005 = vld [vmem:[%s736 + $0xb8] sm:$0xff]
        %v1006 = vld [vmem:[%s736 + $0xc0] sm:$0xff]
        %v1007 = vld [vmem:[%s736 + $0xc8] sm:$0xff]
        %v1008 = vld [vmem:[%s736 + $0xd0] sm:$0xff]
        %v1009 = vld [vmem:[%s736 + $0xd8] sm:$0xff]
        %v1010 = vld [vmem:[%s736 + $0xe0] sm:$0xff]
        %v1011 = vld [vmem:[%s736 + $0xe8] sm:$0xff]
        %v1012 = vld [vmem:[%s736 + $0xf0] sm:$0xff]
        %v1013 = vld [vmem:[%s736 + $0xf8] sm:$0xff]
        %v1014 = vld [vmem:[%s736 + $0x100] sm:$0xff]
        %v1015 = vld [vmem:[%s736 + $0x108] sm:$0xff]
        %v1016 = vld [vmem:[%s736 + $0x110] sm:$0xff]
        %v1017 = vld [vmem:[%s736 + $0x118] sm:$0xff]
        %v1018 = vld [vmem:[%s736 + $0x120] sm:$0xff]
        %v1019 = vld [vmem:[%s736 + $0x128] sm:$0xff]
        %v1020 = vld [vmem:[%s736 + $0x130] sm:$0xff]
        %v1021 = vld [vmem:[%s736 + $0x138] sm:$0xff]
        %v1022 = vld [vmem:[%s736 + $0x140] sm:$0xff]
        %v1023 = vld [vmem:[%s736 + $0x148] sm:$0xff]
        %v1024 = vld [vmem:[%s736 + $0x150] sm:$0xff]
        %v1025 = vld [vmem:[%s736 + $0x158] sm:$0xff]
        %v1026 = vld [vmem:[%s736 + $0x160] sm:$0xff]
        %v1027 = vld [vmem:[%s736 + $0x168] sm:$0xff]
        %v1028 = vld [vmem:[%s736 + $0x170] sm:$0xff]
        %v1029 = vld [vmem:[%s736 + $0x178] sm:$0xff]
        %v1030 = vld [vmem:[%s736 + $0x180] sm:$0xff]
        %v1031 = vld [vmem:[%s736 + $0x188] sm:$0xff]
        %v1032 = vld [vmem:[%s736 + $0x190] sm:$0xff]
        %v1033 = vld [vmem:[%s736 + $0x198] sm:$0xff]
        %v1034 = vld [vmem:[%s736 + $0x1a0] sm:$0xff]
        %v1035 = vld [vmem:[%s736 + $0x1a8] sm:$0xff]
        %v1036 = vld [vmem:[%s736 + $0x1b0] sm:$0xff]
        %v1037 = vld [vmem:[%s736 + $0x1b8] sm:$0xff]
        %v1038 = vld [vmem:[%s736 + $0x1c0] sm:$0xff]
        %v1039 = vld [vmem:[%s736 + $0x1c8] sm:$0xff]
        %v1040 = vld [vmem:[%s736 + $0x1d0] sm:$0xff]
        %v1041 = vld [vmem:[%s736 + $0x1d8] sm:$0xff]
        %v1042 = vld [vmem:[%s736 + $0x1e0] sm:$0xff]
        %v1043 = vld [vmem:[%s736 + $0x1e8] sm:$0xff]
        %v1044 = vld [vmem:[%s736 + $0x1f0] sm:$0xff]
        %v1045 = vld [vmem:[%s736 + $0x1f8] sm:$0xff]
        %v1046 = vld [vmem:[%s736 + $0x200] sm:$0xff]
        %v1047 = vld [vmem:[%s736 + $0x208] sm:$0xff]
        %v1048 = vld [vmem:[%s736 + $0x210] sm:$0xff]
        %v1049 = vld [vmem:[%s736 + $0x218] sm:$0xff]
        %v1050 = vld [vmem:[%s736 + $0x220] sm:$0xff]
        %v1051 = vld [vmem:[%s736 + $0x228] sm:$0xff]
        %v1052 = vld [vmem:[%s736 + $0x230] sm:$0xff]
        %v1053 = vld [vmem:[%s736 + $0x238] sm:$0xff]
        %v1054 = vld [vmem:[%s736 + $0x240] sm:$0xff]
        %v1055 = vld [vmem:[%s736 + $0x248] sm:$0xff]
        %v1056 = vld [vmem:[%s736 + $0x250] sm:$0xff]
        %v1057 = vld [vmem:[%s736 + $0x258] sm:$0xff]
        %v1058 = vld [vmem:[%s736 + $0x260] sm:$0xff]
        %v1059 = vld [vmem:[%s736 + $0x268] sm:$0xff]
        %v1060 = vld [vmem:[%s736 + $0x270] sm:$0xff]
        %v1061 = vld [vmem:[%s736 + $0x278] sm:$0xff]
        %v1062 = vld [vmem:[%s736 + $0x280] sm:$0xff]
        %v1063 = vld [vmem:[%s736 + $0x288] sm:$0xff]
        %v1064 = vld [vmem:[%s736 + $0x290] sm:$0xff]
        %v1065 = vld [vmem:[%s736 + $0x298] sm:$0xff]
        %v1066 = vld [vmem:[%s736 + $0x2a0] sm:$0xff]
        %v1067 = vld [vmem:[%s736 + $0x2a8] sm:$0xff]
        %v1068 = vld [vmem:[%s736 + $0x2b0] sm:$0xff]
        %v1069 = vld [vmem:[%s736 + $0x2b8] sm:$0xff]
        %v1070 = vld [vmem:[%s736 + $0x2c0] sm:$0xff]
        %v1071 = vld [vmem:[%s736 + $0x2c8] sm:$0xff]
        %v1072 = vld [vmem:[%s736 + $0x2d0] sm:$0xff]
        %v1073 = vld [vmem:[%s736 + $0x2d8] sm:$0xff]
        %v1074 = vld [vmem:[%s736 + $0x2e0] sm:$0xff]
        %v1075 = vld [vmem:[%s736 + $0x2e8] sm:$0xff]
        %v1076 = vld [vmem:[%s736 + $0x2f0] sm:$0xff]
        %v1077 = vld [vmem:[%s736 + $0x2f8] sm:$0xff]
        %v1078 = vld [vmem:[%s864] sm:$0x3f]
        %v1080 = vlaneseq
        %v1081 = vshrl.u32 %v1080, 7
        %v1082 = vsub.s32 0, %v1081
        %v1083 = vrot.slane %v1078, %v1082
        %v1084 = vlaneseq
        %v1085 = vshrl.u32 %v1084, 7
        %v1086 = vsub.s32 1, %v1085
        %v1087 = vrot.slane %v1078, %v1086
        %v1088 = vlaneseq
        %v1089 = vshrl.u32 %v1088, 7
        %v1090 = vsub.s32 2, %v1089
        %v1091 = vrot.slane %v1078, %v1090
        %v1092 = vlaneseq
        %v1093 = vshrl.u32 %v1092, 7
        %v1094 = vsub.s32 3, %v1093
        %v1095 = vrot.slane %v1078, %v1094
        %v1096 = vlaneseq
        %v1097 = vshrl.u32 %v1096, 7
        %v1098 = vsub.s32 4, %v1097
        %v1099 = vrot.slane %v1078, %v1098
        %v1100 = vlaneseq
        %v1101 = vshrl.u32 %v1100, 7
        %v1102 = vsub.s32 5, %v1101
        %v1103 = vrot.slane %v1078, %v1102
        %v1206 = vunpack.c.l.b16 %v982
        %v1207 = vunpack.c.h.b16 %v982
        %v1208 = vunpack.c.l.b16 %v983
        %v1209 = vunpack.c.h.b16 %v983
        %v1210 = vunpack.c.l.b16 %v984
        %v1211 = vunpack.c.h.b16 %v984
        %v1212 = vunpack.c.l.b16 %v985
        %v1213 = vunpack.c.h.b16 %v985
        %v1214 = vunpack.c.l.b16 %v986
        %v1215 = vunpack.c.h.b16 %v986
        %v1216 = vunpack.c.l.b16 %v987
        %v1217 = vunpack.c.h.b16 %v987
        %v1218 = vunpack.c.l.b16 %v988
        %v1219 = vunpack.c.h.b16 %v988
        %v1220 = vunpack.c.l.b16 %v989
        %v1221 = vunpack.c.h.b16 %v989
        %v1222 = vunpack.c.l.b16 %v990
        %v1223 = vunpack.c.h.b16 %v990
        %v1224 = vunpack.c.l.b16 %v991
        %v1225 = vunpack.c.h.b16 %v991
        %v1226 = vunpack.c.l.b16 %v992
        %v1227 = vunpack.c.h.b16 %v992
        %v1228 = vunpack.c.l.b16 %v993
        %v1229 = vunpack.c.h.b16 %v993
        %v1230 = vunpack.c.l.b16 %v994
        %v1231 = vunpack.c.h.b16 %v994
        %v1232 = vunpack.c.l.b16 %v995
        %v1233 = vunpack.c.h.b16 %v995
        %v1234 = vunpack.c.l.b16 %v996
        %v1235 = vunpack.c.h.b16 %v996
        %v1236 = vunpack.c.l.b16 %v997
        %v1237 = vunpack.c.h.b16 %v997
        %v1238 = vunpack.c.l.b16 %v998
        %v1239 = vunpack.c.h.b16 %v998
        %v1240 = vunpack.c.l.b16 %v999
        %v1241 = vunpack.c.h.b16 %v999
        %v1242 = vunpack.c.l.b16 %v1000
        %v1243 = vunpack.c.h.b16 %v1000
        %v1244 = vunpack.c.l.b16 %v1001
        %v1245 = vunpack.c.h.b16 %v1001
        %v1246 = vunpack.c.l.b16 %v1002
        %v1247 = vunpack.c.h.b16 %v1002
        %v1248 = vunpack.c.l.b16 %v1003
        %v1249 = vunpack.c.h.b16 %v1003
        %v1250 = vunpack.c.l.b16 %v1004
        %v1251 = vunpack.c.h.b16 %v1004
        %v1252 = vunpack.c.l.b16 %v1005
        %v1253 = vunpack.c.h.b16 %v1005
        %v1254 = vunpack.c.l.b16 %v1006
        %v1255 = vunpack.c.h.b16 %v1006
        %v1256 = vunpack.c.l.b16 %v1007
        %v1257 = vunpack.c.h.b16 %v1007
        %v1258 = vunpack.c.l.b16 %v1008
        %v1259 = vunpack.c.h.b16 %v1008
        %v1260 = vunpack.c.l.b16 %v1009
        %v1261 = vunpack.c.h.b16 %v1009
        %v1262 = vunpack.c.l.b16 %v1010
        %v1263 = vunpack.c.h.b16 %v1010
        %v1264 = vunpack.c.l.b16 %v1011
        %v1265 = vunpack.c.h.b16 %v1011
        %v1266 = vunpack.c.l.b16 %v1012
        %v1267 = vunpack.c.h.b16 %v1012
        %v1268 = vunpack.c.l.b16 %v1013
        %v1269 = vunpack.c.h.b16 %v1013
        %v1270 = vunpack.c.l.b16 %v1014
        %v1271 = vunpack.c.h.b16 %v1014
        %v1272 = vunpack.c.l.b16 %v1015
        %v1273 = vunpack.c.h.b16 %v1015
        %v1274 = vunpack.c.l.b16 %v1016
        %v1275 = vunpack.c.h.b16 %v1016
        %v1276 = vunpack.c.l.b16 %v1017
        %v1277 = vunpack.c.h.b16 %v1017
        %v1278 = vunpack.c.l.b16 %v1018
        %v1279 = vunpack.c.h.b16 %v1018
        %v1280 = vunpack.c.l.b16 %v1019
        %v1281 = vunpack.c.h.b16 %v1019
        %v1282 = vunpack.c.l.b16 %v1020
        %v1283 = vunpack.c.h.b16 %v1020
        %v1284 = vunpack.c.l.b16 %v1021
        %v1285 = vunpack.c.h.b16 %v1021
        %v1286 = vunpack.c.l.b16 %v1022
        %v1287 = vunpack.c.h.b16 %v1022
        %v1288 = vunpack.c.l.b16 %v1023
        %v1289 = vunpack.c.h.b16 %v1023
        %v1290 = vunpack.c.l.b16 %v1024
        %v1291 = vunpack.c.h.b16 %v1024
        %v1292 = vunpack.c.l.b16 %v1025
        %v1293 = vunpack.c.h.b16 %v1025
        %v1294 = vunpack.c.l.b16 %v1026
        %v1295 = vunpack.c.h.b16 %v1026
        %v1296 = vunpack.c.l.b16 %v1027
        %v1297 = vunpack.c.h.b16 %v1027
        %v1298 = vunpack.c.l.b16 %v1028
        %v1299 = vunpack.c.h.b16 %v1028
        %v1300 = vunpack.c.l.b16 %v1029
        %v1301 = vunpack.c.h.b16 %v1029
        %v1302 = vunpack.c.l.b16 %v1030
        %v1303 = vunpack.c.h.b16 %v1030
        %v1304 = vunpack.c.l.b16 %v1031
        %v1305 = vunpack.c.h.b16 %v1031
        %v1306 = vunpack.c.l.b16 %v1032
        %v1307 = vunpack.c.h.b16 %v1032
        %v1308 = vunpack.c.l.b16 %v1033
        %v1309 = vunpack.c.h.b16 %v1033
        %v1310 = vunpack.c.l.b16 %v1034
        %v1311 = vunpack.c.h.b16 %v1034
        %v1312 = vunpack.c.l.b16 %v1035
        %v1313 = vunpack.c.h.b16 %v1035
        %v1314 = vunpack.c.l.b16 %v1036
        %v1315 = vunpack.c.h.b16 %v1036
        %v1316 = vunpack.c.l.b16 %v1037
        %v1317 = vunpack.c.h.b16 %v1037
        %v1318 = vunpack.c.l.b16 %v1038
        %v1319 = vunpack.c.h.b16 %v1038
        %v1320 = vunpack.c.l.b16 %v1039
        %v1321 = vunpack.c.h.b16 %v1039
        %v1322 = vunpack.c.l.b16 %v1040
        %v1323 = vunpack.c.h.b16 %v1040
        %v1324 = vunpack.c.l.b16 %v1041
        %v1325 = vunpack.c.h.b16 %v1041
        %v1326 = vunpack.c.l.b16 %v1042
        %v1327 = vunpack.c.h.b16 %v1042
        %v1328 = vunpack.c.l.b16 %v1043
        %v1329 = vunpack.c.h.b16 %v1043
        %v1330 = vunpack.c.l.b16 %v1044
        %v1331 = vunpack.c.h.b16 %v1044
        %v1332 = vunpack.c.l.b16 %v1045
        %v1333 = vunpack.c.h.b16 %v1045
        %v1334 = vunpack.c.l.b16 %v1046
        %v1335 = vunpack.c.h.b16 %v1046
        %v1336 = vunpack.c.l.b16 %v1047
        %v1337 = vunpack.c.h.b16 %v1047
        %v1338 = vunpack.c.l.b16 %v1048
        %v1339 = vunpack.c.h.b16 %v1048
        %v1340 = vunpack.c.l.b16 %v1049
        %v1341 = vunpack.c.h.b16 %v1049
        %v1342 = vunpack.c.l.b16 %v1050
        %v1343 = vunpack.c.h.b16 %v1050
        %v1344 = vunpack.c.l.b16 %v1051
        %v1345 = vunpack.c.h.b16 %v1051
        %v1346 = vunpack.c.l.b16 %v1052
        %v1347 = vunpack.c.h.b16 %v1052
        %v1348 = vunpack.c.l.b16 %v1053
        %v1349 = vunpack.c.h.b16 %v1053
        %v1350 = vunpack.c.l.b16 %v1054
        %v1351 = vunpack.c.h.b16 %v1054
        %v1352 = vunpack.c.l.b16 %v1055
        %v1353 = vunpack.c.h.b16 %v1055
        %v1354 = vunpack.c.l.b16 %v1056
        %v1355 = vunpack.c.h.b16 %v1056
        %v1356 = vunpack.c.l.b16 %v1057
        %v1357 = vunpack.c.h.b16 %v1057
        %v1358 = vunpack.c.l.b16 %v1058
        %v1359 = vunpack.c.h.b16 %v1058
        %v1360 = vunpack.c.l.b16 %v1059
        %v1361 = vunpack.c.h.b16 %v1059
        %v1362 = vunpack.c.l.b16 %v1060
        %v1363 = vunpack.c.h.b16 %v1060
        %v1364 = vunpack.c.l.b16 %v1061
        %v1365 = vunpack.c.h.b16 %v1061
        %v1366 = vunpack.c.l.b16 %v1062
        %v1367 = vunpack.c.h.b16 %v1062
        %v1368 = vunpack.c.l.b16 %v1063
        %v1369 = vunpack.c.h.b16 %v1063
        %v1370 = vunpack.c.l.b16 %v1064
        %v1371 = vunpack.c.h.b16 %v1064
        %v1372 = vunpack.c.l.b16 %v1065
        %v1373 = vunpack.c.h.b16 %v1065
        %v1374 = vunpack.c.l.b16 %v1066
        %v1375 = vunpack.c.h.b16 %v1066
        %v1376 = vunpack.c.l.b16 %v1067
        %v1377 = vunpack.c.h.b16 %v1067
        %v1378 = vunpack.c.l.b16 %v1068
        %v1379 = vunpack.c.h.b16 %v1068
        %v1380 = vunpack.c.l.b16 %v1069
        %v1381 = vunpack.c.h.b16 %v1069
        %v1382 = vunpack.c.l.b16 %v1070
        %v1383 = vunpack.c.h.b16 %v1070
        %v1384 = vunpack.c.l.b16 %v1071
        %v1385 = vunpack.c.h.b16 %v1071
        %v1386 = vunpack.c.l.b16 %v1072
        %v1387 = vunpack.c.h.b16 %v1072
        %v1388 = vunpack.c.l.b16 %v1073
        %v1389 = vunpack.c.h.b16 %v1073
        %v1390 = vunpack.c.l.b16 %v1074
        %v1391 = vunpack.c.h.b16 %v1074
        %v1392 = vunpack.c.l.b16 %v1075
        %v1393 = vunpack.c.h.b16 %v1075
        %v1394 = vunpack.c.l.b16 %v1076
        %v1395 = vunpack.c.h.b16 %v1076
        %v1396 = vunpack.c.l.b16 %v1077
        %v1397 = vunpack.c.h.b16 %v1077
        %v1398 = vpack.c.b16 %v1212, %v1206
        %v1399 = vpack.c.b16 %v1213, %v1207
        %v1400 = vpack.c.b16 %v1214, %v1208
        %v1401 = vpack.c.b16 %v1215, %v1209
        %v1402 = vpack.c.b16 %v1216, %v1210
        %v1403 = vpack.c.b16 %v1217, %v1211
        %v1404 = vpack.c.b16 %v1224, %v1218
        %v1405 = vpack.c.b16 %v1225, %v1219
        %v1406 = vpack.c.b16 %v1226, %v1220
        %v1407 = vpack.c.b16 %v1227, %v1221
        %v1408 = vpack.c.b16 %v1228, %v1222
        %v1409 = vpack.c.b16 %v1229, %v1223
        %v1410 = vpack.c.b16 %v1236, %v1230
        %v1411 = vpack.c.b16 %v1237, %v1231
        %v1412 = vpack.c.b16 %v1238, %v1232
        %v1413 = vpack.c.b16 %v1239, %v1233
        %v1414 = vpack.c.b16 %v1240, %v1234
        %v1415 = vpack.c.b16 %v1241, %v1235
        %v1416 = vpack.c.b16 %v1248, %v1242
        %v1417 = vpack.c.b16 %v1249, %v1243
        %v1418 = vpack.c.b16 %v1250, %v1244
        %v1419 = vpack.c.b16 %v1251, %v1245
        %v1420 = vpack.c.b16 %v1252, %v1246
        %v1421 = vpack.c.b16 %v1253, %v1247
        %v1422 = vpack.c.b16 %v1260, %v1254
        %v1423 = vpack.c.b16 %v1261, %v1255
        %v1424 = vpack.c.b16 %v1262, %v1256
        %v1425 = vpack.c.b16 %v1263, %v1257
        %v1426 = vpack.c.b16 %v1264, %v1258
        %v1427 = vpack.c.b16 %v1265, %v1259
        %v1428 = vpack.c.b16 %v1272, %v1266
        %v1429 = vpack.c.b16 %v1273, %v1267
        %v1430 = vpack.c.b16 %v1274, %v1268
        %v1431 = vpack.c.b16 %v1275, %v1269
        %v1432 = vpack.c.b16 %v1276, %v1270
        %v1433 = vpack.c.b16 %v1277, %v1271
        %v1434 = vpack.c.b16 %v1284, %v1278
        %v1435 = vpack.c.b16 %v1285, %v1279
        %v1436 = vpack.c.b16 %v1286, %v1280
        %v1437 = vpack.c.b16 %v1287, %v1281
        %v1438 = vpack.c.b16 %v1288, %v1282
        %v1439 = vpack.c.b16 %v1289, %v1283
        %v1440 = vpack.c.b16 %v1296, %v1290
        %v1441 = vpack.c.b16 %v1297, %v1291
        %v1442 = vpack.c.b16 %v1298, %v1292
        %v1443 = vpack.c.b16 %v1299, %v1293
        %v1444 = vpack.c.b16 %v1300, %v1294
        %v1445 = vpack.c.b16 %v1301, %v1295
        %v1446 = vpack.c.b16 %v1308, %v1302
        %v1447 = vpack.c.b16 %v1309, %v1303
        %v1448 = vpack.c.b16 %v1310, %v1304
        %v1449 = vpack.c.b16 %v1311, %v1305
        %v1450 = vpack.c.b16 %v1312, %v1306
        %v1451 = vpack.c.b16 %v1313, %v1307
        %v1452 = vpack.c.b16 %v1320, %v1314
        %v1453 = vpack.c.b16 %v1321, %v1315
        %v1454 = vpack.c.b16 %v1322, %v1316
        %v1455 = vpack.c.b16 %v1323, %v1317
        %v1456 = vpack.c.b16 %v1324, %v1318
        %v1457 = vpack.c.b16 %v1325, %v1319
        %v1458 = vpack.c.b16 %v1332, %v1326
        %v1459 = vpack.c.b16 %v1333, %v1327
        %v1460 = vpack.c.b16 %v1334, %v1328
        %v1461 = vpack.c.b16 %v1335, %v1329
        %v1462 = vpack.c.b16 %v1336, %v1330
        %v1463 = vpack.c.b16 %v1337, %v1331
        %v1464 = vpack.c.b16 %v1344, %v1338
        %v1465 = vpack.c.b16 %v1345, %v1339
        %v1466 = vpack.c.b16 %v1346, %v1340
        %v1467 = vpack.c.b16 %v1347, %v1341
        %v1468 = vpack.c.b16 %v1348, %v1342
        %v1469 = vpack.c.b16 %v1349, %v1343
        %v1470 = vpack.c.b16 %v1356, %v1350
        %v1471 = vpack.c.b16 %v1357, %v1351
        %v1472 = vpack.c.b16 %v1358, %v1352
        %v1473 = vpack.c.b16 %v1359, %v1353
        %v1474 = vpack.c.b16 %v1360, %v1354
        %v1475 = vpack.c.b16 %v1361, %v1355
        %v1476 = vpack.c.b16 %v1368, %v1362
        %v1477 = vpack.c.b16 %v1369, %v1363
        %v1478 = vpack.c.b16 %v1370, %v1364
        %v1479 = vpack.c.b16 %v1371, %v1365
        %v1480 = vpack.c.b16 %v1372, %v1366
        %v1481 = vpack.c.b16 %v1373, %v1367
        %v1482 = vpack.c.b16 %v1380, %v1374
        %v1483 = vpack.c.b16 %v1381, %v1375
        %v1484 = vpack.c.b16 %v1382, %v1376
        %v1485 = vpack.c.b16 %v1383, %v1377
        %v1486 = vpack.c.b16 %v1384, %v1378
        %v1487 = vpack.c.b16 %v1385, %v1379
        %v1488 = vpack.c.b16 %v1392, %v1386
        %v1489 = vpack.c.b16 %v1393, %v1387
        %v1490 = vpack.c.b16 %v1394, %v1388
        %v1491 = vpack.c.b16 %v1395, %v1389
        %v1492 = vpack.c.b16 %v1396, %v1390
        %v1493 = vpack.c.b16 %v1397, %v1391
        %1590 = vmatprep.subr.bf16.mxu0 %v1399
        %1591 = vmatpush1.bf16.msra.mxu0 %v1398
        %1592 = vmatprep.subr.bf16.mxu0 %v1405
        %1593 = vmatpush1.bf16.msra.mxu0 %v1404
        %1594 = vmatprep.subr.bf16.mxu0 %v1411
        %1595 = vmatpush1.bf16.msra.mxu0 %v1410
        %1596 = vmatprep.subr.bf16.mxu0 %v1417
        %1597 = vmatpush1.bf16.msra.mxu0 %v1416
        %1598 = vmatprep.subr.bf16.mxu0 %v1423
        %1599 = vmatpush1.bf16.msra.mxu0 %v1422
        %1600 = vmatprep.subr.bf16.mxu0 %v1429
        %1601 = vmatpush1.bf16.msra.mxu0 %v1428
        %1602 = vmatprep.subr.bf16.mxu0 %v1435
        %1603 = vmatpush1.bf16.msra.mxu0 %v1434
        %1604 = vmatprep.subr.bf16.mxu0 %v1441
        %1605 = vmatpush1.bf16.msra.mxu0 %v1440
        %1606 = vmatprep.subr.bf16.mxu0 %v1447
        %1607 = vmatpush1.bf16.msra.mxu0 %v1446
        %1608 = vmatprep.subr.bf16.mxu0 %v1453
        %1609 = vmatpush1.bf16.msra.mxu0 %v1452
        %1610 = vmatprep.subr.bf16.mxu0 %v1459
        %1611 = vmatpush1.bf16.msra.mxu0 %v1458
        %1612 = vmatprep.subr.bf16.mxu0 %v1465
        %1613 = vmatpush1.bf16.msra.mxu0 %v1464
        %1614 = vmatprep.subr.bf16.mxu0 %v1471
        %1615 = vmatpush1.bf16.msra.mxu0 %v1470
        %1616 = vmatprep.subr.bf16.mxu0 %v1477
        %1617 = vmatpush1.bf16.msra.mxu0 %v1476
        %1618 = vmatprep.subr.bf16.mxu0 %v1483
        %1619 = vmatpush1.bf16.msra.mxu0 %v1482
        %1620 = vmatprep.subr.bf16.mxu0 %v1489
        %1621 = vmatpush1.bf16.msra.mxu0 %v1488
        %1622 = vmatprep.mubr.bf16.mxu0 %v981
        %1623 = vmatmul.mubr.bf16.gmra.mrb[0].mxu0 %v980
        %v1624 = vpop.f32.mrb[0].mxu0
        %v1625 = vadd.f32 %v1083, %v1624
        %v1626 = vpop.f32.mrb[0].mxu0
        %v1627 = vadd.f32 %v1087, %v1626
        %v1628 = vpop.f32.mrb[0].mxu0
        %v1629 = vadd.f32 %v1083, %v1628
        %v1630 = vpop.f32.mrb[0].mxu0
        %v1631 = vadd.f32 %v1087, %v1630
        %1632 = vdwg.mxu0
        %1633 = vmatprep.subr.bf16.mxu0 %v1401
        %1634 = vmatpush1.bf16.msra.mxu0 %v1400
        %1635 = vmatprep.subr.bf16.mxu0 %v1407
        %1636 = vmatpush1.bf16.msra.mxu0 %v1406
        %1637 = vmatprep.subr.bf16.mxu0 %v1413
        %1638 = vmatpush1.bf16.msra.mxu0 %v1412
        %1639 = vmatprep.subr.bf16.mxu0 %v1419
        %1640 = vmatpush1.bf16.msra.mxu0 %v1418
        %1641 = vmatprep.subr.bf16.mxu0 %v1425
        %1642 = vmatpush1.bf16.msra.mxu0 %v1424
        %1643 = vmatprep.subr.bf16.mxu0 %v1431
        %1644 = vmatpush1.bf16.msra.mxu0 %v1430
        %1645 = vmatprep.subr.bf16.mxu0 %v1437
        %1646 = vmatpush1.bf16.msra.mxu0 %v1436
        %1647 = vmatprep.subr.bf16.mxu0 %v1443
        %1648 = vmatpush1.bf16.msra.mxu0 %v1442
        %1649 = vmatprep.subr.bf16.mxu0 %v1449
        %1650 = vmatpush1.bf16.msra.mxu0 %v1448
        %1651 = vmatprep.subr.bf16.mxu0 %v1455
        %1652 = vmatpush1.bf16.msra.mxu0 %v1454
        %1653 = vmatprep.subr.bf16.mxu0 %v1461
        %1654 = vmatpush1.bf16.msra.mxu0 %v1460
        %1655 = vmatprep.subr.bf16.mxu0 %v1467
        %1656 = vmatpush1.bf16.msra.mxu0 %v1466
        %1657 = vmatprep.subr.bf16.mxu0 %v1473
        %1658 = vmatpush1.bf16.msra.mxu0 %v1472
        %1659 = vmatprep.subr.bf16.mxu0 %v1479
        %1660 = vmatpush1.bf16.msra.mxu0 %v1478
        %1661 = vmatprep.subr.bf16.mxu0 %v1485
        %1662 = vmatpush1.bf16.msra.mxu0 %v1484
        %1663 = vmatprep.subr.bf16.mxu0 %v1491
        %1664 = vmatpush1.bf16.msra.mxu0 %v1490
        %1665 = vmatprep.mubr.bf16.mxu0 %v981
        %1666 = vmatmul.mubr.bf16.gmra.mrb[0].mxu0 %v980
        %v1667 = vpop.f32.mrb[0].mxu0
        %v1668 = vadd.f32 %v1091, %v1667
        %v1669 = vpop.f32.mrb[0].mxu0
        %v1670 = vadd.f32 %v1095, %v1669
        %v1671 = vpop.f32.mrb[0].mxu0
        %v1672 = vadd.f32 %v1091, %v1671
        %v1673 = vpop.f32.mrb[0].mxu0
        %v1674 = vadd.f32 %v1095, %v1673
        %1675 = vdwg.mxu0
        %1676 = vmatprep.subr.bf16.mxu0 %v1403
        %1677 = vmatpush1.bf16.msra.mxu0 %v1402
        %1678 = vmatprep.subr.bf16.mxu0 %v1409
        %1679 = vmatpush1.bf16.msra.mxu0 %v1408
        %1680 = vmatprep.subr.bf16.mxu0 %v1415
        %1681 = vmatpush1.bf16.msra.mxu0 %v1414
        %1682 = vmatprep.subr.bf16.mxu0 %v1421
        %1683 = vmatpush1.bf16.msra.mxu0 %v1420
        %1684 = vmatprep.subr.bf16.mxu0 %v1427
        %1685 = vmatpush1.bf16.msra.mxu0 %v1426
        %1686 = vmatprep.subr.bf16.mxu0 %v1433
        %1687 = vmatpush1.bf16.msra.mxu0 %v1432
        %1688 = vmatprep.subr.bf16.mxu0 %v1439
        %1689 = vmatpush1.bf16.msra.mxu0 %v1438
        %1690 = vmatprep.subr.bf16.mxu0 %v1445
        %1691 = vmatpush1.bf16.msra.mxu0 %v1444
        %1692 = vmatprep.subr.bf16.mxu0 %v1451
        %1693 = vmatpush1.bf16.msra.mxu0 %v1450
        %1694 = vmatprep.subr.bf16.mxu0 %v1457
        %1695 = vmatpush1.bf16.msra.mxu0 %v1456
        %1696 = vmatprep.subr.bf16.mxu0 %v1463
        %1697 = vmatpush1.bf16.msra.mxu0 %v1462
        %1698 = vmatprep.subr.bf16.mxu0 %v1469
        %1699 = vmatpush1.bf16.msra.mxu0 %v1468
        %1700 = vmatprep.subr.bf16.mxu0 %v1475
        %1701 = vmatpush1.bf16.msra.mxu0 %v1474
        %1702 = vmatprep.subr.bf16.mxu0 %v1481
        %1703 = vmatpush1.bf16.msra.mxu0 %v1480
        %1704 = vmatprep.subr.bf16.mxu0 %v1487
        %1705 = vmatpush1.bf16.msra.mxu0 %v1486
        %1706 = vmatprep.subr.bf16.mxu0 %v1493
        %1707 = vmatpush1.bf16.msra.mxu0 %v1492
        %1708 = vmatprep.mubr.bf16.mxu0 %v981
        %1709 = vmatmul.mubr.bf16.gmra.mrb[0].mxu0 %v980
        %v1710 = vpop.f32.mrb[0].mxu0
        %v1711 = vadd.f32 %v1099, %v1710
        %v1712 = vpop.f32.mrb[0].mxu0
        %v1713 = vadd.f32 %v1103, %v1712
        %v1714 = vpop.f32.mrb[0].mxu0
        %v1715 = vadd.f32 %v1099, %v1714
        %v1716 = vpop.f32.mrb[0].mxu0
        %v1717 = vadd.f32 %v1103, %v1716
        %1718 = vdwg.mxu0
        %v1719 = vcombine.high %v1625, 0.0
        %v1721 = vunpack.c.l.s4 1983009808
        %v1722 = vunpack.c.0.s8 %v1721
        %v1723 = vlaneseq
        %v1724 = vshrl.u32 %v1723, 7
        %v1725 = vsub.s32 %v1722, %v1724
        %v1726 = vrot.slane %v1625, %v1725
        %v1728 = vunpack.c.l.s4 1983009808
        %v1729 = vunpack.c.0.s8 %v1728
        %v1730 = vlaneseq
        %v1731 = vshrl.u32 %v1730, 7
        %v1732 = vsub.s32 %v1729, %v1731
        %v1733 = vrot.slane %v1719, %v1732
        %v1734 = vcombine.high %v1627, 0.0
        %v1736 = vunpack.c.l.s4 1983009808
        %v1737 = vunpack.c.0.s8 %v1736
        %v1738 = vlaneseq
        %v1739 = vshrl.u32 %v1738, 7
        %v1740 = vsub.s32 %v1737, %v1739
        %v1741 = vrot.slane %v1627, %v1740
        %v1743 = vunpack.c.l.s4 1983009808
        %v1744 = vunpack.c.0.s8 %v1743
        %v1745 = vlaneseq
        %v1746 = vshrl.u32 %v1745, 7
        %v1747 = vsub.s32 %v1744, %v1746
        %v1748 = vrot.slane %v1734, %v1747
        %v1749 = vcombine.low %v1726, %v1741
        %v1750 = vcombine.high %v1726, %v1741
        %v1752 = vunpack.c.l.s4 1934713408
        %v1753 = vunpack.c.0.s8 %v1752
        %v1754 = vlaneseq
        %v1755 = vshrl.u32 %v1754, 7
        %v1756 = vsub.s32 %v1753, %v1755
        %v1757 = vrot.slane %v1749, %v1756
        %v1759 = vunpack.c.l.s4 1934713408
        %v1760 = vunpack.c.0.s8 %v1759
        %v1761 = vlaneseq
        %v1762 = vshrl.u32 %v1761, 7
        %v1763 = vsub.s32 %v1760, %v1762
        %v1764 = vrot.slane %v1750, %v1763
        %v1765 = vcombine.low %v1733, %v1748
        %v1766 = vcombine.high %v1733, %v1748
        %v1768 = vunpack.c.l.s4 1934713408
        %v1769 = vunpack.c.0.s8 %v1768
        %v1770 = vlaneseq
        %v1771 = vshrl.u32 %v1770, 7
        %v1772 = vsub.s32 %v1769, %v1771
        %v1773 = vrot.slane %v1765, %v1772
        %v1775 = vunpack.c.l.s4 1934713408
        %v1776 = vunpack.c.0.s8 %v1775
        %v1777 = vlaneseq
        %v1778 = vshrl.u32 %v1777, 7
        %v1779 = vsub.s32 %v1776, %v1778
        %v1780 = vrot.slane %v1766, %v1779
        %v1781 = vcombine.high %v1757, 0.0
        %v1782 = vcombine.high %v1764, 0.0
        %v1783 = vcombine.high %v1773, 0.0
        %v1784 = vcombine.high %v1780, 0.0
        %v1785 = vcombine.high %v1629, 0.0
        %v1787 = vunpack.c.l.s4 1983009808
        %v1788 = vunpack.c.0.s8 %v1787
        %v1789 = vlaneseq
        %v1790 = vshrl.u32 %v1789, 7
        %v1791 = vsub.s32 %v1788, %v1790
        %v1792 = vrot.slane %v1629, %v1791
        %v1794 = vunpack.c.l.s4 1983009808
        %v1795 = vunpack.c.0.s8 %v1794
        %v1796 = vlaneseq
        %v1797 = vshrl.u32 %v1796, 7
        %v1798 = vsub.s32 %v1795, %v1797
        %v1799 = vrot.slane %v1785, %v1798
        %v1800 = vcombine.high %v1631, 0.0
        %v1802 = vunpack.c.l.s4 1983009808
        %v1803 = vunpack.c.0.s8 %v1802
        %v1804 = vlaneseq
        %v1805 = vshrl.u32 %v1804, 7
        %v1806 = vsub.s32 %v1803, %v1805
        %v1807 = vrot.slane %v1631, %v1806
        %v1809 = vunpack.c.l.s4 1983009808
        %v1810 = vunpack.c.0.s8 %v1809
        %v1811 = vlaneseq
        %v1812 = vshrl.u32 %v1811, 7
        %v1813 = vsub.s32 %v1810, %v1812
        %v1814 = vrot.slane %v1800, %v1813
        %v1815 = vcombine.low %v1792, %v1807
        %v1816 = vcombine.high %v1792, %v1807
        %v1818 = vunpack.c.l.s4 1934713408
        %v1819 = vunpack.c.0.s8 %v1818
        %v1820 = vlaneseq
        %v1821 = vshrl.u32 %v1820, 7
        %v1822 = vsub.s32 %v1819, %v1821
        %v1823 = vrot.slane %v1815, %v1822
        %v1825 = vunpack.c.l.s4 1934713408
        %v1826 = vunpack.c.0.s8 %v1825
        %v1827 = vlaneseq
        %v1828 = vshrl.u32 %v1827, 7
        %v1829 = vsub.s32 %v1826, %v1828
        %v1830 = vrot.slane %v1816, %v1829
        %v1831 = vcombine.low %v1799, %v1814
        %v1832 = vcombine.high %v1799, %v1814
        %v1834 = vunpack.c.l.s4 1934713408
        %v1835 = vunpack.c.0.s8 %v1834
        %v1836 = vlaneseq
        %v1837 = vshrl.u32 %v1836, 7
        %v1838 = vsub.s32 %v1835, %v1837
        %v1839 = vrot.slane %v1831, %v1838
        %v1841 = vunpack.c.l.s4 1934713408
        %v1842 = vunpack.c.0.s8 %v1841
        %v1843 = vlaneseq
        %v1844 = vshrl.u32 %v1843, 7
        %v1845 = vsub.s32 %v1842, %v1844
        %v1846 = vrot.slane %v1832, %v1845
        %v1847 = vcombine.high %v1823, 0.0
        %v1848 = vcombine.high %v1830, 0.0
        %v1849 = vcombine.high %v1839, 0.0
        %v1850 = vcombine.high %v1846, 0.0
        %v1851 = vcombine.low %v1757, %v1764
        %v1853 = vunpack.c.l.s4 1983009808
        %v1854 = vunpack.c.0.s8 %v1853
        %v1855 = vlaneseq
        %v1856 = vshrl.u32 %v1855, 7
        %v1857 = vsub.s32 %v1854, %v1856
        %v1858 = vrot.slane %v1851, %v1857
        %v1859 = vcombine.low %v1781, %v1782
        %v1861 = vunpack.c.l.s4 1983009808
        %v1862 = vunpack.c.0.s8 %v1861
        %v1863 = vlaneseq
        %v1864 = vshrl.u32 %v1863, 7
        %v1865 = vsub.s32 %v1862, %v1864
        %v1866 = vrot.slane %v1859, %v1865
        %v1867 = vcombine.low %v1773, %v1780
        %v1869 = vunpack.c.l.s4 1983009808
        %v1870 = vunpack.c.0.s8 %v1869
        %v1871 = vlaneseq
        %v1872 = vshrl.u32 %v1871, 7
        %v1873 = vsub.s32 %v1870, %v1872
        %v1874 = vrot.slane %v1867, %v1873
        %v1875 = vcombine.low %v1783, %v1784
        %v1877 = vunpack.c.l.s4 1983009808
        %v1878 = vunpack.c.0.s8 %v1877
        %v1879 = vlaneseq
        %v1880 = vshrl.u32 %v1879, 7
        %v1881 = vsub.s32 %v1878, %v1880
        %v1882 = vrot.slane %v1875, %v1881
        %v1883 = vcombine.low %v1858, %v1866
        %v1885 = vunpack.c.l.s4 1934713408
        %v1886 = vunpack.c.0.s8 %v1885
        %v1887 = vlaneseq
        %v1888 = vshrl.u32 %v1887, 7
        %v1889 = vsub.s32 %v1886, %v1888
        %v1890 = vrot.slane %v1883, %v1889
        %v1891 = vcombine.low %v1874, %v1882
        %v1893 = vunpack.c.l.s4 1934713408
        %v1894 = vunpack.c.0.s8 %v1893
        %v1895 = vlaneseq
        %v1896 = vshrl.u32 %v1895, 7
        %v1897 = vsub.s32 %v1894, %v1896
        %v1898 = vrot.slane %v1891, %v1897
        %v1899 = vcombine.low %v1890, %v1898
        %v1900 = vcombine.high %v1890, %v1898
        %v1901 = vcombine.low %v1823, %v1830
        %v1903 = vunpack.c.l.s4 1983009808
        %v1904 = vunpack.c.0.s8 %v1903
        %v1905 = vlaneseq
        %v1906 = vshrl.u32 %v1905, 7
        %v1907 = vsub.s32 %v1904, %v1906
        %v1908 = vrot.slane %v1901, %v1907
        %v1909 = vcombine.low %v1847, %v1848
        %v1911 = vunpack.c.l.s4 1983009808
        %v1912 = vunpack.c.0.s8 %v1911
        %v1913 = vlaneseq
        %v1914 = vshrl.u32 %v1913, 7
        %v1915 = vsub.s32 %v1912, %v1914
        %v1916 = vrot.slane %v1909, %v1915
        %v1917 = vcombine.low %v1839, %v1846
        %v1919 = vunpack.c.l.s4 1983009808
        %v1920 = vunpack.c.0.s8 %v1919
        %v1921 = vlaneseq
        %v1922 = vshrl.u32 %v1921, 7
        %v1923 = vsub.s32 %v1920, %v1922
        %v1924 = vrot.slane %v1917, %v1923
        %v1925 = vcombine.low %v1849, %v1850
        %v1927 = vunpack.c.l.s4 1983009808
        %v1928 = vunpack.c.0.s8 %v1927
        %v1929 = vlaneseq
        %v1930 = vshrl.u32 %v1929, 7
        %v1931 = vsub.s32 %v1928, %v1930
        %v1932 = vrot.slane %v1925, %v1931
        %v1933 = vcombine.low %v1908, %v1916
        %v1935 = vunpack.c.l.s4 1934713408
        %v1936 = vunpack.c.0.s8 %v1935
        %v1937 = vlaneseq
        %v1938 = vshrl.u32 %v1937, 7
        %v1939 = vsub.s32 %v1936, %v1938
        %v1940 = vrot.slane %v1933, %v1939
        %v1941 = vcombine.low %v1924, %v1932
        %v1943 = vunpack.c.l.s4 1934713408
        %v1944 = vunpack.c.0.s8 %v1943
        %v1945 = vlaneseq
        %v1946 = vshrl.u32 %v1945, 7
        %v1947 = vsub.s32 %v1944, %v1946
        %v1948 = vrot.slane %v1941, %v1947
        %v1949 = vcombine.low %v1940, %v1948
        %v1950 = vcombine.high %v1940, %v1948
        %v1951 = vpack.c.bf16 %v1899, %v1899
        %v1952 = vpack.c.bf16 %v1900, %v1900
        %v1953 = vpack.c.bf16 %v1949, %v1949
        %v1954 = vpack.c.bf16 %v1950, %v1950
        %v1955 = vcombine.high %v1668, 0.0
        %v1957 = vunpack.c.l.s4 1983009808
        %v1958 = vunpack.c.0.s8 %v1957
        %v1959 = vlaneseq
        %v1960 = vshrl.u32 %v1959, 7
        %v1961 = vsub.s32 %v1958, %v1960
        %v1962 = vrot.slane %v1668, %v1961
        %v1964 = vunpack.c.l.s4 1983009808
        %v1965 = vunpack.c.0.s8 %v1964
        %v1966 = vlaneseq
        %v1967 = vshrl.u32 %v1966, 7
        %v1968 = vsub.s32 %v1965, %v1967
        %v1969 = vrot.slane %v1955, %v1968
        %v1970 = vcombine.high %v1670, 0.0
        %v1972 = vunpack.c.l.s4 1983009808
        %v1973 = vunpack.c.0.s8 %v1972
        %v1974 = vlaneseq
        %v1975 = vshrl.u32 %v1974, 7
        %v1976 = vsub.s32 %v1973, %v1975
        %v1977 = vrot.slane %v1670, %v1976
        %v1979 = vunpack.c.l.s4 1983009808
        %v1980 = vunpack.c.0.s8 %v1979
        %v1981 = vlaneseq
        %v1982 = vshrl.u32 %v1981, 7
        %v1983 = vsub.s32 %v1980, %v1982
        %v1984 = vrot.slane %v1970, %v1983
        %v1985 = vcombine.low %v1962, %v1977
        %v1986 = vcombine.high %v1962, %v1977
        %v1988 = vunpack.c.l.s4 1934713408
        %v1989 = vunpack.c.0.s8 %v1988
        %v1990 = vlaneseq
        %v1991 = vshrl.u32 %v1990, 7
        %v1992 = vsub.s32 %v1989, %v1991
        %v1993 = vrot.slane %v1985, %v1992
        %v1995 = vunpack.c.l.s4 1934713408
        %v1996 = vunpack.c.0.s8 %v1995
        %v1997 = vlaneseq
        %v1998 = vshrl.u32 %v1997, 7
        %v1999 = vsub.s32 %v1996, %v1998
        %v2000 = vrot.slane %v1986, %v1999
        %v2001 = vcombine.low %v1969, %v1984
        %v2002 = vcombine.high %v1969, %v1984
        %v2004 = vunpack.c.l.s4 1934713408
        %v2005 = vunpack.c.0.s8 %v2004
        %v2006 = vlaneseq
        %v2007 = vshrl.u32 %v2006, 7
        %v2008 = vsub.s32 %v2005, %v2007
        %v2009 = vrot.slane %v2001, %v2008
        %v2011 = vunpack.c.l.s4 1934713408
        %v2012 = vunpack.c.0.s8 %v2011
        %v2013 = vlaneseq
        %v2014 = vshrl.u32 %v2013, 7
        %v2015 = vsub.s32 %v2012, %v2014
        %v2016 = vrot.slane %v2002, %v2015
        %v2017 = vcombine.high %v1993, 0.0
        %v2018 = vcombine.high %v2000, 0.0
        %v2019 = vcombine.high %v2009, 0.0
        %v2020 = vcombine.high %v2016, 0.0
        %v2021 = vcombine.high %v1672, 0.0
        %v2023 = vunpack.c.l.s4 1983009808
        %v2024 = vunpack.c.0.s8 %v2023
        %v2025 = vlaneseq
        %v2026 = vshrl.u32 %v2025, 7
        %v2027 = vsub.s32 %v2024, %v2026
        %v2028 = vrot.slane %v1672, %v2027
        %v2030 = vunpack.c.l.s4 1983009808
        %v2031 = vunpack.c.0.s8 %v2030
        %v2032 = vlaneseq
        %v2033 = vshrl.u32 %v2032, 7
        %v2034 = vsub.s32 %v2031, %v2033
        %v2035 = vrot.slane %v2021, %v2034
        %v2036 = vcombine.high %v1674, 0.0
        %v2038 = vunpack.c.l.s4 1983009808
        %v2039 = vunpack.c.0.s8 %v2038
        %v2040 = vlaneseq
        %v2041 = vshrl.u32 %v2040, 7
        %v2042 = vsub.s32 %v2039, %v2041
        %v2043 = vrot.slane %v1674, %v2042
        %v2045 = vunpack.c.l.s4 1983009808
        %v2046 = vunpack.c.0.s8 %v2045
        %v2047 = vlaneseq
        %v2048 = vshrl.u32 %v2047, 7
        %v2049 = vsub.s32 %v2046, %v2048
        %v2050 = vrot.slane %v2036, %v2049
        %v2051 = vcombine.low %v2028, %v2043
        %v2052 = vcombine.high %v2028, %v2043
        %v2054 = vunpack.c.l.s4 1934713408
        %v2055 = vunpack.c.0.s8 %v2054
        %v2056 = vlaneseq
        %v2057 = vshrl.u32 %v2056, 7
        %v2058 = vsub.s32 %v2055, %v2057
        %v2059 = vrot.slane %v2051, %v2058
        %v2061 = vunpack.c.l.s4 1934713408
        %v2062 = vunpack.c.0.s8 %v2061
        %v2063 = vlaneseq
        %v2064 = vshrl.u32 %v2063, 7
        %v2065 = vsub.s32 %v2062, %v2064
        %v2066 = vrot.slane %v2052, %v2065
        %v2067 = vcombine.low %v2035, %v2050
        %v2068 = vcombine.high %v2035, %v2050
        %v2070 = vunpack.c.l.s4 1934713408
        %v2071 = vunpack.c.0.s8 %v2070
        %v2072 = vlaneseq
        %v2073 = vshrl.u32 %v2072, 7
        %v2074 = vsub.s32 %v2071, %v2073
        %v2075 = vrot.slane %v2067, %v2074
        %v2077 = vunpack.c.l.s4 1934713408
        %v2078 = vunpack.c.0.s8 %v2077
        %v2079 = vlaneseq
        %v2080 = vshrl.u32 %v2079, 7
        %v2081 = vsub.s32 %v2078, %v2080
        %v2082 = vrot.slane %v2068, %v2081
        %v2083 = vcombine.high %v2059, 0.0
        %v2084 = vcombine.high %v2066, 0.0
        %v2085 = vcombine.high %v2075, 0.0
        %v2086 = vcombine.high %v2082, 0.0
        %v2087 = vcombine.low %v1993, %v2000
        %v2089 = vunpack.c.l.s4 1983009808
        %v2090 = vunpack.c.0.s8 %v2089
        %v2091 = vlaneseq
        %v2092 = vshrl.u32 %v2091, 7
        %v2093 = vsub.s32 %v2090, %v2092
        %v2094 = vrot.slane %v2087, %v2093
        %v2095 = vcombine.low %v2017, %v2018
        %v2097 = vunpack.c.l.s4 1983009808
        %v2098 = vunpack.c.0.s8 %v2097
        %v2099 = vlaneseq
        %v2100 = vshrl.u32 %v2099, 7
        %v2101 = vsub.s32 %v2098, %v2100
        %v2102 = vrot.slane %v2095, %v2101
        %v2103 = vcombine.low %v2009, %v2016
        %v2105 = vunpack.c.l.s4 1983009808
        %v2106 = vunpack.c.0.s8 %v2105
        %v2107 = vlaneseq
        %v2108 = vshrl.u32 %v2107, 7
        %v2109 = vsub.s32 %v2106, %v2108
        %v2110 = vrot.slane %v2103, %v2109
        %v2111 = vcombine.low %v2019, %v2020
        %v2113 = vunpack.c.l.s4 1983009808
        %v2114 = vunpack.c.0.s8 %v2113
        %v2115 = vlaneseq
        %v2116 = vshrl.u32 %v2115, 7
        %v2117 = vsub.s32 %v2114, %v2116
        %v2118 = vrot.slane %v2111, %v2117
        %v2119 = vcombine.low %v2094, %v2102
        %v2121 = vunpack.c.l.s4 1934713408
        %v2122 = vunpack.c.0.s8 %v2121
        %v2123 = vlaneseq
        %v2124 = vshrl.u32 %v2123, 7
        %v2125 = vsub.s32 %v2122, %v2124
        %v2126 = vrot.slane %v2119, %v2125
        %v2127 = vcombine.low %v2110, %v2118
        %v2129 = vunpack.c.l.s4 1934713408
        %v2130 = vunpack.c.0.s8 %v2129
        %v2131 = vlaneseq
        %v2132 = vshrl.u32 %v2131, 7
        %v2133 = vsub.s32 %v2130, %v2132
        %v2134 = vrot.slane %v2127, %v2133
        %v2135 = vcombine.low %v2126, %v2134
        %v2136 = vcombine.high %v2126, %v2134
        %v2137 = vcombine.low %v2059, %v2066
        %v2139 = vunpack.c.l.s4 1983009808
        %v2140 = vunpack.c.0.s8 %v2139
        %v2141 = vlaneseq
        %v2142 = vshrl.u32 %v2141, 7
        %v2143 = vsub.s32 %v2140, %v2142
        %v2144 = vrot.slane %v2137, %v2143
        %v2145 = vcombine.low %v2083, %v2084
        %v2147 = vunpack.c.l.s4 1983009808
        %v2148 = vunpack.c.0.s8 %v2147
        %v2149 = vlaneseq
        %v2150 = vshrl.u32 %v2149, 7
        %v2151 = vsub.s32 %v2148, %v2150
        %v2152 = vrot.slane %v2145, %v2151
        %v2153 = vcombine.low %v2075, %v2082
        %v2155 = vunpack.c.l.s4 1983009808
        %v2156 = vunpack.c.0.s8 %v2155
        %v2157 = vlaneseq
        %v2158 = vshrl.u32 %v2157, 7
        %v2159 = vsub.s32 %v2156, %v2158
        %v2160 = vrot.slane %v2153, %v2159
        %v2161 = vcombine.low %v2085, %v2086
        %v2163 = vunpack.c.l.s4 1983009808
        %v2164 = vunpack.c.0.s8 %v2163
        %v2165 = vlaneseq
        %v2166 = vshrl.u32 %v2165, 7
        %v2167 = vsub.s32 %v2164, %v2166
        %v2168 = vrot.slane %v2161, %v2167
        %v2169 = vcombine.low %v2144, %v2152
        %v2171 = vunpack.c.l.s4 1934713408
        %v2172 = vunpack.c.0.s8 %v2171
        %v2173 = vlaneseq
        %v2174 = vshrl.u32 %v2173, 7
        %v2175 = vsub.s32 %v2172, %v2174
        %v2176 = vrot.slane %v2169, %v2175
        %v2177 = vcombine.low %v2160, %v2168
        %v2179 = vunpack.c.l.s4 1934713408
        %v2180 = vunpack.c.0.s8 %v2179
        %v2181 = vlaneseq
        %v2182 = vshrl.u32 %v2181, 7
        %v2183 = vsub.s32 %v2180, %v2182
        %v2184 = vrot.slane %v2177, %v2183
        %v2185 = vcombine.low %v2176, %v2184
        %v2186 = vcombine.high %v2176, %v2184
        %v2187 = vpack.c.bf16 %v2135, %v2135
        %v2188 = vpack.c.bf16 %v2136, %v2136
        %v2189 = vpack.c.bf16 %v2185, %v2185
        %v2190 = vpack.c.bf16 %v2186, %v2186
        %v2191 = vcombine.high %v1711, 0.0
        %v2193 = vunpack.c.l.s4 1983009808
        %v2194 = vunpack.c.0.s8 %v2193
        %v2195 = vlaneseq
        %v2196 = vshrl.u32 %v2195, 7
        %v2197 = vsub.s32 %v2194, %v2196
        %v2198 = vrot.slane %v1711, %v2197
        %v2200 = vunpack.c.l.s4 1983009808
        %v2201 = vunpack.c.0.s8 %v2200
        %v2202 = vlaneseq
        %v2203 = vshrl.u32 %v2202, 7
        %v2204 = vsub.s32 %v2201, %v2203
        %v2205 = vrot.slane %v2191, %v2204
        %v2206 = vcombine.high %v1713, 0.0
        %v2208 = vunpack.c.l.s4 1983009808
        %v2209 = vunpack.c.0.s8 %v2208
        %v2210 = vlaneseq
        %v2211 = vshrl.u32 %v2210, 7
        %v2212 = vsub.s32 %v2209, %v2211
        %v2213 = vrot.slane %v1713, %v2212
        %v2215 = vunpack.c.l.s4 1983009808
        %v2216 = vunpack.c.0.s8 %v2215
        %v2217 = vlaneseq
        %v2218 = vshrl.u32 %v2217, 7
        %v2219 = vsub.s32 %v2216, %v2218
        %v2220 = vrot.slane %v2206, %v2219
        %v2221 = vcombine.low %v2198, %v2213
        %v2222 = vcombine.high %v2198, %v2213
        %v2224 = vunpack.c.l.s4 1934713408
        %v2225 = vunpack.c.0.s8 %v2224
        %v2226 = vlaneseq
        %v2227 = vshrl.u32 %v2226, 7
        %v2228 = vsub.s32 %v2225, %v2227
        %v2229 = vrot.slane %v2221, %v2228
        %v2231 = vunpack.c.l.s4 1934713408
        %v2232 = vunpack.c.0.s8 %v2231
        %v2233 = vlaneseq
        %v2234 = vshrl.u32 %v2233, 7
        %v2235 = vsub.s32 %v2232, %v2234
        %v2236 = vrot.slane %v2222, %v2235
        %v2237 = vcombine.low %v2205, %v2220
        %v2238 = vcombine.high %v2205, %v2220
        %v2240 = vunpack.c.l.s4 1934713408
        %v2241 = vunpack.c.0.s8 %v2240
        %v2242 = vlaneseq
        %v2243 = vshrl.u32 %v2242, 7
        %v2244 = vsub.s32 %v2241, %v2243
        %v2245 = vrot.slane %v2237, %v2244
        %v2247 = vunpack.c.l.s4 1934713408
        %v2248 = vunpack.c.0.s8 %v2247
        %v2249 = vlaneseq
        %v2250 = vshrl.u32 %v2249, 7
        %v2251 = vsub.s32 %v2248, %v2250
        %v2252 = vrot.slane %v2238, %v2251
        %v2253 = vcombine.high %v2229, 0.0
        %v2254 = vcombine.high %v2236, 0.0
        %v2255 = vcombine.high %v2245, 0.0
        %v2256 = vcombine.high %v2252, 0.0
        %v2257 = vcombine.high %v1715, 0.0
        %v2259 = vunpack.c.l.s4 1983009808
        %v2260 = vunpack.c.0.s8 %v2259
        %v2261 = vlaneseq
        %v2262 = vshrl.u32 %v2261, 7
        %v2263 = vsub.s32 %v2260, %v2262
        %v2264 = vrot.slane %v1715, %v2263
        %v2266 = vunpack.c.l.s4 1983009808
        %v2267 = vunpack.c.0.s8 %v2266
        %v2268 = vlaneseq
        %v2269 = vshrl.u32 %v2268, 7
        %v2270 = vsub.s32 %v2267, %v2269
        %v2271 = vrot.slane %v2257, %v2270
        %v2272 = vcombine.high %v1717, 0.0
        %v2274 = vunpack.c.l.s4 1983009808
        %v2275 = vunpack.c.0.s8 %v2274
        %v2276 = vlaneseq
        %v2277 = vshrl.u32 %v2276, 7
        %v2278 = vsub.s32 %v2275, %v2277
        %v2279 = vrot.slane %v1717, %v2278
        %v2281 = vunpack.c.l.s4 1983009808
        %v2282 = vunpack.c.0.s8 %v2281
        %v2283 = vlaneseq
        %v2284 = vshrl.u32 %v2283, 7
        %v2285 = vsub.s32 %v2282, %v2284
        %v2286 = vrot.slane %v2272, %v2285
        %v2287 = vcombine.low %v2264, %v2279
        %v2288 = vcombine.high %v2264, %v2279
        %v2290 = vunpack.c.l.s4 1934713408
        %v2291 = vunpack.c.0.s8 %v2290
        %v2292 = vlaneseq
        %v2293 = vshrl.u32 %v2292, 7
        %v2294 = vsub.s32 %v2291, %v2293
        %v2295 = vrot.slane %v2287, %v2294
        %v2297 = vunpack.c.l.s4 1934713408
        %v2298 = vunpack.c.0.s8 %v2297
        %v2299 = vlaneseq
        %v2300 = vshrl.u32 %v2299, 7
        %v2301 = vsub.s32 %v2298, %v2300
        %v2302 = vrot.slane %v2288, %v2301
        %v2303 = vcombine.low %v2271, %v2286
        %v2304 = vcombine.high %v2271, %v2286
        %v2306 = vunpack.c.l.s4 1934713408
        %v2307 = vunpack.c.0.s8 %v2306
        %v2308 = vlaneseq
        %v2309 = vshrl.u32 %v2308, 7
        %v2310 = vsub.s32 %v2307, %v2309
        %v2311 = vrot.slane %v2303, %v2310
        %v2313 = vunpack.c.l.s4 1934713408
        %v2314 = vunpack.c.0.s8 %v2313
        %v2315 = vlaneseq
        %v2316 = vshrl.u32 %v2315, 7
        %v2317 = vsub.s32 %v2314, %v2316
        %v2318 = vrot.slane %v2304, %v2317
        %v2319 = vcombine.high %v2295, 0.0
        %v2320 = vcombine.high %v2302, 0.0
        %v2321 = vcombine.high %v2311, 0.0
        %v2322 = vcombine.high %v2318, 0.0
        %v2323 = vcombine.low %v2229, %v2236
        %v2325 = vunpack.c.l.s4 1983009808
        %v2326 = vunpack.c.0.s8 %v2325
        %v2327 = vlaneseq
        %v2328 = vshrl.u32 %v2327, 7
        %v2329 = vsub.s32 %v2326, %v2328
        %v2330 = vrot.slane %v2323, %v2329
        %v2331 = vcombine.low %v2253, %v2254
        %v2333 = vunpack.c.l.s4 1983009808
        %v2334 = vunpack.c.0.s8 %v2333
        %v2335 = vlaneseq
        %v2336 = vshrl.u32 %v2335, 7
        %v2337 = vsub.s32 %v2334, %v2336
        %v2338 = vrot.slane %v2331, %v2337
        %v2339 = vcombine.low %v2245, %v2252
        %v2341 = vunpack.c.l.s4 1983009808
        %v2342 = vunpack.c.0.s8 %v2341
        %v2343 = vlaneseq
        %v2344 = vshrl.u32 %v2343, 7
        %v2345 = vsub.s32 %v2342, %v2344
        %v2346 = vrot.slane %v2339, %v2345
        %v2347 = vcombine.low %v2255, %v2256
        %v2349 = vunpack.c.l.s4 1983009808
        %v2350 = vunpack.c.0.s8 %v2349
        %v2351 = vlaneseq
        %v2352 = vshrl.u32 %v2351, 7
        %v2353 = vsub.s32 %v2350, %v2352
        %v2354 = vrot.slane %v2347, %v2353
        %v2355 = vcombine.low %v2330, %v2338
        %v2357 = vunpack.c.l.s4 1934713408
        %v2358 = vunpack.c.0.s8 %v2357
        %v2359 = vlaneseq
        %v2360 = vshrl.u32 %v2359, 7
        %v2361 = vsub.s32 %v2358, %v2360
        %v2362 = vrot.slane %v2355, %v2361
        %v2363 = vcombine.low %v2346, %v2354
        %v2365 = vunpack.c.l.s4 1934713408
        %v2366 = vunpack.c.0.s8 %v2365
        %v2367 = vlaneseq
        %v2368 = vshrl.u32 %v2367, 7
        %v2369 = vsub.s32 %v2366, %v2368
        %v2370 = vrot.slane %v2363, %v2369
        %v2371 = vcombine.low %v2362, %v2370
        %v2372 = vcombine.high %v2362, %v2370
        %v2373 = vcombine.low %v2295, %v2302
        %v2375 = vunpack.c.l.s4 1983009808
        %v2376 = vunpack.c.0.s8 %v2375
        %v2377 = vlaneseq
        %v2378 = vshrl.u32 %v2377, 7
        %v2379 = vsub.s32 %v2376, %v2378
        %v2380 = vrot.slane %v2373, %v2379
        %v2381 = vcombine.low %v2319, %v2320
        %v2383 = vunpack.c.l.s4 1983009808
        %v2384 = vunpack.c.0.s8 %v2383
        %v2385 = vlaneseq
        %v2386 = vshrl.u32 %v2385, 7
        %v2387 = vsub.s32 %v2384, %v2386
        %v2388 = vrot.slane %v2381, %v2387
        %v2389 = vcombine.low %v2311, %v2318
        %v2391 = vunpack.c.l.s4 1983009808
        %v2392 = vunpack.c.0.s8 %v2391
        %v2393 = vlaneseq
        %v2394 = vshrl.u32 %v2393, 7
        %v2395 = vsub.s32 %v2392, %v2394
        %v2396 = vrot.slane %v2389, %v2395
        %v2397 = vcombine.low %v2321, %v2322
        %v2399 = vunpack.c.l.s4 1983009808
        %v2400 = vunpack.c.0.s8 %v2399
        %v2401 = vlaneseq
        %v2402 = vshrl.u32 %v2401, 7
        %v2403 = vsub.s32 %v2400, %v2402
        %v2404 = vrot.slane %v2397, %v2403
        %v2405 = vcombine.low %v2380, %v2388
        %v2407 = vunpack.c.l.s4 1934713408
        %v2408 = vunpack.c.0.s8 %v2407
        %v2409 = vlaneseq
        %v2410 = vshrl.u32 %v2409, 7
        %v2411 = vsub.s32 %v2408, %v2410
        %v2412 = vrot.slane %v2405, %v2411
        %v2413 = vcombine.low %v2396, %v2404
        %v2415 = vunpack.c.l.s4 1934713408
        %v2416 = vunpack.c.0.s8 %v2415
        %v2417 = vlaneseq
        %v2418 = vshrl.u32 %v2417, 7
        %v2419 = vsub.s32 %v2416, %v2418
        %v2420 = vrot.slane %v2413, %v2419
        %v2421 = vcombine.low %v2412, %v2420
        %v2422 = vcombine.high %v2412, %v2420
        %v2423 = vpack.c.bf16 %v2371, %v2371
        %v2424 = vpack.c.bf16 %v2372, %v2372
        %v2425 = vpack.c.bf16 %v2421, %v2421
        %v2426 = vpack.c.bf16 %v2422, %v2422
        %v2427 = vld [vmem:[%s1] sm:$0x1]
        %v2428 = vld [vmem:[%s1 + $0x1] sm:$0x1]
        %v2429 = vld [vmem:[%s1 + $0x2] sm:$0x1]
        %v2430 = vld [vmem:[%s1 + $0x3] sm:$0x1]
        %v2435 = vlaneseq
        %v2436 = vshrl.u32 %v2435, 7
        %v2437 = vsub.s32 0, %v2436
        %v2438 = vrot.slane %v2427, %v2437
        %v2439 = vlaneseq
        %v2440 = vshrl.u32 %v2439, 7
        %v2441 = vsub.s32 0, %v2440
        %v2442 = vrot.slane %v2428, %v2441
        %v2443 = vlaneseq
        %v2444 = vshrl.u32 %v2443, 7
        %v2445 = vsub.s32 0, %v2444
        %v2446 = vrot.slane %v2429, %v2445
        %v2447 = vlaneseq
        %v2448 = vshrl.u32 %v2447, 7
        %v2449 = vsub.s32 0, %v2448
        %v2450 = vrot.slane %v2430, %v2449
        %2455 = vmatprep.subr.bf16.mxu0 0
        %2456 = vmatpush1.bf16.xpose.msra.mxu0 %v2187
        %2457 = vmatprep.subr.bf16.mxu0 0
        %2458 = vmatpush1.bf16.xpose.msra.mxu0 0
        %2459 = vmatprep.subr.bf16.mxu0 0
        %2460 = vmatpush1.bf16.xpose.msra.mxu0 0
        %2461 = vmatprep.subr.bf16.mxu0 0
        %2462 = vmatpush1.bf16.xpose.msra.mxu0 0
        %2463 = vmatprep.subr.bf16.mxu0 0
        %2464 = vmatpush1.bf16.xpose.msra.mxu0 0
        %2465 = vmatprep.subr.bf16.mxu0 0
        %2466 = vmatpush1.bf16.xpose.msra.mxu0 0
        %2467 = vmatprep.subr.bf16.mxu0 0
        %2468 = vmatpush1.bf16.xpose.msra.mxu0 0
        %2469 = vmatprep.subr.bf16.mxu0 0
        %2470 = vmatpush1.bf16.xpose.msra.mxu0 0
        %2471 = vmatprep.subr.bf16.mxu0 0
        %2472 = vmatpush1.bf16.xpose.msra.mxu0 0
        %2473 = vmatprep.subr.bf16.mxu0 0
        %2474 = vmatpush1.bf16.xpose.msra.mxu0 0
        %2475 = vmatprep.subr.bf16.mxu0 0
        %2476 = vmatpush1.bf16.xpose.msra.mxu0 0
        %2477 = vmatprep.subr.bf16.mxu0 0
        %2478 = vmatpush1.bf16.xpose.msra.mxu0 0
        %2479 = vmatprep.subr.bf16.mxu0 0
        %2480 = vmatpush1.bf16.xpose.msra.mxu0 0
        %2481 = vmatprep.subr.bf16.mxu0 0
        %2482 = vmatpush1.bf16.xpose.msra.mxu0 0
        %2483 = vmatprep.subr.bf16.mxu0 0
        %2484 = vmatpush1.bf16.xpose.msra.mxu0 0
        %2485 = vmatprep.subr.bf16.mxu0 0
        %2486 = vmatpush1.bf16.xpose.msra.mxu0 0
        %2487 = vmatprep.mubr.bf16.mxu0 0
        %2488 = vmatmul.mubr.bf16.gmra.mrb[0].mxu0 %v1951
        %v2489 = vpop.f32.mrb[0].mxu0
        %v2490 = vadd.f32 %v2438, %v2489
        %v2491 = vpop.f32.mrb[0].mxu0
        %v2492 = vpop.f32.mrb[0].mxu0
        %v2493 = vpop.f32.mrb[0].mxu0
        %2494 = vdwg.mxu0
        %2495 = vmatprep.subr.bf16.mxu0 0
        %2496 = vmatpush1.bf16.xpose.msra.mxu0 %v2188
        %2497 = vmatprep.subr.bf16.mxu0 0
        %2498 = vmatpush1.bf16.xpose.msra.mxu0 0
        %2499 = vmatprep.subr.bf16.mxu0 0
        %2500 = vmatpush1.bf16.xpose.msra.mxu0 0
        %2501 = vmatprep.subr.bf16.mxu0 0
        %2502 = vmatpush1.bf16.xpose.msra.mxu0 0
        %2503 = vmatprep.subr.bf16.mxu0 0
        %2504 = vmatpush1.bf16.xpose.msra.mxu0 0
        %2505 = vmatprep.subr.bf16.mxu0 0
        %2506 = vmatpush1.bf16.xpose.msra.mxu0 0
        %2507 = vmatprep.subr.bf16.mxu0 0
        %2508 = vmatpush1.bf16.xpose.msra.mxu0 0
        %2509 = vmatprep.subr.bf16.mxu0 0
        %2510 = vmatpush1.bf16.xpose.msra.mxu0 0
        %2511 = vmatprep.subr.bf16.mxu0 0
        %2512 = vmatpush1.bf16.xpose.msra.mxu0 0
        %2513 = vmatprep.subr.bf16.mxu0 0
        %2514 = vmatpush1.bf16.xpose.msra.mxu0 0
        %2515 = vmatprep.subr.bf16.mxu0 0
        %2516 = vmatpush1.bf16.xpose.msra.mxu0 0
        %2517 = vmatprep.subr.bf16.mxu0 0
        %2518 = vmatpush1.bf16.xpose.msra.mxu0 0
        %2519 = vmatprep.subr.bf16.mxu0 0
        %2520 = vmatpush1.bf16.xpose.msra.mxu0 0
        %2521 = vmatprep.subr.bf16.mxu0 0
        %2522 = vmatpush1.bf16.xpose.msra.mxu0 0
        %2523 = vmatprep.subr.bf16.mxu0 0
        %2524 = vmatpush1.bf16.xpose.msra.mxu0 0
        %2525 = vmatprep.subr.bf16.mxu0 0
        %2526 = vmatpush1.bf16.xpose.msra.mxu0 0
        %2527 = vmatprep.mubr.bf16.mxu0 0
        %2528 = vmatmul.mubr.bf16.gmra.mrb[0].mxu0 %v1952
        %v2529 = vpop.f32.mrb[0].mxu0
        %v2530 = vadd.f32 %v2442, %v2529
        %v2531 = vpop.f32.mrb[0].mxu0
        %v2532 = vpop.f32.mrb[0].mxu0
        %v2533 = vpop.f32.mrb[0].mxu0
        %2534 = vdwg.mxu0
        %2535 = vmatprep.subr.bf16.mxu0 0
        %2536 = vmatpush1.bf16.xpose.msra.mxu0 %v2189
        %2537 = vmatprep.subr.bf16.mxu0 0
        %2538 = vmatpush1.bf16.xpose.msra.mxu0 0
        %2539 = vmatprep.subr.bf16.mxu0 0
        %2540 = vmatpush1.bf16.xpose.msra.mxu0 0
        %2541 = vmatprep.subr.bf16.mxu0 0
        %2542 = vmatpush1.bf16.xpose.msra.mxu0 0
        %2543 = vmatprep.subr.bf16.mxu0 0
        %2544 = vmatpush1.bf16.xpose.msra.mxu0 0
        %2545 = vmatprep.subr.bf16.mxu0 0
        %2546 = vmatpush1.bf16.xpose.msra.mxu0 0
        %2547 = vmatprep.subr.bf16.mxu0 0
        %2548 = vmatpush1.bf16.xpose.msra.mxu0 0
        %2549 = vmatprep.subr.bf16.mxu0 0
        %2550 = vmatpush1.bf16.xpose.msra.mxu0 0
        %2551 = vmatprep.subr.bf16.mxu0 0
        %2552 = vmatpush1.bf16.xpose.msra.mxu0 0
        %2553 = vmatprep.subr.bf16.mxu0 0
        %2554 = vmatpush1.bf16.xpose.msra.mxu0 0
        %2555 = vmatprep.subr.bf16.mxu0 0
        %2556 = vmatpush1.bf16.xpose.msra.mxu0 0
        %2557 = vmatprep.subr.bf16.mxu0 0
        %2558 = vmatpush1.bf16.xpose.msra.mxu0 0
        %2559 = vmatprep.subr.bf16.mxu0 0
        %2560 = vmatpush1.bf16.xpose.msra.mxu0 0
        %2561 = vmatprep.subr.bf16.mxu0 0
        %2562 = vmatpush1.bf16.xpose.msra.mxu0 0
        %2563 = vmatprep.subr.bf16.mxu0 0
        %2564 = vmatpush1.bf16.xpose.msra.mxu0 0
        %2565 = vmatprep.subr.bf16.mxu0 0
        %2566 = vmatpush1.bf16.xpose.msra.mxu0 0
        %2567 = vmatprep.mubr.bf16.mxu0 0
        %2568 = vmatmul.mubr.bf16.gmra.mrb[0].mxu0 %v1953
        %v2569 = vpop.f32.mrb[0].mxu0
        %v2570 = vadd.f32 %v2446, %v2569
        %v2571 = vpop.f32.mrb[0].mxu0
        %v2572 = vpop.f32.mrb[0].mxu0
        %v2573 = vpop.f32.mrb[0].mxu0
        %2574 = vdwg.mxu0
        %2575 = vmatprep.subr.bf16.mxu0 0
        %2576 = vmatpush1.bf16.xpose.msra.mxu0 %v2190
        %2577 = vmatprep.subr.bf16.mxu0 0
        %2578 = vmatpush1.bf16.xpose.msra.mxu0 0
        %2579 = vmatprep.subr.bf16.mxu0 0
        %2580 = vmatpush1.bf16.xpose.msra.mxu0 0
        %2581 = vmatprep.subr.bf16.mxu0 0
        %2582 = vmatpush1.bf16.xpose.msra.mxu0 0
        %2583 = vmatprep.subr.bf16.mxu0 0
        %2584 = vmatpush1.bf16.xpose.msra.mxu0 0
        %2585 = vmatprep.subr.bf16.mxu0 0
        %2586 = vmatpush1.bf16.xpose.msra.mxu0 0
        %2587 = vmatprep.subr.bf16.mxu0 0
        %2588 = vmatpush1.bf16.xpose.msra.mxu0 0
        %2589 = vmatprep.subr.bf16.mxu0 0
        %2590 = vmatpush1.bf16.xpose.msra.mxu0 0
        %2591 = vmatprep.subr.bf16.mxu0 0
        %2592 = vmatpush1.bf16.xpose.msra.mxu0 0
        %2593 = vmatprep.subr.bf16.mxu0 0
        %2594 = vmatpush1.bf16.xpose.msra.mxu0 0
        %2595 = vmatprep.subr.bf16.mxu0 0
        %2596 = vmatpush1.bf16.xpose.msra.mxu0 0
        %2597 = vmatprep.subr.bf16.mxu0 0
        %2598 = vmatpush1.bf16.xpose.msra.mxu0 0
        %2599 = vmatprep.subr.bf16.mxu0 0
        %2600 = vmatpush1.bf16.xpose.msra.mxu0 0
        %2601 = vmatprep.subr.bf16.mxu0 0
        %2602 = vmatpush1.bf16.xpose.msra.mxu0 0
        %2603 = vmatprep.subr.bf16.mxu0 0
        %2604 = vmatpush1.bf16.xpose.msra.mxu0 0
        %2605 = vmatprep.subr.bf16.mxu0 0
        %2606 = vmatpush1.bf16.xpose.msra.mxu0 0
        %2607 = vmatprep.mubr.bf16.mxu0 0
        %2608 = vmatmul.mubr.bf16.gmra.mrb[0].mxu0 %v1954
        %v2609 = vpop.f32.mrb[0].mxu0
        %v2610 = vadd.f32 %v2450, %v2609
        %v2611 = vpop.f32.mrb[0].mxu0
        %v2612 = vpop.f32.mrb[0].mxu0
        %v2613 = vpop.f32.mrb[0].mxu0
        %2614 = vdwg.mxu0
        %vm2615 = vcmask 64512
        %v2616 = vsel %vm2615, %v2490, -inf
        %2617 = vmax.xlane.f32.xlu0 %v2616
        %v2618 = vpop.xlane.xlu0 %2617
        %v2619 = vsel %vm2615, %v2530, -inf
        %2620 = vmax.xlane.f32.xlu0 %v2619
        %v2621 = vpop.xlane.xlu0 %2620
        %v2622 = vsel %vm2615, %v2570, -inf
        %2623 = vmax.xlane.f32.xlu0 %v2622
        %v2624 = vpop.xlane.xlu0 %2623
        %v2625 = vsel %vm2615, %v2610, -inf
        %2626 = vmax.xlane.f32.xlu0 %v2625
        %v2627 = vpop.xlane.xlu0 %2626
        %v2628 = vsub.f32 %v2490, %v2618
        %v2629 = vsub.f32 %v2530, %v2621
        %v2630 = vsub.f32 %v2570, %v2624
        %v2631 = vsub.f32 %v2610, %v2627
        %v2632 = vmul.f32 %v2628, 1.442695
        %v2633 = vpow.pop %v2632
        %v2634 = vmul.f32 %v2629, 1.442695
        %v2635 = vpow.pop %v2634
        %v2636 = vmul.f32 %v2630, 1.442695
        %v2637 = vpow.pop %v2636
        %v2638 = vmul.f32 %v2631, 1.442695
        %v2639 = vpow.pop %v2638
        %v2640 = vsel %vm2615, %v2633, 0.0
        %2641 = vadd.xlane.f32.xlu0 %v2640
        %v2642 = vpop.xlane.xlu0 %2641
        %v2643 = vsel %vm2615, %v2635, 0.0
        %2644 = vadd.xlane.f32.xlu0 %v2643
        %v2645 = vpop.xlane.xlu0 %2644
        %v2646 = vsel %vm2615, %v2637, 0.0
        %2647 = vadd.xlane.f32.xlu0 %v2646
        %v2648 = vpop.xlane.xlu0 %2647
        %v2649 = vsel %vm2615, %v2639, 0.0
        %2650 = vadd.xlane.f32.xlu0 %v2649
        %v2651 = vpop.xlane.xlu0 %2650
        %v2652 = vrcp.pop %v2642
        %v2653 = vrcp.pop %v2645
        %v2654 = vrcp.pop %v2648
        %v2655 = vrcp.pop %v2651
        %v2656 = vmul.f32 %v2633, %v2652
        %v2657 = vmul.f32 %v2635, %v2653
        %v2658 = vmul.f32 %v2637, %v2654
        %v2659 = vmul.f32 %v2639, %v2655
        %v2660 = vpack.c.bf16 %v2656, %v2656
        %v2661 = vpack.c.bf16 %v2657, %v2657
        %v2662 = vpack.c.bf16 %v2658, %v2658
        %v2663 = vpack.c.bf16 %v2659, %v2659
        %v2665 = vsel %vm2615, %v2660, 0
        %vm2667 = vcmask 1043456
        %v2669 = vsel %vm2667, %v2423, 0
        %2671 = vmatprep.subr.bf16.mxu0 0
        %2672 = vmatpush1.bf16.msra.mxu0 %v2669
        %2673 = vmatprep.subr.bf16.mxu0 0
        %2674 = vmatpush1.bf16.msra.mxu0 0
        %2675 = vmatprep.subr.bf16.mxu0 0
        %2676 = vmatpush1.bf16.msra.mxu0 0
        %2677 = vmatprep.subr.bf16.mxu0 0
        %2678 = vmatpush1.bf16.msra.mxu0 0
        %2679 = vmatprep.subr.bf16.mxu0 0
        %2680 = vmatpush1.bf16.msra.mxu0 0
        %2681 = vmatprep.subr.bf16.mxu0 0
        %2682 = vmatpush1.bf16.msra.mxu0 0
        %2683 = vmatprep.subr.bf16.mxu0 0
        %2684 = vmatpush1.bf16.msra.mxu0 0
        %2685 = vmatprep.subr.bf16.mxu0 0
        %2686 = vmatpush1.bf16.msra.mxu0 0
        %2687 = vmatprep.subr.bf16.mxu0 0
        %2688 = vmatpush1.bf16.msra.mxu0 0
        %2689 = vmatprep.subr.bf16.mxu0 0
        %2690 = vmatpush1.bf16.msra.mxu0 0
        %2691 = vmatprep.subr.bf16.mxu0 0
        %2692 = vmatpush1.bf16.msra.mxu0 0
        %2693 = vmatprep.subr.bf16.mxu0 0
        %2694 = vmatpush1.bf16.msra.mxu0 0
        %2695 = vmatprep.subr.bf16.mxu0 0
        %2696 = vmatpush1.bf16.msra.mxu0 0
        %2697 = vmatprep.subr.bf16.mxu0 0
        %2698 = vmatpush1.bf16.msra.mxu0 0
        %2699 = vmatprep.subr.bf16.mxu0 0
        %2700 = vmatpush1.bf16.msra.mxu0 0
        %2701 = vmatprep.subr.bf16.mxu0 0
        %2702 = vmatpush1.bf16.msra.mxu0 0
        %2703 = vmatprep.mubr.bf16.mxu0 0
        %2704 = vmatmul.mubr.bf16.gmra.mrb[0].mxu0 %v2665
        %v2705 = vpop.f32.mrb[0].mxu0
        %v2706 = vadd.f32 0.0, %v2705
        %v2707 = vpop.f32.mrb[0].mxu0
        %v2708 = vpop.f32.mrb[0].mxu0
        %v2709 = vpop.f32.mrb[0].mxu0
        %2710 = vdwg.mxu0
        %v2712 = vsel %vm2615, %v2661, 0
        %v2715 = vsel %vm2667, %v2424, 0
        %2717 = vmatprep.subr.bf16.mxu0 0
        %2718 = vmatpush1.bf16.msra.mxu0 %v2715
        %2719 = vmatprep.subr.bf16.mxu0 0
        %2720 = vmatpush1.bf16.msra.mxu0 0
        %2721 = vmatprep.subr.bf16.mxu0 0
        %2722 = vmatpush1.bf16.msra.mxu0 0
        %2723 = vmatprep.subr.bf16.mxu0 0
        %2724 = vmatpush1.bf16.msra.mxu0 0
        %2725 = vmatprep.subr.bf16.mxu0 0
        %2726 = vmatpush1.bf16.msra.mxu0 0
        %2727 = vmatprep.subr.bf16.mxu0 0
        %2728 = vmatpush1.bf16.msra.mxu0 0
        %2729 = vmatprep.subr.bf16.mxu0 0
        %2730 = vmatpush1.bf16.msra.mxu0 0
        %2731 = vmatprep.subr.bf16.mxu0 0
        %2732 = vmatpush1.bf16.msra.mxu0 0
        %2733 = vmatprep.subr.bf16.mxu0 0
        %2734 = vmatpush1.bf16.msra.mxu0 0
        %2735 = vmatprep.subr.bf16.mxu0 0
        %2736 = vmatpush1.bf16.msra.mxu0 0
        %2737 = vmatprep.subr.bf16.mxu0 0
        %2738 = vmatpush1.bf16.msra.mxu0 0
        %2739 = vmatprep.subr.bf16.mxu0 0
        %2740 = vmatpush1.bf16.msra.mxu0 0
        %2741 = vmatprep.subr.bf16.mxu0 0
        %2742 = vmatpush1.bf16.msra.mxu0 0
        %2743 = vmatprep.subr.bf16.mxu0 0
        %2744 = vmatpush1.bf16.msra.mxu0 0
        %2745 = vmatprep.subr.bf16.mxu0 0
        %2746 = vmatpush1.bf16.msra.mxu0 0
        %2747 = vmatprep.subr.bf16.mxu0 0
        %2748 = vmatpush1.bf16.msra.mxu0 0
        %2749 = vmatprep.mubr.bf16.mxu0 0
        %2750 = vmatmul.mubr.bf16.gmra.mrb[0].mxu0 %v2712
        %v2751 = vpop.f32.mrb[0].mxu0
        %v2752 = vadd.f32 0.0, %v2751
        %v2753 = vpop.f32.mrb[0].mxu0
        %v2754 = vpop.f32.mrb[0].mxu0
        %v2755 = vpop.f32.mrb[0].mxu0
        %2756 = vdwg.mxu0
        %v2758 = vsel %vm2615, %v2662, 0
        %v2761 = vsel %vm2667, %v2425, 0
        %2763 = vmatprep.subr.bf16.mxu0 0
        %2764 = vmatpush1.bf16.msra.mxu0 %v2761
        %2765 = vmatprep.subr.bf16.mxu0 0
        %2766 = vmatpush1.bf16.msra.mxu0 0
        %2767 = vmatprep.subr.bf16.mxu0 0
        %2768 = vmatpush1.bf16.msra.mxu0 0
        %2769 = vmatprep.subr.bf16.mxu0 0
        %2770 = vmatpush1.bf16.msra.mxu0 0
        %2771 = vmatprep.subr.bf16.mxu0 0
        %2772 = vmatpush1.bf16.msra.mxu0 0
        %2773 = vmatprep.subr.bf16.mxu0 0
        %2774 = vmatpush1.bf16.msra.mxu0 0
        %2775 = vmatprep.subr.bf16.mxu0 0
        %2776 = vmatpush1.bf16.msra.mxu0 0
        %2777 = vmatprep.subr.bf16.mxu0 0
        %2778 = vmatpush1.bf16.msra.mxu0 0
        %2779 = vmatprep.subr.bf16.mxu0 0
        %2780 = vmatpush1.bf16.msra.mxu0 0
        %2781 = vmatprep.subr.bf16.mxu0 0
        %2782 = vmatpush1.bf16.msra.mxu0 0
        %2783 = vmatprep.subr.bf16.mxu0 0
        %2784 = vmatpush1.bf16.msra.mxu0 0
        %2785 = vmatprep.subr.bf16.mxu0 0
        %2786 = vmatpush1.bf16.msra.mxu0 0
        %2787 = vmatprep.subr.bf16.mxu0 0
        %2788 = vmatpush1.bf16.msra.mxu0 0
        %2789 = vmatprep.subr.bf16.mxu0 0
        %2790 = vmatpush1.bf16.msra.mxu0 0
        %2791 = vmatprep.subr.bf16.mxu0 0
        %2792 = vmatpush1.bf16.msra.mxu0 0
        %2793 = vmatprep.subr.bf16.mxu0 0
        %2794 = vmatpush1.bf16.msra.mxu0 0
        %2795 = vmatprep.mubr.bf16.mxu0 0
        %2796 = vmatmul.mubr.bf16.gmra.mrb[0].mxu0 %v2758
        %v2797 = vpop.f32.mrb[0].mxu0
        %v2798 = vadd.f32 0.0, %v2797
        %v2799 = vpop.f32.mrb[0].mxu0
        %v2800 = vpop.f32.mrb[0].mxu0
        %v2801 = vpop.f32.mrb[0].mxu0
        %2802 = vdwg.mxu0
        %v2804 = vsel %vm2615, %v2663, 0
        %v2807 = vsel %vm2667, %v2426, 0
        %2809 = vmatprep.subr.bf16.mxu0 0
        %2810 = vmatpush1.bf16.msra.mxu0 %v2807
        %2811 = vmatprep.subr.bf16.mxu0 0
        %2812 = vmatpush1.bf16.msra.mxu0 0
        %2813 = vmatprep.subr.bf16.mxu0 0
        %2814 = vmatpush1.bf16.msra.mxu0 0
        %2815 = vmatprep.subr.bf16.mxu0 0
        %2816 = vmatpush1.bf16.msra.mxu0 0
        %2817 = vmatprep.subr.bf16.mxu0 0
        %2818 = vmatpush1.bf16.msra.mxu0 0
        %2819 = vmatprep.subr.bf16.mxu0 0
        %2820 = vmatpush1.bf16.msra.mxu0 0
        %2821 = vmatprep.subr.bf16.mxu0 0
        %2822 = vmatpush1.bf16.msra.mxu0 0
        %2823 = vmatprep.subr.bf16.mxu0 0
        %2824 = vmatpush1.bf16.msra.mxu0 0
        %2825 = vmatprep.subr.bf16.mxu0 0
        %2826 = vmatpush1.bf16.msra.mxu0 0
        %2827 = vmatprep.subr.bf16.mxu0 0
        %2828 = vmatpush1.bf16.msra.mxu0 0
        %2829 = vmatprep.subr.bf16.mxu0 0
        %2830 = vmatpush1.bf16.msra.mxu0 0
        %2831 = vmatprep.subr.bf16.mxu0 0
        %2832 = vmatpush1.bf16.msra.mxu0 0
        %2833 = vmatprep.subr.bf16.mxu0 0
        %2834 = vmatpush1.bf16.msra.mxu0 0
        %2835 = vmatprep.subr.bf16.mxu0 0
        %2836 = vmatpush1.bf16.msra.mxu0 0
        %2837 = vmatprep.subr.bf16.mxu0 0
        %2838 = vmatpush1.bf16.msra.mxu0 0
        %2839 = vmatprep.subr.bf16.mxu0 0
        %2840 = vmatpush1.bf16.msra.mxu0 0
        %2841 = vmatprep.mubr.bf16.mxu0 0
        %2842 = vmatmul.mubr.bf16.gmra.mrb[0].mxu0 %v2804
        %v2843 = vpop.f32.mrb[0].mxu0
        %v2844 = vadd.f32 0.0, %v2843
        %v2845 = vpop.f32.mrb[0].mxu0
        %v2846 = vpop.f32.mrb[0].mxu0
        %v2847 = vpop.f32.mrb[0].mxu0
        %2848 = vdwg.mxu0
        %v2849 = vcombine.high %v2706, 0.0
        %v2851 = vunpack.c.l.s4 1983009808
        %v2852 = vunpack.c.0.s8 %v2851
        %v2853 = vlaneseq
        %v2854 = vshrl.u32 %v2853, 7
        %v2855 = vsub.s32 %v2852, %v2854
        %v2856 = vrot.slane %v2706, %v2855
        %v2858 = vunpack.c.l.s4 1983009808
        %v2859 = vunpack.c.0.s8 %v2858
        %v2860 = vlaneseq
        %v2861 = vshrl.u32 %v2860, 7
        %v2862 = vsub.s32 %v2859, %v2861
        %v2863 = vrot.slane %v2849, %v2862
        %v2864 = vcombine.high %v2752, 0.0
        %v2866 = vunpack.c.l.s4 1983009808
        %v2867 = vunpack.c.0.s8 %v2866
        %v2868 = vlaneseq
        %v2869 = vshrl.u32 %v2868, 7
        %v2870 = vsub.s32 %v2867, %v2869
        %v2871 = vrot.slane %v2752, %v2870
        %v2873 = vunpack.c.l.s4 1983009808
        %v2874 = vunpack.c.0.s8 %v2873
        %v2875 = vlaneseq
        %v2876 = vshrl.u32 %v2875, 7
        %v2877 = vsub.s32 %v2874, %v2876
        %v2878 = vrot.slane %v2864, %v2877
        %v2879 = vcombine.low %v2856, %v2871
        %v2880 = vcombine.high %v2856, %v2871
        %v2882 = vunpack.c.l.s4 1934713408
        %v2883 = vunpack.c.0.s8 %v2882
        %v2884 = vlaneseq
        %v2885 = vshrl.u32 %v2884, 7
        %v2886 = vsub.s32 %v2883, %v2885
        %v2887 = vrot.slane %v2879, %v2886
        %v2889 = vunpack.c.l.s4 1934713408
        %v2890 = vunpack.c.0.s8 %v2889
        %v2891 = vlaneseq
        %v2892 = vshrl.u32 %v2891, 7
        %v2893 = vsub.s32 %v2890, %v2892
        %v2894 = vrot.slane %v2880, %v2893
        %v2895 = vcombine.low %v2863, %v2878
        %v2896 = vcombine.high %v2863, %v2878
        %v2898 = vunpack.c.l.s4 1934713408
        %v2899 = vunpack.c.0.s8 %v2898
        %v2900 = vlaneseq
        %v2901 = vshrl.u32 %v2900, 7
        %v2902 = vsub.s32 %v2899, %v2901
        %v2903 = vrot.slane %v2895, %v2902
        %v2905 = vunpack.c.l.s4 1934713408
        %v2906 = vunpack.c.0.s8 %v2905
        %v2907 = vlaneseq
        %v2908 = vshrl.u32 %v2907, 7
        %v2909 = vsub.s32 %v2906, %v2908
        %v2910 = vrot.slane %v2896, %v2909
        %v2911 = vcombine.high %v2887, 0.0
        %v2912 = vcombine.high %v2894, 0.0
        %v2913 = vcombine.high %v2903, 0.0
        %v2914 = vcombine.high %v2910, 0.0
        %v2915 = vcombine.high %v2798, 0.0
        %v2917 = vunpack.c.l.s4 1983009808
        %v2918 = vunpack.c.0.s8 %v2917
        %v2919 = vlaneseq
        %v2920 = vshrl.u32 %v2919, 7
        %v2921 = vsub.s32 %v2918, %v2920
        %v2922 = vrot.slane %v2798, %v2921
        %v2924 = vunpack.c.l.s4 1983009808
        %v2925 = vunpack.c.0.s8 %v2924
        %v2926 = vlaneseq
        %v2927 = vshrl.u32 %v2926, 7
        %v2928 = vsub.s32 %v2925, %v2927
        %v2929 = vrot.slane %v2915, %v2928
        %v2930 = vcombine.high %v2844, 0.0
        %v2932 = vunpack.c.l.s4 1983009808
        %v2933 = vunpack.c.0.s8 %v2932
        %v2934 = vlaneseq
        %v2935 = vshrl.u32 %v2934, 7
        %v2936 = vsub.s32 %v2933, %v2935
        %v2937 = vrot.slane %v2844, %v2936
        %v2939 = vunpack.c.l.s4 1983009808
        %v2940 = vunpack.c.0.s8 %v2939
        %v2941 = vlaneseq
        %v2942 = vshrl.u32 %v2941, 7
        %v2943 = vsub.s32 %v2940, %v2942
        %v2944 = vrot.slane %v2930, %v2943
        %v2945 = vcombine.low %v2922, %v2937
        %v2946 = vcombine.high %v2922, %v2937
        %v2948 = vunpack.c.l.s4 1934713408
        %v2949 = vunpack.c.0.s8 %v2948
        %v2950 = vlaneseq
        %v2951 = vshrl.u32 %v2950, 7
        %v2952 = vsub.s32 %v2949, %v2951
        %v2953 = vrot.slane %v2945, %v2952
        %v2955 = vunpack.c.l.s4 1934713408
        %v2956 = vunpack.c.0.s8 %v2955
        %v2957 = vlaneseq
        %v2958 = vshrl.u32 %v2957, 7
        %v2959 = vsub.s32 %v2956, %v2958
        %v2960 = vrot.slane %v2946, %v2959
        %v2961 = vcombine.low %v2929, %v2944
        %v2962 = vcombine.high %v2929, %v2944
        %v2964 = vunpack.c.l.s4 1934713408
        %v2965 = vunpack.c.0.s8 %v2964
        %v2966 = vlaneseq
        %v2967 = vshrl.u32 %v2966, 7
        %v2968 = vsub.s32 %v2965, %v2967
        %v2969 = vrot.slane %v2961, %v2968
        %v2971 = vunpack.c.l.s4 1934713408
        %v2972 = vunpack.c.0.s8 %v2971
        %v2973 = vlaneseq
        %v2974 = vshrl.u32 %v2973, 7
        %v2975 = vsub.s32 %v2972, %v2974
        %v2976 = vrot.slane %v2962, %v2975
        %v2977 = vcombine.high %v2953, 0.0
        %v2978 = vcombine.high %v2960, 0.0
        %v2979 = vcombine.high %v2969, 0.0
        %v2980 = vcombine.high %v2976, 0.0
        %v2981 = vcombine.low %v2887, %v2894
        %v2983 = vunpack.c.l.s4 1983009808
        %v2984 = vunpack.c.0.s8 %v2983
        %v2985 = vlaneseq
        %v2986 = vshrl.u32 %v2985, 7
        %v2987 = vsub.s32 %v2984, %v2986
        %v2988 = vrot.slane %v2981, %v2987
        %v2989 = vcombine.low %v2911, %v2912
        %v2991 = vunpack.c.l.s4 1983009808
        %v2992 = vunpack.c.0.s8 %v2991
        %v2993 = vlaneseq
        %v2994 = vshrl.u32 %v2993, 7
        %v2995 = vsub.s32 %v2992, %v2994
        %v2996 = vrot.slane %v2989, %v2995
        %v2997 = vcombine.low %v2903, %v2910
        %v2999 = vunpack.c.l.s4 1983009808
        %v3000 = vunpack.c.0.s8 %v2999
        %v3001 = vlaneseq
        %v3002 = vshrl.u32 %v3001, 7
        %v3003 = vsub.s32 %v3000, %v3002
        %v3004 = vrot.slane %v2997, %v3003
        %v3005 = vcombine.low %v2913, %v2914
        %v3007 = vunpack.c.l.s4 1983009808
        %v3008 = vunpack.c.0.s8 %v3007
        %v3009 = vlaneseq
        %v3010 = vshrl.u32 %v3009, 7
        %v3011 = vsub.s32 %v3008, %v3010
        %v3012 = vrot.slane %v3005, %v3011
        %v3013 = vcombine.low %v2988, %v2996
        %v3015 = vunpack.c.l.s4 1934713408
        %v3016 = vunpack.c.0.s8 %v3015
        %v3017 = vlaneseq
        %v3018 = vshrl.u32 %v3017, 7
        %v3019 = vsub.s32 %v3016, %v3018
        %v3020 = vrot.slane %v3013, %v3019
        %v3021 = vcombine.low %v3004, %v3012
        %v3023 = vunpack.c.l.s4 1934713408
        %v3024 = vunpack.c.0.s8 %v3023
        %v3025 = vlaneseq
        %v3026 = vshrl.u32 %v3025, 7
        %v3027 = vsub.s32 %v3024, %v3026
        %v3028 = vrot.slane %v3021, %v3027
        %v3029 = vcombine.low %v3020, %v3028
        %v3030 = vcombine.high %v3020, %v3028
        %v3031 = vcombine.low %v2953, %v2960
        %v3033 = vunpack.c.l.s4 1983009808
        %v3034 = vunpack.c.0.s8 %v3033
        %v3035 = vlaneseq
        %v3036 = vshrl.u32 %v3035, 7
        %v3037 = vsub.s32 %v3034, %v3036
        %v3038 = vrot.slane %v3031, %v3037
        %v3039 = vcombine.low %v2977, %v2978
        %v3041 = vunpack.c.l.s4 1983009808
        %v3042 = vunpack.c.0.s8 %v3041
        %v3043 = vlaneseq
        %v3044 = vshrl.u32 %v3043, 7
        %v3045 = vsub.s32 %v3042, %v3044
        %v3046 = vrot.slane %v3039, %v3045
        %v3047 = vcombine.low %v2969, %v2976
        %v3049 = vunpack.c.l.s4 1983009808
        %v3050 = vunpack.c.0.s8 %v3049
        %v3051 = vlaneseq
        %v3052 = vshrl.u32 %v3051, 7
        %v3053 = vsub.s32 %v3050, %v3052
        %v3054 = vrot.slane %v3047, %v3053
        %v3055 = vcombine.low %v2979, %v2980
        %v3057 = vunpack.c.l.s4 1983009808
        %v3058 = vunpack.c.0.s8 %v3057
        %v3059 = vlaneseq
        %v3060 = vshrl.u32 %v3059, 7
        %v3061 = vsub.s32 %v3058, %v3060
        %v3062 = vrot.slane %v3055, %v3061
        %v3063 = vcombine.low %v3038, %v3046
        %v3065 = vunpack.c.l.s4 1934713408
        %v3066 = vunpack.c.0.s8 %v3065
        %v3067 = vlaneseq
        %v3068 = vshrl.u32 %v3067, 7
        %v3069 = vsub.s32 %v3066, %v3068
        %v3070 = vrot.slane %v3063, %v3069
        %v3071 = vcombine.low %v3054, %v3062
        %v3073 = vunpack.c.l.s4 1934713408
        %v3074 = vunpack.c.0.s8 %v3073
        %v3075 = vlaneseq
        %v3076 = vshrl.u32 %v3075, 7
        %v3077 = vsub.s32 %v3074, %v3076
        %v3078 = vrot.slane %v3071, %v3077
        %v3079 = vcombine.low %v3070, %v3078
        %v3080 = vcombine.high %v3070, %v3078
        %v3081 = vpack.c.bf16 %v3079, %v3029
        %v3082 = vpack.c.bf16 %v3080, %v3030
        %v3083 = vld [vmem:[%s869] sm:$0xff]
        %v3084 = vld [vmem:[%s869 + $0x8] sm:$0xff]
        %v3085 = vld [vmem:[%s869 + $0x10] sm:$0xff]
        %v3086 = vld [vmem:[%s869 + $0x18] sm:$0xff]
        %v3087 = vld [vmem:[%s869 + $0x20] sm:$0xff]
        %v3088 = vld [vmem:[%s869 + $0x28] sm:$0xff]
        %v3089 = vld [vmem:[%s869 + $0x30] sm:$0xff]
        %v3090 = vld [vmem:[%s869 + $0x38] sm:$0xff]
        %v3091 = vld [vmem:[%s869 + $0x40] sm:$0xff]
        %v3092 = vld [vmem:[%s869 + $0x48] sm:$0xff]
        %v3093 = vld [vmem:[%s869 + $0x50] sm:$0xff]
        %v3094 = vld [vmem:[%s869 + $0x58] sm:$0xff]
        %v3095 = vld [vmem:[%s869 + $0x60] sm:$0xff]
        %v3096 = vld [vmem:[%s869 + $0x68] sm:$0xff]
        %v3097 = vld [vmem:[%s869 + $0x70] sm:$0xff]
        %v3098 = vld [vmem:[%s869 + $0x78] sm:$0xff]
        %v3099 = vld [vmem:[%s869 + $0x80] sm:$0xff]
        %v3100 = vld [vmem:[%s869 + $0x88] sm:$0xff]
        %v3101 = vld [vmem:[%s869 + $0x90] sm:$0xff]
        %v3102 = vld [vmem:[%s869 + $0x98] sm:$0xff]
        %v3103 = vld [vmem:[%s869 + $0xa0] sm:$0xff]
        %v3104 = vld [vmem:[%s869 + $0xa8] sm:$0xff]
        %v3105 = vld [vmem:[%s869 + $0xb0] sm:$0xff]
        %v3106 = vld [vmem:[%s869 + $0xb8] sm:$0xff]
        %v3107 = vld [vmem:[%s869 + $0xc0] sm:$0xff]
        %v3108 = vld [vmem:[%s869 + $0xc8] sm:$0xff]
        %v3109 = vld [vmem:[%s869 + $0xd0] sm:$0xff]
        %v3110 = vld [vmem:[%s869 + $0xd8] sm:$0xff]
        %v3111 = vld [vmem:[%s869 + $0xe0] sm:$0xff]
        %v3112 = vld [vmem:[%s869 + $0xe8] sm:$0xff]
        %v3113 = vld [vmem:[%s869 + $0xf0] sm:$0xff]
        %v3114 = vld [vmem:[%s869 + $0xf8] sm:$0xff]
        %v3115 = vld [vmem:[%s873] sm:$0x3]
        %v3117 = vlaneseq
        %v3118 = vshrl.u32 %v3117, 7
        %v3119 = vsub.s32 0, %v3118
        %v3120 = vrot.slane %v3115, %v3119
        %v3121 = vlaneseq
        %v3122 = vshrl.u32 %v3121, 7
        %v3123 = vsub.s32 1, %v3122
        %v3124 = vrot.slane %v3115, %v3123
        %v3159 = vunpack.c.l.b16 %v3083
        %v3160 = vunpack.c.h.b16 %v3083
        %v3161 = vunpack.c.l.b16 %v3084
        %v3162 = vunpack.c.h.b16 %v3084
        %v3163 = vunpack.c.l.b16 %v3085
        %v3164 = vunpack.c.h.b16 %v3085
        %v3165 = vunpack.c.l.b16 %v3086
        %v3166 = vunpack.c.h.b16 %v3086
        %v3167 = vunpack.c.l.b16 %v3087
        %v3168 = vunpack.c.h.b16 %v3087
        %v3169 = vunpack.c.l.b16 %v3088
        %v3170 = vunpack.c.h.b16 %v3088
        %v3171 = vunpack.c.l.b16 %v3089
        %v3172 = vunpack.c.h.b16 %v3089
        %v3173 = vunpack.c.l.b16 %v3090
        %v3174 = vunpack.c.h.b16 %v3090
        %v3175 = vunpack.c.l.b16 %v3091
        %v3176 = vunpack.c.h.b16 %v3091
        %v3177 = vunpack.c.l.b16 %v3092
        %v3178 = vunpack.c.h.b16 %v3092
        %v3179 = vunpack.c.l.b16 %v3093
        %v3180 = vunpack.c.h.b16 %v3093
        %v3181 = vunpack.c.l.b16 %v3094
        %v3182 = vunpack.c.h.b16 %v3094
        %v3183 = vunpack.c.l.b16 %v3095
        %v3184 = vunpack.c.h.b16 %v3095
        %v3185 = vunpack.c.l.b16 %v3096
        %v3186 = vunpack.c.h.b16 %v3096
        %v3187 = vunpack.c.l.b16 %v3097
        %v3188 = vunpack.c.h.b16 %v3097
        %v3189 = vunpack.c.l.b16 %v3098
        %v3190 = vunpack.c.h.b16 %v3098
        %v3191 = vunpack.c.l.b16 %v3099
        %v3192 = vunpack.c.h.b16 %v3099
        %v3193 = vunpack.c.l.b16 %v3100
        %v3194 = vunpack.c.h.b16 %v3100
        %v3195 = vunpack.c.l.b16 %v3101
        %v3196 = vunpack.c.h.b16 %v3101
        %v3197 = vunpack.c.l.b16 %v3102
        %v3198 = vunpack.c.h.b16 %v3102
        %v3199 = vunpack.c.l.b16 %v3103
        %v3200 = vunpack.c.h.b16 %v3103
        %v3201 = vunpack.c.l.b16 %v3104
        %v3202 = vunpack.c.h.b16 %v3104
        %v3203 = vunpack.c.l.b16 %v3105
        %v3204 = vunpack.c.h.b16 %v3105
        %v3205 = vunpack.c.l.b16 %v3106
        %v3206 = vunpack.c.h.b16 %v3106
        %v3207 = vunpack.c.l.b16 %v3107
        %v3208 = vunpack.c.h.b16 %v3107
        %v3209 = vunpack.c.l.b16 %v3108
        %v3210 = vunpack.c.h.b16 %v3108
        %v3211 = vunpack.c.l.b16 %v3109
        %v3212 = vunpack.c.h.b16 %v3109
        %v3213 = vunpack.c.l.b16 %v3110
        %v3214 = vunpack.c.h.b16 %v3110
        %v3215 = vunpack.c.l.b16 %v3111
        %v3216 = vunpack.c.h.b16 %v3111
        %v3217 = vunpack.c.l.b16 %v3112
        %v3218 = vunpack.c.h.b16 %v3112
        %v3219 = vunpack.c.l.b16 %v3113
        %v3220 = vunpack.c.h.b16 %v3113
        %v3221 = vunpack.c.l.b16 %v3114
        %v3222 = vunpack.c.h.b16 %v3114
        %v3223 = vpack.c.b16 %v3161, %v3159
        %v3224 = vpack.c.b16 %v3162, %v3160
        %v3225 = vpack.c.b16 %v3165, %v3163
        %v3226 = vpack.c.b16 %v3166, %v3164
        %v3227 = vpack.c.b16 %v3169, %v3167
        %v3228 = vpack.c.b16 %v3170, %v3168
        %v3229 = vpack.c.b16 %v3173, %v3171
        %v3230 = vpack.c.b16 %v3174, %v3172
        %v3231 = vpack.c.b16 %v3177, %v3175
        %v3232 = vpack.c.b16 %v3178, %v3176
        %v3233 = vpack.c.b16 %v3181, %v3179
        %v3234 = vpack.c.b16 %v3182, %v3180
        %v3235 = vpack.c.b16 %v3185, %v3183
        %v3236 = vpack.c.b16 %v3186, %v3184
        %v3237 = vpack.c.b16 %v3189, %v3187
        %v3238 = vpack.c.b16 %v3190, %v3188
        %v3239 = vpack.c.b16 %v3193, %v3191
        %v3240 = vpack.c.b16 %v3194, %v3192
        %v3241 = vpack.c.b16 %v3197, %v3195
        %v3242 = vpack.c.b16 %v3198, %v3196
        %v3243 = vpack.c.b16 %v3201, %v3199
        %v3244 = vpack.c.b16 %v3202, %v3200
        %v3245 = vpack.c.b16 %v3205, %v3203
        %v3246 = vpack.c.b16 %v3206, %v3204
        %v3247 = vpack.c.b16 %v3209, %v3207
        %v3248 = vpack.c.b16 %v3210, %v3208
        %v3249 = vpack.c.b16 %v3213, %v3211
        %v3250 = vpack.c.b16 %v3214, %v3212
        %v3251 = vpack.c.b16 %v3217, %v3215
        %v3252 = vpack.c.b16 %v3218, %v3216
        %v3253 = vpack.c.b16 %v3221, %v3219
        %v3254 = vpack.c.b16 %v3222, %v3220
        %3287 = vmatprep.subr.bf16.mxu0 %v3224
        %3288 = vmatpush1.bf16.msra.mxu0 %v3223
        %3289 = vmatprep.subr.bf16.mxu0 %v3226
        %3290 = vmatpush1.bf16.msra.mxu0 %v3225
        %3291 = vmatprep.subr.bf16.mxu0 %v3228
        %3292 = vmatpush1.bf16.msra.mxu0 %v3227
        %3293 = vmatprep.subr.bf16.mxu0 %v3230
        %3294 = vmatpush1.bf16.msra.mxu0 %v3229
        %3295 = vmatprep.subr.bf16.mxu0 %v3232
        %3296 = vmatpush1.bf16.msra.mxu0 %v3231
        %3297 = vmatprep.subr.bf16.mxu0 %v3234
        %3298 = vmatpush1.bf16.msra.mxu0 %v3233
        %3299 = vmatprep.subr.bf16.mxu0 %v3236
        %3300 = vmatpush1.bf16.msra.mxu0 %v3235
        %3301 = vmatprep.subr.bf16.mxu0 %v3238
        %3302 = vmatpush1.bf16.msra.mxu0 %v3237
        %3303 = vmatprep.subr.bf16.mxu0 %v3240
        %3304 = vmatpush1.bf16.msra.mxu0 %v3239
        %3305 = vmatprep.subr.bf16.mxu0 %v3242
        %3306 = vmatpush1.bf16.msra.mxu0 %v3241
        %3307 = vmatprep.subr.bf16.mxu0 %v3244
        %3308 = vmatpush1.bf16.msra.mxu0 %v3243
        %3309 = vmatprep.subr.bf16.mxu0 %v3246
        %3310 = vmatpush1.bf16.msra.mxu0 %v3245
        %3311 = vmatprep.subr.bf16.mxu0 %v3248
        %3312 = vmatpush1.bf16.msra.mxu0 %v3247
        %3313 = vmatprep.subr.bf16.mxu0 %v3250
        %3314 = vmatpush1.bf16.msra.mxu0 %v3249
        %3315 = vmatprep.subr.bf16.mxu0 %v3252
        %3316 = vmatpush1.bf16.msra.mxu0 %v3251
        %3317 = vmatprep.subr.bf16.mxu0 %v3254
        %3318 = vmatpush1.bf16.msra.mxu0 %v3253
        %3319 = vmatprep.mubr.bf16.mxu0 %v3082
        %3320 = vmatmul.mubr.bf16.gmra.mrb[0].mxu0 %v3081
        %v3321 = vpop.f32.mrb[0].mxu0
        %v3322 = vadd.f32 %v3120, %v3321
        %v3323 = vpop.f32.mrb[0].mxu0
        %v3324 = vadd.f32 %v3124, %v3323
        %v3325 = vpop.f32.mrb[0].mxu0
        %v3326 = vadd.f32 %v3120, %v3325
        %v3327 = vpop.f32.mrb[0].mxu0
        %v3328 = vadd.f32 %v3124, %v3327
        %3329 = vdwg.mxu0
        %v3330 = vadd.f32 %v976, %v3322
        %v3331 = vadd.f32 %v977, %v3324
        %v3332 = vadd.f32 %v978, %v3326
        %v3333 = vadd.f32 %v979, %v3328
        %v3334 = vld [vmem:[%s877] sm:$0x3]
        %v3335 = vld [vmem:[%s881] sm:$0x3]
        %v3336 = vadd.f32 %v3330, %v3331
        %3337 = vadd.xlane.f32.xlu0 %v3336
        %v3338 = vpop.xlane.xlu0 %3337
        %v3339 = vadd.f32 %v3332, %v3333
        %3340 = vadd.xlane.f32.xlu0 %v3339
        %v3341 = vpop.xlane.xlu0 %3340
        %v3342 = vrcp.pop 256.0
        %v3343 = vmul.f32 %v3338, %v3342
        %v3344 = vmul.f32 %v3341, %v3342
        %v3345 = vsub.f32 %v3330, %v3343
        %v3346 = vsub.f32 %v3331, %v3343
        %v3347 = vsub.f32 %v3332, %v3344
        %v3348 = vsub.f32 %v3333, %v3344
        %v3349 = vmul.f32 %v3345, %v3345
        %v3350 = vmul.f32 %v3346, %v3346
        %v3351 = vmul.f32 %v3347, %v3347
        %v3352 = vmul.f32 %v3348, %v3348
        %v3353 = vadd.f32 %v3349, %v3350
        %3354 = vadd.xlane.f32.xlu0 %v3353
        %v3355 = vpop.xlane.xlu0 %3354
        %v3356 = vadd.f32 %v3351, %v3352
        %3357 = vadd.xlane.f32.xlu0 %v3356
        %v3358 = vpop.xlane.xlu0 %3357
        %v3359 = vmul.f32 %v3355, %v3342
        %v3360 = vmul.f32 %v3358, %v3342
        %v3361 = vadd.f32 %v3359, 1e-05
        %v3362 = vadd.f32 %v3360, 1e-05
        %v3363 = vrsqrt.pop %v3361
        %v3364 = vrsqrt.pop %v3362
        %v3365 = vmul.f32 %v3345, %v3363
        %v3366 = vmul.f32 %v3346, %v3363
        %v3367 = vmul.f32 %v3347, %v3364
        %v3368 = vmul.f32 %v3348, %v3364
        %v3370 = vlaneseq
        %v3371 = vshrl.u32 %v3370, 7
        %v3372 = vsub.s32 0, %v3371
        %v3373 = vrot.slane %v3334, %v3372
        %v3374 = vlaneseq
        %v3375 = vshrl.u32 %v3374, 7
        %v3376 = vsub.s32 1, %v3375
        %v3377 = vrot.slane %v3334, %v3376
        %v3380 = vmul.f32 %v3365, %v3373
        %v3381 = vmul.f32 %v3366, %v3377
        %v3382 = vmul.f32 %v3367, %v3373
        %v3383 = vmul.f32 %v3368, %v3377
        %v3385 = vlaneseq
        %v3386 = vshrl.u32 %v3385, 7
        %v3387 = vsub.s32 0, %v3386
        %v3388 = vrot.slane %v3335, %v3387
        %v3389 = vlaneseq
        %v3390 = vshrl.u32 %v3389, 7
        %v3391 = vsub.s32 1, %v3390
        %v3392 = vrot.slane %v3335, %v3391
        %v3395 = vadd.f32 %v3380, %v3388
        %v3396 = vadd.f32 %v3381, %v3392
        %v3397 = vadd.f32 %v3382, %v3388
        %v3398 = vadd.f32 %v3383, %v3392
        %v3399 = vpack.c.bf16 %v3397, %v3395
        %v3400 = vpack.c.bf16 %v3398, %v3396
        %v3401 = vld [vmem:[%s745] sm:$0xff]
        %v3402 = vld [vmem:[%s745 + $0x8] sm:$0xff]
        %v3403 = vld [vmem:[%s745 + $0x10] sm:$0xff]
        %v3404 = vld [vmem:[%s745 + $0x18] sm:$0xff]
        %v3405 = vld [vmem:[%s745 + $0x20] sm:$0xff]
        %v3406 = vld [vmem:[%s745 + $0x28] sm:$0xff]
        %v3407 = vld [vmem:[%s745 + $0x30] sm:$0xff]
        %v3408 = vld [vmem:[%s745 + $0x38] sm:$0xff]
        %v3409 = vld [vmem:[%s745 + $0x40] sm:$0xff]
        %v3410 = vld [vmem:[%s745 + $0x48] sm:$0xff]
        %v3411 = vld [vmem:[%s745 + $0x50] sm:$0xff]
        %v3412 = vld [vmem:[%s745 + $0x58] sm:$0xff]
        %v3413 = vld [vmem:[%s745 + $0x60] sm:$0xff]
        %v3414 = vld [vmem:[%s745 + $0x68] sm:$0xff]
        %v3415 = vld [vmem:[%s745 + $0x70] sm:$0xff]
        %v3416 = vld [vmem:[%s745 + $0x78] sm:$0xff]
        %v3417 = vld [vmem:[%s745 + $0x80] sm:$0xff]
        %v3418 = vld [vmem:[%s745 + $0x88] sm:$0xff]
        %v3419 = vld [vmem:[%s745 + $0x90] sm:$0xff]
        %v3420 = vld [vmem:[%s745 + $0x98] sm:$0xff]
        %v3421 = vld [vmem:[%s745 + $0xa0] sm:$0xff]
        %v3422 = vld [vmem:[%s745 + $0xa8] sm:$0xff]
        %v3423 = vld [vmem:[%s745 + $0xb0] sm:$0xff]
        %v3424 = vld [vmem:[%s745 + $0xb8] sm:$0xff]
        %v3425 = vld [vmem:[%s745 + $0xc0] sm:$0xff]
        %v3426 = vld [vmem:[%s745 + $0xc8] sm:$0xff]
        %v3427 = vld [vmem:[%s745 + $0xd0] sm:$0xff]
        %v3428 = vld [vmem:[%s745 + $0xd8] sm:$0xff]
        %v3429 = vld [vmem:[%s745 + $0xe0] sm:$0xff]
        %v3430 = vld [vmem:[%s745 + $0xe8] sm:$0xff]
        %v3431 = vld [vmem:[%s745 + $0xf0] sm:$0xff]
        %v3432 = vld [vmem:[%s745 + $0xf8] sm:$0xff]
        %v3433 = vld [vmem:[%s745 + $0x100] sm:$0xff]
        %v3434 = vld [vmem:[%s745 + $0x108] sm:$0xff]
        %v3435 = vld [vmem:[%s745 + $0x110] sm:$0xff]
        %v3436 = vld [vmem:[%s745 + $0x118] sm:$0xff]
        %v3437 = vld [vmem:[%s745 + $0x120] sm:$0xff]
        %v3438 = vld [vmem:[%s745 + $0x128] sm:$0xff]
        %v3439 = vld [vmem:[%s745 + $0x130] sm:$0xff]
        %v3440 = vld [vmem:[%s745 + $0x138] sm:$0xff]
        %v3441 = vld [vmem:[%s745 + $0x140] sm:$0xff]
        %v3442 = vld [vmem:[%s745 + $0x148] sm:$0xff]
        %v3443 = vld [vmem:[%s745 + $0x150] sm:$0xff]
        %v3444 = vld [vmem:[%s745 + $0x158] sm:$0xff]
        %v3445 = vld [vmem:[%s745 + $0x160] sm:$0xff]
        %v3446 = vld [vmem:[%s745 + $0x168] sm:$0xff]
        %v3447 = vld [vmem:[%s745 + $0x170] sm:$0xff]
        %v3448 = vld [vmem:[%s745 + $0x178] sm:$0xff]
        %v3449 = vld [vmem:[%s745 + $0x180] sm:$0xff]
        %v3450 = vld [vmem:[%s745 + $0x188] sm:$0xff]
        %v3451 = vld [vmem:[%s745 + $0x190] sm:$0xff]
        %v3452 = vld [vmem:[%s745 + $0x198] sm:$0xff]
        %v3453 = vld [vmem:[%s745 + $0x1a0] sm:$0xff]
        %v3454 = vld [vmem:[%s745 + $0x1a8] sm:$0xff]
        %v3455 = vld [vmem:[%s745 + $0x1b0] sm:$0xff]
        %v3456 = vld [vmem:[%s745 + $0x1b8] sm:$0xff]
        %v3457 = vld [vmem:[%s745 + $0x1c0] sm:$0xff]
        %v3458 = vld [vmem:[%s745 + $0x1c8] sm:$0xff]
        %v3459 = vld [vmem:[%s745 + $0x1d0] sm:$0xff]
        %v3460 = vld [vmem:[%s745 + $0x1d8] sm:$0xff]
        %v3461 = vld [vmem:[%s745 + $0x1e0] sm:$0xff]
        %v3462 = vld [vmem:[%s745 + $0x1e8] sm:$0xff]
        %v3463 = vld [vmem:[%s745 + $0x1f0] sm:$0xff]
        %v3464 = vld [vmem:[%s745 + $0x1f8] sm:$0xff]
        %v3465 = vld [vmem:[%s885] sm:$0xf]
        %v3467 = vlaneseq
        %v3468 = vshrl.u32 %v3467, 7
        %v3469 = vsub.s32 0, %v3468
        %v3470 = vrot.slane %v3465, %v3469
        %v3471 = vlaneseq
        %v3472 = vshrl.u32 %v3471, 7
        %v3473 = vsub.s32 1, %v3472
        %v3474 = vrot.slane %v3465, %v3473
        %v3475 = vlaneseq
        %v3476 = vshrl.u32 %v3475, 7
        %v3477 = vsub.s32 2, %v3476
        %v3478 = vrot.slane %v3465, %v3477
        %v3479 = vlaneseq
        %v3480 = vshrl.u32 %v3479, 7
        %v3481 = vsub.s32 3, %v3480
        %v3482 = vrot.slane %v3465, %v3481
        %v3551 = vunpack.c.l.b16 %v3401
        %v3552 = vunpack.c.h.b16 %v3401
        %v3553 = vunpack.c.l.b16 %v3402
        %v3554 = vunpack.c.h.b16 %v3402
        %v3555 = vunpack.c.l.b16 %v3403
        %v3556 = vunpack.c.h.b16 %v3403
        %v3557 = vunpack.c.l.b16 %v3404
        %v3558 = vunpack.c.h.b16 %v3404
        %v3559 = vunpack.c.l.b16 %v3405
        %v3560 = vunpack.c.h.b16 %v3405
        %v3561 = vunpack.c.l.b16 %v3406
        %v3562 = vunpack.c.h.b16 %v3406
        %v3563 = vunpack.c.l.b16 %v3407
        %v3564 = vunpack.c.h.b16 %v3407
        %v3565 = vunpack.c.l.b16 %v3408
        %v3566 = vunpack.c.h.b16 %v3408
        %v3567 = vunpack.c.l.b16 %v3409
        %v3568 = vunpack.c.h.b16 %v3409
        %v3569 = vunpack.c.l.b16 %v3410
        %v3570 = vunpack.c.h.b16 %v3410
        %v3571 = vunpack.c.l.b16 %v3411
        %v3572 = vunpack.c.h.b16 %v3411
        %v3573 = vunpack.c.l.b16 %v3412
        %v3574 = vunpack.c.h.b16 %v3412
        %v3575 = vunpack.c.l.b16 %v3413
        %v3576 = vunpack.c.h.b16 %v3413
        %v3577 = vunpack.c.l.b16 %v3414
        %v3578 = vunpack.c.h.b16 %v3414
        %v3579 = vunpack.c.l.b16 %v3415
        %v3580 = vunpack.c.h.b16 %v3415
        %v3581 = vunpack.c.l.b16 %v3416
        %v3582 = vunpack.c.h.b16 %v3416
        %v3583 = vunpack.c.l.b16 %v3417
        %v3584 = vunpack.c.h.b16 %v3417
        %v3585 = vunpack.c.l.b16 %v3418
        %v3586 = vunpack.c.h.b16 %v3418
        %v3587 = vunpack.c.l.b16 %v3419
        %v3588 = vunpack.c.h.b16 %v3419
        %v3589 = vunpack.c.l.b16 %v3420
        %v3590 = vunpack.c.h.b16 %v3420
        %v3591 = vunpack.c.l.b16 %v3421
        %v3592 = vunpack.c.h.b16 %v3421
        %v3593 = vunpack.c.l.b16 %v3422
        %v3594 = vunpack.c.h.b16 %v3422
        %v3595 = vunpack.c.l.b16 %v3423
        %v3596 = vunpack.c.h.b16 %v3423
        %v3597 = vunpack.c.l.b16 %v3424
        %v3598 = vunpack.c.h.b16 %v3424
        %v3599 = vunpack.c.l.b16 %v3425
        %v3600 = vunpack.c.h.b16 %v3425
        %v3601 = vunpack.c.l.b16 %v3426
        %v3602 = vunpack.c.h.b16 %v3426
        %v3603 = vunpack.c.l.b16 %v3427
        %v3604 = vunpack.c.h.b16 %v3427
        %v3605 = vunpack.c.l.b16 %v3428
        %v3606 = vunpack.c.h.b16 %v3428
        %v3607 = vunpack.c.l.b16 %v3429
        %v3608 = vunpack.c.h.b16 %v3429
        %v3609 = vunpack.c.l.b16 %v3430
        %v3610 = vunpack.c.h.b16 %v3430
        %v3611 = vunpack.c.l.b16 %v3431
        %v3612 = vunpack.c.h.b16 %v3431
        %v3613 = vunpack.c.l.b16 %v3432
        %v3614 = vunpack.c.h.b16 %v3432
        %v3615 = vunpack.c.l.b16 %v3433
        %v3616 = vunpack.c.h.b16 %v3433
        %v3617 = vunpack.c.l.b16 %v3434
        %v3618 = vunpack.c.h.b16 %v3434
        %v3619 = vunpack.c.l.b16 %v3435
        %v3620 = vunpack.c.h.b16 %v3435
        %v3621 = vunpack.c.l.b16 %v3436
        %v3622 = vunpack.c.h.b16 %v3436
        %v3623 = vunpack.c.l.b16 %v3437
        %v3624 = vunpack.c.h.b16 %v3437
        %v3625 = vunpack.c.l.b16 %v3438
        %v3626 = vunpack.c.h.b16 %v3438
        %v3627 = vunpack.c.l.b16 %v3439
        %v3628 = vunpack.c.h.b16 %v3439
        %v3629 = vunpack.c.l.b16 %v3440
        %v3630 = vunpack.c.h.b16 %v3440
        %v3631 = vunpack.c.l.b16 %v3441
        %v3632 = vunpack.c.h.b16 %v3441
        %v3633 = vunpack.c.l.b16 %v3442
        %v3634 = vunpack.c.h.b16 %v3442
        %v3635 = vunpack.c.l.b16 %v3443
        %v3636 = vunpack.c.h.b16 %v3443
        %v3637 = vunpack.c.l.b16 %v3444
        %v3638 = vunpack.c.h.b16 %v3444
        %v3639 = vunpack.c.l.b16 %v3445
        %v3640 = vunpack.c.h.b16 %v3445
        %v3641 = vunpack.c.l.b16 %v3446
        %v3642 = vunpack.c.h.b16 %v3446
        %v3643 = vunpack.c.l.b16 %v3447
        %v3644 = vunpack.c.h.b16 %v3447
        %v3645 = vunpack.c.l.b16 %v3448
        %v3646 = vunpack.c.h.b16 %v3448
        %v3647 = vunpack.c.l.b16 %v3449
        %v3648 = vunpack.c.h.b16 %v3449
        %v3649 = vunpack.c.l.b16 %v3450
        %v3650 = vunpack.c.h.b16 %v3450
        %v3651 = vunpack.c.l.b16 %v3451
        %v3652 = vunpack.c.h.b16 %v3451
        %v3653 = vunpack.c.l.b16 %v3452
        %v3654 = vunpack.c.h.b16 %v3452
        %v3655 = vunpack.c.l.b16 %v3453
        %v3656 = vunpack.c.h.b16 %v3453
        %v3657 = vunpack.c.l.b16 %v3454
        %v3658 = vunpack.c.h.b16 %v3454
        %v3659 = vunpack.c.l.b16 %v3455
        %v3660 = vunpack.c.h.b16 %v3455
        %v3661 = vunpack.c.l.b16 %v3456
        %v3662 = vunpack.c.h.b16 %v3456
        %v3663 = vunpack.c.l.b16 %v3457
        %v3664 = vunpack.c.h.b16 %v3457
        %v3665 = vunpack.c.l.b16 %v3458
        %v3666 = vunpack.c.h.b16 %v3458
        %v3667 = vunpack.c.l.b16 %v3459
        %v3668 = vunpack.c.h.b16 %v3459
        %v3669 = vunpack.c.l.b16 %v3460
        %v3670 = vunpack.c.h.b16 %v3460
        %v3671 = vunpack.c.l.b16 %v3461
        %v3672 = vunpack.c.h.b16 %v3461
        %v3673 = vunpack.c.l.b16 %v3462
        %v3674 = vunpack.c.h.b16 %v3462
        %v3675 = vunpack.c.l.b16 %v3463
        %v3676 = vunpack.c.h.b16 %v3463
        %v3677 = vunpack.c.l.b16 %v3464
        %v3678 = vunpack.c.h.b16 %v3464
        %v3679 = vpack.c.b16 %v3555, %v3551
        %v3680 = vpack.c.b16 %v3556, %v3552
        %v3681 = vpack.c.b16 %v3557, %v3553
        %v3682 = vpack.c.b16 %v3558, %v3554
        %v3683 = vpack.c.b16 %v3563, %v3559
        %v3684 = vpack.c.b16 %v3564, %v3560
        %v3685 = vpack.c.b16 %v3565, %v3561
        %v3686 = vpack.c.b16 %v3566, %v3562
        %v3687 = vpack.c.b16 %v3571, %v3567
        %v3688 = vpack.c.b16 %v3572, %v3568
        %v3689 = vpack.c.b16 %v3573, %v3569
        %v3690 = vpack.c.b16 %v3574, %v3570
        %v3691 = vpack.c.b16 %v3579, %v3575
        %v3692 = vpack.c.b16 %v3580, %v3576
        %v3693 = vpack.c.b16 %v3581, %v3577
        %v3694 = vpack.c.b16 %v3582, %v3578
        %v3695 = vpack.c.b16 %v3587, %v3583
        %v3696 = vpack.c.b16 %v3588, %v3584
        %v3697 = vpack.c.b16 %v3589, %v3585
        %v3698 = vpack.c.b16 %v3590, %v3586
        %v3699 = vpack.c.b16 %v3595, %v3591
        %v3700 = vpack.c.b16 %v3596, %v3592
        %v3701 = vpack.c.b16 %v3597, %v3593
        %v3702 = vpack.c.b16 %v3598, %v3594
        %v3703 = vpack.c.b16 %v3603, %v3599
        %v3704 = vpack.c.b16 %v3604, %v3600
        %v3705 = vpack.c.b16 %v3605, %v3601
        %v3706 = vpack.c.b16 %v3606, %v3602
        %v3707 = vpack.c.b16 %v3611, %v3607
        %v3708 = vpack.c.b16 %v3612, %v3608
        %v3709 = vpack.c.b16 %v3613, %v3609
        %v3710 = vpack.c.b16 %v3614, %v3610
        %v3711 = vpack.c.b16 %v3619, %v3615
        %v3712 = vpack.c.b16 %v3620, %v3616
        %v3713 = vpack.c.b16 %v3621, %v3617
        %v3714 = vpack.c.b16 %v3622, %v3618
        %v3715 = vpack.c.b16 %v3627, %v3623
        %v3716 = vpack.c.b16 %v3628, %v3624
        %v3717 = vpack.c.b16 %v3629, %v3625
        %v3718 = vpack.c.b16 %v3630, %v3626
        %v3719 = vpack.c.b16 %v3635, %v3631
        %v3720 = vpack.c.b16 %v3636, %v3632
        %v3721 = vpack.c.b16 %v3637, %v3633
        %v3722 = vpack.c.b16 %v3638, %v3634
        %v3723 = vpack.c.b16 %v3643, %v3639
        %v3724 = vpack.c.b16 %v3644, %v3640
        %v3725 = vpack.c.b16 %v3645, %v3641
        %v3726 = vpack.c.b16 %v3646, %v3642
        %v3727 = vpack.c.b16 %v3651, %v3647
        %v3728 = vpack.c.b16 %v3652, %v3648
        %v3729 = vpack.c.b16 %v3653, %v3649
        %v3730 = vpack.c.b16 %v3654, %v3650
        %v3731 = vpack.c.b16 %v3659, %v3655
        %v3732 = vpack.c.b16 %v3660, %v3656
        %v3733 = vpack.c.b16 %v3661, %v3657
        %v3734 = vpack.c.b16 %v3662, %v3658
        %v3735 = vpack.c.b16 %v3667, %v3663
        %v3736 = vpack.c.b16 %v3668, %v3664
        %v3737 = vpack.c.b16 %v3669, %v3665
        %v3738 = vpack.c.b16 %v3670, %v3666
        %v3739 = vpack.c.b16 %v3675, %v3671
        %v3740 = vpack.c.b16 %v3676, %v3672
        %v3741 = vpack.c.b16 %v3677, %v3673
        %v3742 = vpack.c.b16 %v3678, %v3674
        %3807 = vmatprep.subr.bf16.mxu0 %v3680
        %3808 = vmatpush1.bf16.msra.mxu0 %v3679
        %3809 = vmatprep.subr.bf16.mxu0 %v3684
        %3810 = vmatpush1.bf16.msra.mxu0 %v3683
        %3811 = vmatprep.subr.bf16.mxu0 %v3688
        %3812 = vmatpush1.bf16.msra.mxu0 %v3687
        %3813 = vmatprep.subr.bf16.mxu0 %v3692
        %3814 = vmatpush1.bf16.msra.mxu0 %v3691
        %3815 = vmatprep.subr.bf16.mxu0 %v3696
        %3816 = vmatpush1.bf16.msra.mxu0 %v3695
        %3817 = vmatprep.subr.bf16.mxu0 %v3700
        %3818 = vmatpush1.bf16.msra.mxu0 %v3699
        %3819 = vmatprep.subr.bf16.mxu0 %v3704
        %3820 = vmatpush1.bf16.msra.mxu0 %v3703
        %3821 = vmatprep.subr.bf16.mxu0 %v3708
        %3822 = vmatpush1.bf16.msra.mxu0 %v3707
        %3823 = vmatprep.subr.bf16.mxu0 %v3712
        %3824 = vmatpush1.bf16.msra.mxu0 %v3711
        %3825 = vmatprep.subr.bf16.mxu0 %v3716
        %3826 = vmatpush1.bf16.msra.mxu0 %v3715
        %3827 = vmatprep.subr.bf16.mxu0 %v3720
        %3828 = vmatpush1.bf16.msra.mxu0 %v3719
        %3829 = vmatprep.subr.bf16.mxu0 %v3724
        %3830 = vmatpush1.bf16.msra.mxu0 %v3723
        %3831 = vmatprep.subr.bf16.mxu0 %v3728
        %3832 = vmatpush1.bf16.msra.mxu0 %v3727
        %3833 = vmatprep.subr.bf16.mxu0 %v3732
        %3834 = vmatpush1.bf16.msra.mxu0 %v3731
        %3835 = vmatprep.subr.bf16.mxu0 %v3736
        %3836 = vmatpush1.bf16.msra.mxu0 %v3735
        %3837 = vmatprep.subr.bf16.mxu0 %v3740
        %3838 = vmatpush1.bf16.msra.mxu0 %v3739
        %3839 = vmatprep.mubr.bf16.mxu0 %v3400
        %3840 = vmatmul.mubr.bf16.gmra.mrb[0].mxu0 %v3399
        %v3841 = vpop.f32.mrb[0].mxu0
        %v3842 = vadd.f32 %v3470, %v3841
        %v3843 = vpop.f32.mrb[0].mxu0
        %v3844 = vadd.f32 %v3474, %v3843
        %v3845 = vpop.f32.mrb[0].mxu0
        %v3846 = vadd.f32 %v3470, %v3845
        %v3847 = vpop.f32.mrb[0].mxu0
        %v3848 = vadd.f32 %v3474, %v3847
        %3849 = vdwg.mxu0
        %3850 = vmatprep.subr.bf16.mxu0 %v3682
        %3851 = vmatpush1.bf16.msra.mxu0 %v3681
        %3852 = vmatprep.subr.bf16.mxu0 %v3686
        %3853 = vmatpush1.bf16.msra.mxu0 %v3685
        %3854 = vmatprep.subr.bf16.mxu0 %v3690
        %3855 = vmatpush1.bf16.msra.mxu0 %v3689
        %3856 = vmatprep.subr.bf16.mxu0 %v3694
        %3857 = vmatpush1.bf16.msra.mxu0 %v3693
        %3858 = vmatprep.subr.bf16.mxu0 %v3698
        %3859 = vmatpush1.bf16.msra.mxu0 %v3697
        %3860 = vmatprep.subr.bf16.mxu0 %v3702
        %3861 = vmatpush1.bf16.msra.mxu0 %v3701
        %3862 = vmatprep.subr.bf16.mxu0 %v3706
        %3863 = vmatpush1.bf16.msra.mxu0 %v3705
        %3864 = vmatprep.subr.bf16.mxu0 %v3710
        %3865 = vmatpush1.bf16.msra.mxu0 %v3709
        %3866 = vmatprep.subr.bf16.mxu0 %v3714
        %3867 = vmatpush1.bf16.msra.mxu0 %v3713
        %3868 = vmatprep.subr.bf16.mxu0 %v3718
        %3869 = vmatpush1.bf16.msra.mxu0 %v3717
        %3870 = vmatprep.subr.bf16.mxu0 %v3722
        %3871 = vmatpush1.bf16.msra.mxu0 %v3721
        %3872 = vmatprep.subr.bf16.mxu0 %v3726
        %3873 = vmatpush1.bf16.msra.mxu0 %v3725
        %3874 = vmatprep.subr.bf16.mxu0 %v3730
        %3875 = vmatpush1.bf16.msra.mxu0 %v3729
        %3876 = vmatprep.subr.bf16.mxu0 %v3734
        %3877 = vmatpush1.bf16.msra.mxu0 %v3733
        %3878 = vmatprep.subr.bf16.mxu0 %v3738
        %3879 = vmatpush1.bf16.msra.mxu0 %v3737
        %3880 = vmatprep.subr.bf16.mxu0 %v3742
        %3881 = vmatpush1.bf16.msra.mxu0 %v3741
        %3882 = vmatprep.mubr.bf16.mxu0 %v3400
        %3883 = vmatmul.mubr.bf16.gmra.mrb[0].mxu0 %v3399
        %v3884 = vpop.f32.mrb[0].mxu0
        %v3885 = vadd.f32 %v3478, %v3884
        %v3886 = vpop.f32.mrb[0].mxu0
        %v3887 = vadd.f32 %v3482, %v3886
        %v3888 = vpop.f32.mrb[0].mxu0
        %v3889 = vadd.f32 %v3478, %v3888
        %v3890 = vpop.f32.mrb[0].mxu0
        %v3891 = vadd.f32 %v3482, %v3890
        %3892 = vdwg.mxu0
        %v3893 = vmul.f32 %v3842, 0.5
        %v3894 = vmul.f32 %v3844, 0.5
        %v3895 = vmul.f32 %v3885, 0.5
        %v3896 = vmul.f32 %v3887, 0.5
        %v3897 = vmul.f32 %v3846, 0.5
        %v3898 = vmul.f32 %v3848, 0.5
        %v3899 = vmul.f32 %v3889, 0.5
        %v3900 = vmul.f32 %v3891, 0.5
        %v3901 = vmul.f32 %v3842, 0.044715
        %v3902 = vmul.f32 %v3844, 0.044715
        %v3903 = vmul.f32 %v3885, 0.044715
        %v3904 = vmul.f32 %v3887, 0.044715
        %v3905 = vmul.f32 %v3846, 0.044715
        %v3906 = vmul.f32 %v3848, 0.044715
        %v3907 = vmul.f32 %v3889, 0.044715
        %v3908 = vmul.f32 %v3891, 0.044715
        %v3909 = vmul.f32 %v3901, %v3842
        %v3910 = vmul.f32 %v3902, %v3844
        %v3911 = vmul.f32 %v3903, %v3885
        %v3912 = vmul.f32 %v3904, %v3887
        %v3913 = vmul.f32 %v3905, %v3846
        %v3914 = vmul.f32 %v3906, %v3848
        %v3915 = vmul.f32 %v3907, %v3889
        %v3916 = vmul.f32 %v3908, %v3891
        %v3917 = vmul.f32 %v3909, %v3842
        %v3918 = vmul.f32 %v3910, %v3844
        %v3919 = vmul.f32 %v3911, %v3885
        %v3920 = vmul.f32 %v3912, %v3887
        %v3921 = vmul.f32 %v3913, %v3846
        %v3922 = vmul.f32 %v3914, %v3848
        %v3923 = vmul.f32 %v3915, %v3889
        %v3924 = vmul.f32 %v3916, %v3891
        %v3925 = vadd.f32 %v3842, %v3917
        %v3926 = vadd.f32 %v3844, %v3918
        %v3927 = vadd.f32 %v3885, %v3919
        %v3928 = vadd.f32 %v3887, %v3920
        %v3929 = vadd.f32 %v3846, %v3921
        %v3930 = vadd.f32 %v3848, %v3922
        %v3931 = vadd.f32 %v3889, %v3923
        %v3932 = vadd.f32 %v3891, %v3924
        %v3933 = vmul.f32 %v3925, 0.7978846
        %v3934 = vmul.f32 %v3926, 0.7978846
        %v3935 = vmul.f32 %v3927, 0.7978846
        %v3936 = vmul.f32 %v3928, 0.7978846
        %v3937 = vmul.f32 %v3929, 0.7978846
        %v3938 = vmul.f32 %v3930, 0.7978846
        %v3939 = vmul.f32 %v3931, 0.7978846
        %v3940 = vmul.f32 %v3932, 0.7978846
        %v3941 = vtanh.pop %v3933
        %v3942 = vtanh.pop %v3934
        %v3943 = vtanh.pop %v3935
        %v3944 = vtanh.pop %v3936
        %v3945 = vtanh.pop %v3937
        %v3946 = vtanh.pop %v3938
        %v3947 = vtanh.pop %v3939
        %v3948 = vtanh.pop %v3940
        %v3949 = vadd.f32 %v3941, 1.0
        %v3950 = vadd.f32 %v3942, 1.0
        %v3951 = vadd.f32 %v3943, 1.0
        %v3952 = vadd.f32 %v3944, 1.0
        %v3953 = vadd.f32 %v3945, 1.0
        %v3954 = vadd.f32 %v3946, 1.0
        %v3955 = vadd.f32 %v3947, 1.0
        %v3956 = vadd.f32 %v3948, 1.0
        %v3957 = vmul.f32 %v3893, %v3949
        %v3958 = vmul.f32 %v3894, %v3950
        %v3959 = vmul.f32 %v3895, %v3951
        %v3960 = vmul.f32 %v3896, %v3952
        %v3961 = vmul.f32 %v3897, %v3953
        %v3962 = vmul.f32 %v3898, %v3954
        %v3963 = vmul.f32 %v3899, %v3955
        %v3964 = vmul.f32 %v3900, %v3956
        %v3965 = vpack.c.bf16 %v3961, %v3957
        %v3966 = vpack.c.bf16 %v3962, %v3958
        %v3967 = vpack.c.bf16 %v3963, %v3959
        %v3968 = vpack.c.bf16 %v3964, %v3960
        %v3969 = vld [vmem:[%s754] sm:$0xff]
        %v3970 = vld [vmem:[%s754 + $0x8] sm:$0xff]
        %v3971 = vld [vmem:[%s754 + $0x10] sm:$0xff]
        %v3972 = vld [vmem:[%s754 + $0x18] sm:$0xff]
        %v3973 = vld [vmem:[%s754 + $0x20] sm:$0xff]
        %v3974 = vld [vmem:[%s754 + $0x28] sm:$0xff]
        %v3975 = vld [vmem:[%s754 + $0x30] sm:$0xff]
        %v3976 = vld [vmem:[%s754 + $0x38] sm:$0xff]
        %v3977 = vld [vmem:[%s754 + $0x40] sm:$0xff]
        %v3978 = vld [vmem:[%s754 + $0x48] sm:$0xff]
        %v3979 = vld [vmem:[%s754 + $0x50] sm:$0xff]
        %v3980 = vld [vmem:[%s754 + $0x58] sm:$0xff]
        %v3981 = vld [vmem:[%s754 + $0x60] sm:$0xff]
        %v3982 = vld [vmem:[%s754 + $0x68] sm:$0xff]
        %v3983 = vld [vmem:[%s754 + $0x70] sm:$0xff]
        %v3984 = vld [vmem:[%s754 + $0x78] sm:$0xff]
        %v3985 = vld [vmem:[%s754 + $0x80] sm:$0xff]
        %v3986 = vld [vmem:[%s754 + $0x88] sm:$0xff]
        %v3987 = vld [vmem:[%s754 + $0x90] sm:$0xff]
        %v3988 = vld [vmem:[%s754 + $0x98] sm:$0xff]
        %v3989 = vld [vmem:[%s754 + $0xa0] sm:$0xff]
        %v3990 = vld [vmem:[%s754 + $0xa8] sm:$0xff]
        %v3991 = vld [vmem:[%s754 + $0xb0] sm:$0xff]
        %v3992 = vld [vmem:[%s754 + $0xb8] sm:$0xff]
        %v3993 = vld [vmem:[%s754 + $0xc0] sm:$0xff]
        %v3994 = vld [vmem:[%s754 + $0xc8] sm:$0xff]
        %v3995 = vld [vmem:[%s754 + $0xd0] sm:$0xff]
        %v3996 = vld [vmem:[%s754 + $0xd8] sm:$0xff]
        %v3997 = vld [vmem:[%s754 + $0xe0] sm:$0xff]
        %v3998 = vld [vmem:[%s754 + $0xe8] sm:$0xff]
        %v3999 = vld [vmem:[%s754 + $0xf0] sm:$0xff]
        %v4000 = vld [vmem:[%s754 + $0xf8] sm:$0xff]
        %v4001 = vld [vmem:[%s754 + $0x100] sm:$0xff]
        %v4002 = vld [vmem:[%s754 + $0x108] sm:$0xff]
        %v4003 = vld [vmem:[%s754 + $0x110] sm:$0xff]
        %v4004 = vld [vmem:[%s754 + $0x118] sm:$0xff]
        %v4005 = vld [vmem:[%s754 + $0x120] sm:$0xff]
        %v4006 = vld [vmem:[%s754 + $0x128] sm:$0xff]
        %v4007 = vld [vmem:[%s754 + $0x130] sm:$0xff]
        %v4008 = vld [vmem:[%s754 + $0x138] sm:$0xff]
        %v4009 = vld [vmem:[%s754 + $0x140] sm:$0xff]
        %v4010 = vld [vmem:[%s754 + $0x148] sm:$0xff]
        %v4011 = vld [vmem:[%s754 + $0x150] sm:$0xff]
        %v4012 = vld [vmem:[%s754 + $0x158] sm:$0xff]
        %v4013 = vld [vmem:[%s754 + $0x160] sm:$0xff]
        %v4014 = vld [vmem:[%s754 + $0x168] sm:$0xff]
        %v4015 = vld [vmem:[%s754 + $0x170] sm:$0xff]
        %v4016 = vld [vmem:[%s754 + $0x178] sm:$0xff]
        %v4017 = vld [vmem:[%s754 + $0x180] sm:$0xff]
        %v4018 = vld [vmem:[%s754 + $0x188] sm:$0xff]
        %v4019 = vld [vmem:[%s754 + $0x190] sm:$0xff]
        %v4020 = vld [vmem:[%s754 + $0x198] sm:$0xff]
        %v4021 = vld [vmem:[%s754 + $0x1a0] sm:$0xff]
        %v4022 = vld [vmem:[%s754 + $0x1a8] sm:$0xff]
        %v4023 = vld [vmem:[%s754 + $0x1b0] sm:$0xff]
        %v4024 = vld [vmem:[%s754 + $0x1b8] sm:$0xff]
        %v4025 = vld [vmem:[%s754 + $0x1c0] sm:$0xff]
        %v4026 = vld [vmem:[%s754 + $0x1c8] sm:$0xff]
        %v4027 = vld [vmem:[%s754 + $0x1d0] sm:$0xff]
        %v4028 = vld [vmem:[%s754 + $0x1d8] sm:$0xff]
        %v4029 = vld [vmem:[%s754 + $0x1e0] sm:$0xff]
        %v4030 = vld [vmem:[%s754 + $0x1e8] sm:$0xff]
        %v4031 = vld [vmem:[%s754 + $0x1f0] sm:$0xff]
        %v4032 = vld [vmem:[%s754 + $0x1f8] sm:$0xff]
        %v4033 = vld [vmem:[%s889] sm:$0x3]
        %v4035 = vlaneseq
        %v4036 = vshrl.u32 %v4035, 7
        %v4037 = vsub.s32 0, %v4036
        %v4038 = vrot.slane %v4033, %v4037
        %v4039 = vlaneseq
        %v4040 = vshrl.u32 %v4039, 7
        %v4041 = vsub.s32 1, %v4040
        %v4042 = vrot.slane %v4033, %v4041
        %v4109 = vunpack.c.l.b16 %v3969
        %v4110 = vunpack.c.h.b16 %v3969
        %v4111 = vunpack.c.l.b16 %v3970
        %v4112 = vunpack.c.h.b16 %v3970
        %v4113 = vunpack.c.l.b16 %v3971
        %v4114 = vunpack.c.h.b16 %v3971
        %v4115 = vunpack.c.l.b16 %v3972
        %v4116 = vunpack.c.h.b16 %v3972
        %v4117 = vunpack.c.l.b16 %v3973
        %v4118 = vunpack.c.h.b16 %v3973
        %v4119 = vunpack.c.l.b16 %v3974
        %v4120 = vunpack.c.h.b16 %v3974
        %v4121 = vunpack.c.l.b16 %v3975
        %v4122 = vunpack.c.h.b16 %v3975
        %v4123 = vunpack.c.l.b16 %v3976
        %v4124 = vunpack.c.h.b16 %v3976
        %v4125 = vunpack.c.l.b16 %v3977
        %v4126 = vunpack.c.h.b16 %v3977
        %v4127 = vunpack.c.l.b16 %v3978
        %v4128 = vunpack.c.h.b16 %v3978
        %v4129 = vunpack.c.l.b16 %v3979
        %v4130 = vunpack.c.h.b16 %v3979
        %v4131 = vunpack.c.l.b16 %v3980
        %v4132 = vunpack.c.h.b16 %v3980
        %v4133 = vunpack.c.l.b16 %v3981
        %v4134 = vunpack.c.h.b16 %v3981
        %v4135 = vunpack.c.l.b16 %v3982
        %v4136 = vunpack.c.h.b16 %v3982
        %v4137 = vunpack.c.l.b16 %v3983
        %v4138 = vunpack.c.h.b16 %v3983
        %v4139 = vunpack.c.l.b16 %v3984
        %v4140 = vunpack.c.h.b16 %v3984
        %v4141 = vunpack.c.l.b16 %v3985
        %v4142 = vunpack.c.h.b16 %v3985
        %v4143 = vunpack.c.l.b16 %v3986
        %v4144 = vunpack.c.h.b16 %v3986
        %v4145 = vunpack.c.l.b16 %v3987
        %v4146 = vunpack.c.h.b16 %v3987
        %v4147 = vunpack.c.l.b16 %v3988
        %v4148 = vunpack.c.h.b16 %v3988
        %v4149 = vunpack.c.l.b16 %v3989
        %v4150 = vunpack.c.h.b16 %v3989
        %v4151 = vunpack.c.l.b16 %v3990
        %v4152 = vunpack.c.h.b16 %v3990
        %v4153 = vunpack.c.l.b16 %v3991
        %v4154 = vunpack.c.h.b16 %v3991
        %v4155 = vunpack.c.l.b16 %v3992
        %v4156 = vunpack.c.h.b16 %v3992
        %v4157 = vunpack.c.l.b16 %v3993
        %v4158 = vunpack.c.h.b16 %v3993
        %v4159 = vunpack.c.l.b16 %v3994
        %v4160 = vunpack.c.h.b16 %v3994
        %v4161 = vunpack.c.l.b16 %v3995
        %v4162 = vunpack.c.h.b16 %v3995
        %v4163 = vunpack.c.l.b16 %v3996
        %v4164 = vunpack.c.h.b16 %v3996
        %v4165 = vunpack.c.l.b16 %v3997
        %v4166 = vunpack.c.h.b16 %v3997
        %v4167 = vunpack.c.l.b16 %v3998
        %v4168 = vunpack.c.h.b16 %v3998
        %v4169 = vunpack.c.l.b16 %v3999
        %v4170 = vunpack.c.h.b16 %v3999
        %v4171 = vunpack.c.l.b16 %v4000
        %v4172 = vunpack.c.h.b16 %v4000
        %v4173 = vunpack.c.l.b16 %v4001
        %v4174 = vunpack.c.h.b16 %v4001
        %v4175 = vunpack.c.l.b16 %v4002
        %v4176 = vunpack.c.h.b16 %v4002
        %v4177 = vunpack.c.l.b16 %v4003
        %v4178 = vunpack.c.h.b16 %v4003
        %v4179 = vunpack.c.l.b16 %v4004
        %v4180 = vunpack.c.h.b16 %v4004
        %v4181 = vunpack.c.l.b16 %v4005
        %v4182 = vunpack.c.h.b16 %v4005
        %v4183 = vunpack.c.l.b16 %v4006
        %v4184 = vunpack.c.h.b16 %v4006
        %v4185 = vunpack.c.l.b16 %v4007
        %v4186 = vunpack.c.h.b16 %v4007
        %v4187 = vunpack.c.l.b16 %v4008
        %v4188 = vunpack.c.h.b16 %v4008
        %v4189 = vunpack.c.l.b16 %v4009
        %v4190 = vunpack.c.h.b16 %v4009
        %v4191 = vunpack.c.l.b16 %v4010
        %v4192 = vunpack.c.h.b16 %v4010
        %v4193 = vunpack.c.l.b16 %v4011
        %v4194 = vunpack.c.h.b16 %v4011
        %v4195 = vunpack.c.l.b16 %v4012
        %v4196 = vunpack.c.h.b16 %v4012
        %v4197 = vunpack.c.l.b16 %v4013
        %v4198 = vunpack.c.h.b16 %v4013
        %v4199 = vunpack.c.l.b16 %v4014
        %v4200 = vunpack.c.h.b16 %v4014
        %v4201 = vunpack.c.l.b16 %v4015
        %v4202 = vunpack.c.h.b16 %v4015
        %v4203 = vunpack.c.l.b16 %v4016
        %v4204 = vunpack.c.h.b16 %v4016
        %v4205 = vunpack.c.l.b16 %v4017
        %v4206 = vunpack.c.h.b16 %v4017
        %v4207 = vunpack.c.l.b16 %v4018
        %v4208 = vunpack.c.h.b16 %v4018
        %v4209 = vunpack.c.l.b16 %v4019
        %v4210 = vunpack.c.h.b16 %v4019
        %v4211 = vunpack.c.l.b16 %v4020
        %v4212 = vunpack.c.h.b16 %v4020
        %v4213 = vunpack.c.l.b16 %v4021
        %v4214 = vunpack.c.h.b16 %v4021
        %v4215 = vunpack.c.l.b16 %v4022
        %v4216 = vunpack.c.h.b16 %v4022
        %v4217 = vunpack.c.l.b16 %v4023
        %v4218 = vunpack.c.h.b16 %v4023
        %v4219 = vunpack.c.l.b16 %v4024
        %v4220 = vunpack.c.h.b16 %v4024
        %v4221 = vunpack.c.l.b16 %v4025
        %v4222 = vunpack.c.h.b16 %v4025
        %v4223 = vunpack.c.l.b16 %v4026
        %v4224 = vunpack.c.h.b16 %v4026
        %v4225 = vunpack.c.l.b16 %v4027
        %v4226 = vunpack.c.h.b16 %v4027
        %v4227 = vunpack.c.l.b16 %v4028
        %v4228 = vunpack.c.h.b16 %v4028
        %v4229 = vunpack.c.l.b16 %v4029
        %v4230 = vunpack.c.h.b16 %v4029
        %v4231 = vunpack.c.l.b16 %v4030
        %v4232 = vunpack.c.h.b16 %v4030
        %v4233 = vunpack.c.l.b16 %v4031
        %v4234 = vunpack.c.h.b16 %v4031
        %v4235 = vunpack.c.l.b16 %v4032
        %v4236 = vunpack.c.h.b16 %v4032
        %v4237 = vpack.c.b16 %v4111, %v4109
        %v4238 = vpack.c.b16 %v4112, %v4110
        %v4239 = vpack.c.b16 %v4115, %v4113
        %v4240 = vpack.c.b16 %v4116, %v4114
        %v4241 = vpack.c.b16 %v4119, %v4117
        %v4242 = vpack.c.b16 %v4120, %v4118
        %v4243 = vpack.c.b16 %v4123, %v4121
        %v4244 = vpack.c.b16 %v4124, %v4122
        %v4245 = vpack.c.b16 %v4127, %v4125
        %v4246 = vpack.c.b16 %v4128, %v4126
        %v4247 = vpack.c.b16 %v4131, %v4129
        %v4248 = vpack.c.b16 %v4132, %v4130
        %v4249 = vpack.c.b16 %v4135, %v4133
        %v4250 = vpack.c.b16 %v4136, %v4134
        %v4251 = vpack.c.b16 %v4139, %v4137
        %v4252 = vpack.c.b16 %v4140, %v4138
        %v4253 = vpack.c.b16 %v4143, %v4141
        %v4254 = vpack.c.b16 %v4144, %v4142
        %v4255 = vpack.c.b16 %v4147, %v4145
        %v4256 = vpack.c.b16 %v4148, %v4146
        %v4257 = vpack.c.b16 %v4151, %v4149
        %v4258 = vpack.c.b16 %v4152, %v4150
        %v4259 = vpack.c.b16 %v4155, %v4153
        %v4260 = vpack.c.b16 %v4156, %v4154
        %v4261 = vpack.c.b16 %v4159, %v4157
        %v4262 = vpack.c.b16 %v4160, %v4158
        %v4263 = vpack.c.b16 %v4163, %v4161
        %v4264 = vpack.c.b16 %v4164, %v4162
        %v4265 = vpack.c.b16 %v4167, %v4165
        %v4266 = vpack.c.b16 %v4168, %v4166
        %v4267 = vpack.c.b16 %v4171, %v4169
        %v4268 = vpack.c.b16 %v4172, %v4170
        %v4269 = vpack.c.b16 %v4175, %v4173
        %v4270 = vpack.c.b16 %v4176, %v4174
        %v4271 = vpack.c.b16 %v4179, %v4177
        %v4272 = vpack.c.b16 %v4180, %v4178
        %v4273 = vpack.c.b16 %v4183, %v4181
        %v4274 = vpack.c.b16 %v4184, %v4182
        %v4275 = vpack.c.b16 %v4187, %v4185
        %v4276 = vpack.c.b16 %v4188, %v4186
        %v4277 = vpack.c.b16 %v4191, %v4189
        %v4278 = vpack.c.b16 %v4192, %v4190
        %v4279 = vpack.c.b16 %v4195, %v4193
        %v4280 = vpack.c.b16 %v4196, %v4194
        %v4281 = vpack.c.b16 %v4199, %v4197
        %v4282 = vpack.c.b16 %v4200, %v4198
        %v4283 = vpack.c.b16 %v4203, %v4201
        %v4284 = vpack.c.b16 %v4204, %v4202
        %v4285 = vpack.c.b16 %v4207, %v4205
        %v4286 = vpack.c.b16 %v4208, %v4206
        %v4287 = vpack.c.b16 %v4211, %v4209
        %v4288 = vpack.c.b16 %v4212, %v4210
        %v4289 = vpack.c.b16 %v4215, %v4213
        %v4290 = vpack.c.b16 %v4216, %v4214
        %v4291 = vpack.c.b16 %v4219, %v4217
        %v4292 = vpack.c.b16 %v4220, %v4218
        %v4293 = vpack.c.b16 %v4223, %v4221
        %v4294 = vpack.c.b16 %v4224, %v4222
        %v4295 = vpack.c.b16 %v4227, %v4225
        %v4296 = vpack.c.b16 %v4228, %v4226
        %v4297 = vpack.c.b16 %v4231, %v4229
        %v4298 = vpack.c.b16 %v4232, %v4230
        %v4299 = vpack.c.b16 %v4235, %v4233
        %v4300 = vpack.c.b16 %v4236, %v4234
        %4365 = vmatprep.subr.bf16.mxu0 %v4238
        %4366 = vmatpush1.bf16.msra.mxu0 %v4237
        %4367 = vmatprep.subr.bf16.mxu0 %v4240
        %4368 = vmatpush1.bf16.msra.mxu0 %v4239
        %4369 = vmatprep.subr.bf16.mxu0 %v4242
        %4370 = vmatpush1.bf16.msra.mxu0 %v4241
        %4371 = vmatprep.subr.bf16.mxu0 %v4244
        %4372 = vmatpush1.bf16.msra.mxu0 %v4243
        %4373 = vmatprep.subr.bf16.mxu0 %v4246
        %4374 = vmatpush1.bf16.msra.mxu0 %v4245
        %4375 = vmatprep.subr.bf16.mxu0 %v4248
        %4376 = vmatpush1.bf16.msra.mxu0 %v4247
        %4377 = vmatprep.subr.bf16.mxu0 %v4250
        %4378 = vmatpush1.bf16.msra.mxu0 %v4249
        %4379 = vmatprep.subr.bf16.mxu0 %v4252
        %4380 = vmatpush1.bf16.msra.mxu0 %v4251
        %4381 = vmatprep.subr.bf16.mxu0 %v4254
        %4382 = vmatpush1.bf16.msra.mxu0 %v4253
        %4383 = vmatprep.subr.bf16.mxu0 %v4256
        %4384 = vmatpush1.bf16.msra.mxu0 %v4255
        %4385 = vmatprep.subr.bf16.mxu0 %v4258
        %4386 = vmatpush1.bf16.msra.mxu0 %v4257
        %4387 = vmatprep.subr.bf16.mxu0 %v4260
        %4388 = vmatpush1.bf16.msra.mxu0 %v4259
        %4389 = vmatprep.subr.bf16.mxu0 %v4262
        %4390 = vmatpush1.bf16.msra.mxu0 %v4261
        %4391 = vmatprep.subr.bf16.mxu0 %v4264
        %4392 = vmatpush1.bf16.msra.mxu0 %v4263
        %4393 = vmatprep.subr.bf16.mxu0 %v4266
        %4394 = vmatpush1.bf16.msra.mxu0 %v4265
        %4395 = vmatprep.subr.bf16.mxu0 %v4268
        %4396 = vmatpush1.bf16.msra.mxu0 %v4267
        %4397 = vmatprep.mubr.bf16.mxu0 %v3966
        %4398 = vmatmul.mubr.bf16.gmra.mrb[0].mxu0 %v3965
        %v4399 = vpop.f32.mrb[0].mxu0
        %v4400 = vadd.f32 %v4038, %v4399
        %v4401 = vpop.f32.mrb[0].mxu0
        %v4402 = vadd.f32 %v4042, %v4401
        %v4403 = vpop.f32.mrb[0].mxu0
        %v4404 = vadd.f32 %v4038, %v4403
        %v4405 = vpop.f32.mrb[0].mxu0
        %v4406 = vadd.f32 %v4042, %v4405
        %4407 = vdwg.mxu0
        %4408 = vmatprep.subr.bf16.mxu0 %v4270
        %4409 = vmatpush1.bf16.msra.mxu0 %v4269
        %4410 = vmatprep.subr.bf16.mxu0 %v4272
        %4411 = vmatpush1.bf16.msra.mxu0 %v4271
        %4412 = vmatprep.subr.bf16.mxu0 %v4274
        %4413 = vmatpush1.bf16.msra.mxu0 %v4273
        %4414 = vmatprep.subr.bf16.mxu0 %v4276
        %4415 = vmatpush1.bf16.msra.mxu0 %v4275
        %4416 = vmatprep.subr.bf16.mxu0 %v4278
        %4417 = vmatpush1.bf16.msra.mxu0 %v4277
        %4418 = vmatprep.subr.bf16.mxu0 %v4280
        %4419 = vmatpush1.bf16.msra.mxu0 %v4279
        %4420 = vmatprep.subr.bf16.mxu0 %v4282
        %4421 = vmatpush1.bf16.msra.mxu0 %v4281
        %4422 = vmatprep.subr.bf16.mxu0 %v4284
        %4423 = vmatpush1.bf16.msra.mxu0 %v4283
        %4424 = vmatprep.subr.bf16.mxu0 %v4286
        %4425 = vmatpush1.bf16.msra.mxu0 %v4285
        %4426 = vmatprep.subr.bf16.mxu0 %v4288
        %4427 = vmatpush1.bf16.msra.mxu0 %v4287
        %4428 = vmatprep.subr.bf16.mxu0 %v4290
        %4429 = vmatpush1.bf16.msra.mxu0 %v4289
        %4430 = vmatprep.subr.bf16.mxu0 %v4292
        %4431 = vmatpush1.bf16.msra.mxu0 %v4291
        %4432 = vmatprep.subr.bf16.mxu0 %v4294
        %4433 = vmatpush1.bf16.msra.mxu0 %v4293
        %4434 = vmatprep.subr.bf16.mxu0 %v4296
        %4435 = vmatpush1.bf16.msra.mxu0 %v4295
        %4436 = vmatprep.subr.bf16.mxu0 %v4298
        %4437 = vmatpush1.bf16.msra.mxu0 %v4297
        %4438 = vmatprep.subr.bf16.mxu0 %v4300
        %4439 = vmatpush1.bf16.msra.mxu0 %v4299
        %4440 = vmatprep.mubr.bf16.mxu0 %v3968
        %4441 = vmatmul.mubr.bf16.gmra.mrb[0].mxu0 %v3967
        %v4442 = vpop.f32.mrb[0].mxu0
        %v4443 = vadd.f32 %v4400, %v4442
        %v4444 = vpop.f32.mrb[0].mxu0
        %v4445 = vadd.f32 %v4402, %v4444
        %v4446 = vpop.f32.mrb[0].mxu0
        %v4447 = vadd.f32 %v4404, %v4446
        %v4448 = vpop.f32.mrb[0].mxu0
        %v4449 = vadd.f32 %v4406, %v4448
        %4450 = vdwg.mxu0
        %v4451 = vadd.f32 %v3395, %v4443
        %v4452 = vadd.f32 %v3396, %v4445
        %v4453 = vadd.f32 %v3397, %v4447
        %v4454 = vadd.f32 %v3398, %v4449
        %v4455 = vld [vmem:[%s893] sm:$0x3]
        %v4456 = vld [vmem:[%s897] sm:$0x3]
        %v4457 = vadd.f32 %v4451, %v4452
        %4458 = vadd.xlane.f32.xlu0 %v4457
        %v4459 = vpop.xlane.xlu0 %4458
        %v4460 = vadd.f32 %v4453, %v4454
        %4461 = vadd.xlane.f32.xlu0 %v4460
        %v4462 = vpop.xlane.xlu0 %4461
        %v4463 = vmul.f32 %v4459, %v3342
        %v4464 = vmul.f32 %v4462, %v3342
        %v4465 = vsub.f32 %v4451, %v4463
        %v4466 = vsub.f32 %v4452, %v4463
        %v4467 = vsub.f32 %v4453, %v4464
        %v4468 = vsub.f32 %v4454, %v4464
        %v4469 = vmul.f32 %v4465, %v4465
        %v4470 = vmul.f32 %v4466, %v4466
        %v4471 = vmul.f32 %v4467, %v4467
        %v4472 = vmul.f32 %v4468, %v4468
        %v4473 = vadd.f32 %v4469, %v4470
        %4474 = vadd.xlane.f32.xlu0 %v4473
        %v4475 = vpop.xlane.xlu0 %4474
        %v4476 = vadd.f32 %v4471, %v4472
        %4477 = vadd.xlane.f32.xlu0 %v4476
        %v4478 = vpop.xlane.xlu0 %4477
        %v4479 = vmul.f32 %v4475, %v3342
        %v4480 = vmul.f32 %v4478, %v3342
        %v4481 = vadd.f32 %v4479, 1e-05
        %v4482 = vadd.f32 %v4480, 1e-05
        %v4483 = vrsqrt.pop %v4481
        %v4484 = vrsqrt.pop %v4482
        %v4485 = vmul.f32 %v4465, %v4483
        %v4486 = vmul.f32 %v4466, %v4483
        %v4487 = vmul.f32 %v4467, %v4484
        %v4488 = vmul.f32 %v4468, %v4484
        %v4490 = vlaneseq
        %v4491 = vshrl.u32 %v4490, 7
        %v4492 = vsub.s32 0, %v4491
        %v4493 = vrot.slane %v4455, %v4492
        %v4494 = vlaneseq
        %v4495 = vshrl.u32 %v4494, 7
        %v4496 = vsub.s32 1, %v4495
        %v4497 = vrot.slane %v4455, %v4496
        %v4500 = vmul.f32 %v4485, %v4493
        %v4501 = vmul.f32 %v4486, %v4497
        %v4502 = vmul.f32 %v4487, %v4493
        %v4503 = vmul.f32 %v4488, %v4497
        %v4505 = vlaneseq
        %v4506 = vshrl.u32 %v4505, 7
        %v4507 = vsub.s32 0, %v4506
        %v4508 = vrot.slane %v4456, %v4507
        %v4509 = vlaneseq
        %v4510 = vshrl.u32 %v4509, 7
        %v4511 = vsub.s32 1, %v4510
        %v4512 = vrot.slane %v4456, %v4511
        %v4515 = vadd.f32 %v4500, %v4508
        %v4516 = vadd.f32 %v4501, %v4512
        %v4517 = vadd.f32 %v4502, %v4508
        %v4518 = vadd.f32 %v4503, %v4512
        %4519 = vst [vmem:[#allocation2] sm:$0xff] %v4515
        %4520 = vst [vmem:[#allocation2 + $0x8] sm:$0xff] %v4516
        %4521 = vst [vmem:[#allocation2 + $0x10] sm:$0xff] %v4517
        %4522 = vst [vmem:[#allocation2 + $0x18] sm:$0xff] %v4518
        %p4523 = scmp.eq.s32.totalorder %s39, 1
        // Predicated region
        $region125: #{sequence_classification_forward.1} parent=99 // pred_check
          %p4524 = pneg %p4523
        $region126: #{sequence_classification_forward.1} parent=99 // pred_check_branch
          %4526 = sbr.rel (%p4524) target = $region128
        $region127: #{sequence_classification_forward.1} parent=99 // pred_region
          %v4527 = vpack.c.bf16 %v4515, %v4515
          %v4528 = vpack.c.bf16 %v4516, %v4516
          %v4529 = vpack.c.bf16 %v4517, %v4517
          %v4530 = vpack.c.bf16 %v4518, %v4518
          %v4531 = vld [vmem:[#allocation9] sm:$0xff]
          %v4532 = vld [vmem:[#allocation9 + $0x8] sm:$0xff]
          %v4533 = vld [vmem:[#allocation9 + $0x10] sm:$0xff]
          %v4534 = vld [vmem:[#allocation9 + $0x18] sm:$0xff]
          %v4535 = vld [vmem:[#allocation9 + $0x20] sm:$0xff]
          %v4536 = vld [vmem:[#allocation9 + $0x28] sm:$0xff]
          %v4537 = vld [vmem:[#allocation9 + $0x30] sm:$0xff]
          %v4538 = vld [vmem:[#allocation9 + $0x38] sm:$0xff]
          %v4539 = vld [vmem:[#allocation9 + $0x40] sm:$0xff]
          %v4540 = vld [vmem:[#allocation9 + $0x48] sm:$0xff]
          %v4541 = vld [vmem:[#allocation9 + $0x50] sm:$0xff]
          %v4542 = vld [vmem:[#allocation9 + $0x58] sm:$0xff]
          %v4543 = vld [vmem:[#allocation9 + $0x60] sm:$0xff]
          %v4544 = vld [vmem:[#allocation9 + $0x68] sm:$0xff]
          %v4545 = vld [vmem:[#allocation9 + $0x70] sm:$0xff]
          %v4546 = vld [vmem:[#allocation9 + $0x78] sm:$0xff]
          %v4547 = vld [vmem:[#allocation9 + $0x80] sm:$0xff]
          %v4548 = vld [vmem:[#allocation9 + $0x88] sm:$0xff]
          %v4549 = vld [vmem:[#allocation9 + $0x90] sm:$0xff]
          %v4550 = vld [vmem:[#allocation9 + $0x98] sm:$0xff]
          %v4551 = vld [vmem:[#allocation9 + $0xa0] sm:$0xff]
          %v4552 = vld [vmem:[#allocation9 + $0xa8] sm:$0xff]
          %v4553 = vld [vmem:[#allocation9 + $0xb0] sm:$0xff]
          %v4554 = vld [vmem:[#allocation9 + $0xb8] sm:$0xff]
          %v4555 = vld [vmem:[#allocation9 + $0xc0] sm:$0xff]
          %v4556 = vld [vmem:[#allocation9 + $0xc8] sm:$0xff]
          %v4557 = vld [vmem:[#allocation9 + $0xd0] sm:$0xff]
          %v4558 = vld [vmem:[#allocation9 + $0xd8] sm:$0xff]
          %v4559 = vld [vmem:[#allocation9 + $0xe0] sm:$0xff]
          %v4560 = vld [vmem:[#allocation9 + $0xe8] sm:$0xff]
          %v4561 = vld [vmem:[#allocation9 + $0xf0] sm:$0xff]
          %v4562 = vld [vmem:[#allocation9 + $0xf8] sm:$0xff]
          %v4563 = vld [vmem:[%s17] sm:$0x3]
          %v4565 = vlaneseq
          %v4566 = vshrl.u32 %v4565, 7
          %v4567 = vsub.s32 0, %v4566
          %v4568 = vrot.slane %v4563, %v4567
          %v4569 = vlaneseq
          %v4570 = vshrl.u32 %v4569, 7
          %v4571 = vsub.s32 1, %v4570
          %v4572 = vrot.slane %v4563, %v4571
          %v4579 = vunpack.c.l.b16 %v4527
          %v4580 = vunpack.c.l.b16 %v4528
          %v4581 = vunpack.c.l.b16 %v4529
          %v4582 = vunpack.c.l.b16 %v4530
          %v4583 = vrot.slane %v4581, 7
          %vm4584 = vcmask 1041409
          %v4585 = vsel %vm4584, %v4583, %v4579
          %v4586 = vrot.slane %v4582, 7
          %v4587 = vsel %vm4584, %v4586, %v4580
          %v4588 = vpack.c.b16 %v4585, %v4585
          %v4589 = vpack.c.b16 %v4587, %v4587
          %v4624 = vunpack.c.l.b16 %v4531
          %v4625 = vunpack.c.h.b16 %v4531
          %v4626 = vunpack.c.l.b16 %v4532
          %v4627 = vunpack.c.h.b16 %v4532
          %v4628 = vunpack.c.l.b16 %v4533
          %v4629 = vunpack.c.h.b16 %v4533
          %v4630 = vunpack.c.l.b16 %v4534
          %v4631 = vunpack.c.h.b16 %v4534
          %v4632 = vunpack.c.l.b16 %v4535
          %v4633 = vunpack.c.h.b16 %v4535
          %v4634 = vunpack.c.l.b16 %v4536
          %v4635 = vunpack.c.h.b16 %v4536
          %v4636 = vunpack.c.l.b16 %v4537
          %v4637 = vunpack.c.h.b16 %v4537
          %v4638 = vunpack.c.l.b16 %v4538
          %v4639 = vunpack.c.h.b16 %v4538
          %v4640 = vunpack.c.l.b16 %v4539
          %v4641 = vunpack.c.h.b16 %v4539
          %v4642 = vunpack.c.l.b16 %v4540
          %v4643 = vunpack.c.h.b16 %v4540
          %v4644 = vunpack.c.l.b16 %v4541
          %v4645 = vunpack.c.h.b16 %v4541
          %v4646 = vunpack.c.l.b16 %v4542
          %v4647 = vunpack.c.h.b16 %v4542
          %v4648 = vunpack.c.l.b16 %v4543
          %v4649 = vunpack.c.h.b16 %v4543
          %v4650 = vunpack.c.l.b16 %v4544
          %v4651 = vunpack.c.h.b16 %v4544
          %v4652 = vunpack.c.l.b16 %v4545
          %v4653 = vunpack.c.h.b16 %v4545
          %v4654 = vunpack.c.l.b16 %v4546
          %v4655 = vunpack.c.h.b16 %v4546
          %v4656 = vunpack.c.l.b16 %v4547
          %v4657 = vunpack.c.h.b16 %v4547
          %v4658 = vunpack.c.l.b16 %v4548
          %v4659 = vunpack.c.h.b16 %v4548
          %v4660 = vunpack.c.l.b16 %v4549
          %v4661 = vunpack.c.h.b16 %v4549
          %v4662 = vunpack.c.l.b16 %v4550
          %v4663 = vunpack.c.h.b16 %v4550
          %v4664 = vunpack.c.l.b16 %v4551
          %v4665 = vunpack.c.h.b16 %v4551
          %v4666 = vunpack.c.l.b16 %v4552
          %v4667 = vunpack.c.h.b16 %v4552
          %v4668 = vunpack.c.l.b16 %v4553
          %v4669 = vunpack.c.h.b16 %v4553
          %v4670 = vunpack.c.l.b16 %v4554
          %v4671 = vunpack.c.h.b16 %v4554
          %v4672 = vunpack.c.l.b16 %v4555
          %v4673 = vunpack.c.h.b16 %v4555
          %v4674 = vunpack.c.l.b16 %v4556
          %v4675 = vunpack.c.h.b16 %v4556
          %v4676 = vunpack.c.l.b16 %v4557
          %v4677 = vunpack.c.h.b16 %v4557
          %v4678 = vunpack.c.l.b16 %v4558
          %v4679 = vunpack.c.h.b16 %v4558
          %v4680 = vunpack.c.l.b16 %v4559
          %v4681 = vunpack.c.h.b16 %v4559
          %v4682 = vunpack.c.l.b16 %v4560
          %v4683 = vunpack.c.h.b16 %v4560
          %v4684 = vunpack.c.l.b16 %v4561
          %v4685 = vunpack.c.h.b16 %v4561
          %v4686 = vunpack.c.l.b16 %v4562
          %v4687 = vunpack.c.h.b16 %v4562
          %v4688 = vpack.c.b16 %v4626, %v4624
          %v4689 = vpack.c.b16 %v4627, %v4625
          %v4690 = vpack.c.b16 %v4630, %v4628
          %v4691 = vpack.c.b16 %v4631, %v4629
          %v4692 = vpack.c.b16 %v4634, %v4632
          %v4693 = vpack.c.b16 %v4635, %v4633
          %v4694 = vpack.c.b16 %v4638, %v4636
          %v4695 = vpack.c.b16 %v4639, %v4637
          %v4696 = vpack.c.b16 %v4642, %v4640
          %v4697 = vpack.c.b16 %v4643, %v4641
          %v4698 = vpack.c.b16 %v4646, %v4644
          %v4699 = vpack.c.b16 %v4647, %v4645
          %v4700 = vpack.c.b16 %v4650, %v4648
          %v4701 = vpack.c.b16 %v4651, %v4649
          %v4702 = vpack.c.b16 %v4654, %v4652
          %v4703 = vpack.c.b16 %v4655, %v4653
          %v4704 = vpack.c.b16 %v4658, %v4656
          %v4705 = vpack.c.b16 %v4659, %v4657
          %v4706 = vpack.c.b16 %v4662, %v4660
          %v4707 = vpack.c.b16 %v4663, %v4661
          %v4708 = vpack.c.b16 %v4666, %v4664
          %v4709 = vpack.c.b16 %v4667, %v4665
          %v4710 = vpack.c.b16 %v4670, %v4668
          %v4711 = vpack.c.b16 %v4671, %v4669
          %v4712 = vpack.c.b16 %v4674, %v4672
          %v4713 = vpack.c.b16 %v4675, %v4673
          %v4714 = vpack.c.b16 %v4678, %v4676
          %v4715 = vpack.c.b16 %v4679, %v4677
          %v4716 = vpack.c.b16 %v4682, %v4680
          %v4717 = vpack.c.b16 %v4683, %v4681
          %v4718 = vpack.c.b16 %v4686, %v4684
          %v4719 = vpack.c.b16 %v4687, %v4685
          %4752 = vmatprep.subr.bf16.mxu0 %v4689
          %4753 = vmatpush1.bf16.msra.mxu0 %v4688
          %4754 = vmatprep.subr.bf16.mxu0 %v4691
          %4755 = vmatpush1.bf16.msra.mxu0 %v4690
          %4756 = vmatprep.subr.bf16.mxu0 %v4693
          %4757 = vmatpush1.bf16.msra.mxu0 %v4692
          %4758 = vmatprep.subr.bf16.mxu0 %v4695
          %4759 = vmatpush1.bf16.msra.mxu0 %v4694
          %4760 = vmatprep.subr.bf16.mxu0 %v4697
          %4761 = vmatpush1.bf16.msra.mxu0 %v4696
          %4762 = vmatprep.subr.bf16.mxu0 %v4699
          %4763 = vmatpush1.bf16.msra.mxu0 %v4698
          %4764 = vmatprep.subr.bf16.mxu0 %v4701
          %4765 = vmatpush1.bf16.msra.mxu0 %v4700
          %4766 = vmatprep.subr.bf16.mxu0 %v4703
          %4767 = vmatpush1.bf16.msra.mxu0 %v4702
          %4768 = vmatprep.subr.bf16.mxu0 %v4705
          %4769 = vmatpush1.bf16.msra.mxu0 %v4704
          %4770 = vmatprep.subr.bf16.mxu0 %v4707
          %4771 = vmatpush1.bf16.msra.mxu0 %v4706
          %4772 = vmatprep.subr.bf16.mxu0 %v4709
          %4773 = vmatpush1.bf16.msra.mxu0 %v4708
          %4774 = vmatprep.subr.bf16.mxu0 %v4711
          %4775 = vmatpush1.bf16.msra.mxu0 %v4710
          %4776 = vmatprep.subr.bf16.mxu0 %v4713
          %4777 = vmatpush1.bf16.msra.mxu0 %v4712
          %4778 = vmatprep.subr.bf16.mxu0 %v4715
          %4779 = vmatpush1.bf16.msra.mxu0 %v4714
          %4780 = vmatprep.subr.bf16.mxu0 %v4717
          %4781 = vmatpush1.bf16.msra.mxu0 %v4716
          %4782 = vmatprep.subr.bf16.mxu0 %v4719
          %4783 = vmatpush1.bf16.msra.mxu0 %v4718
          %4784 = vmatprep.mubr.bf16.mxu0 %v4589
          %4785 = vmatmul.mubr.bf16.gmra.mrb[0].mxu0 %v4588
          %v4786 = vpop.f32.mrb[0].mxu0
          %v4787 = vadd.f32 %v4568, %v4786
          %v4788 = vpop.f32.mrb[0].mxu0
          %v4789 = vadd.f32 %v4572, %v4788
          %v4790 = vpop.f32.mrb[0].mxu0
          %v4791 = vpop.f32.mrb[0].mxu0
          %4792 = vdwg.mxu0
          %v4793 = vtanh.pop %v4787
          %v4794 = vtanh.pop %v4789
          %v4795 = vpack.c.bf16 %v4793, %v4793
          %v4796 = vpack.c.bf16 %v4794, %v4794
          %v4797 = vld [vmem:[#allocation11] sm:$0xf]
          %v4798 = vld [vmem:[#allocation11 + $0x4] sm:$0xf]
          %v4799 = vld [vmem:[#allocation11 + $0x8] sm:$0xf]
          %v4800 = vld [vmem:[#allocation11 + $0xc] sm:$0xf]
          %v4801 = vld [vmem:[#allocation11 + $0x10] sm:$0xf]
          %v4802 = vld [vmem:[#allocation11 + $0x14] sm:$0xf]
          %v4803 = vld [vmem:[#allocation11 + $0x18] sm:$0xf]
          %v4804 = vld [vmem:[#allocation11 + $0x1c] sm:$0xf]
          %v4805 = vld [vmem:[#allocation11 + $0x20] sm:$0xf]
          %v4806 = vld [vmem:[#allocation11 + $0x24] sm:$0xf]
          %v4807 = vld [vmem:[#allocation11 + $0x28] sm:$0xf]
          %v4808 = vld [vmem:[#allocation11 + $0x2c] sm:$0xf]
          %v4809 = vld [vmem:[#allocation11 + $0x30] sm:$0xf]
          %v4810 = vld [vmem:[#allocation11 + $0x34] sm:$0xf]
          %v4811 = vld [vmem:[#allocation11 + $0x38] sm:$0xf]
          %v4812 = vld [vmem:[#allocation11 + $0x3c] sm:$0xf]
          %v4813 = vld [vmem:[#allocation11 + $0x40] sm:$0xf]
          %v4814 = vld [vmem:[#allocation11 + $0x44] sm:$0xf]
          %v4815 = vld [vmem:[#allocation11 + $0x48] sm:$0xf]
          %v4816 = vld [vmem:[#allocation11 + $0x4c] sm:$0xf]
          %v4817 = vld [vmem:[#allocation11 + $0x50] sm:$0xf]
          %v4818 = vld [vmem:[#allocation11 + $0x54] sm:$0xf]
          %v4819 = vld [vmem:[#allocation11 + $0x58] sm:$0xf]
          %v4820 = vld [vmem:[#allocation11 + $0x5c] sm:$0xf]
          %v4821 = vld [vmem:[#allocation11 + $0x60] sm:$0xf]
          %v4822 = vld [vmem:[#allocation11 + $0x64] sm:$0xf]
          %v4823 = vld [vmem:[#allocation11 + $0x68] sm:$0xf]
          %v4824 = vld [vmem:[#allocation11 + $0x6c] sm:$0xf]
          %v4825 = vld [vmem:[#allocation11 + $0x70] sm:$0xf]
          %v4826 = vld [vmem:[#allocation11 + $0x74] sm:$0xf]
          %v4827 = vld [vmem:[#allocation11 + $0x78] sm:$0xf]
          %v4828 = vld [vmem:[#allocation11 + $0x7c] sm:$0xf]
          %v4829 = vld [vmem:[%s19] sm:$0x1]
          %v4831 = vlaneseq
          %v4832 = vshrl.u32 %v4831, 7
          %v4833 = vsub.s32 0, %v4832
          %v4834 = vrot.slane %v4829, %v4833
          %v4868 = vunpack.c.l.b16 %v4797
          %v4869 = vunpack.c.l.b16 %v4798
          %v4870 = vunpack.c.l.b16 %v4799
          %v4871 = vunpack.c.l.b16 %v4800
          %v4872 = vunpack.c.l.b16 %v4801
          %v4873 = vunpack.c.l.b16 %v4802
          %v4874 = vunpack.c.l.b16 %v4803
          %v4875 = vunpack.c.l.b16 %v4804
          %v4876 = vunpack.c.l.b16 %v4805
          %v4877 = vunpack.c.l.b16 %v4806
          %v4878 = vunpack.c.l.b16 %v4807
          %v4879 = vunpack.c.l.b16 %v4808
          %v4880 = vunpack.c.l.b16 %v4809
          %v4881 = vunpack.c.l.b16 %v4810
          %v4882 = vunpack.c.l.b16 %v4811
          %v4883 = vunpack.c.l.b16 %v4812
          %v4884 = vunpack.c.l.b16 %v4813
          %v4885 = vunpack.c.l.b16 %v4814
          %v4886 = vunpack.c.l.b16 %v4815
          %v4887 = vunpack.c.l.b16 %v4816
          %v4888 = vunpack.c.l.b16 %v4817
          %v4889 = vunpack.c.l.b16 %v4818
          %v4890 = vunpack.c.l.b16 %v4819
          %v4891 = vunpack.c.l.b16 %v4820
          %v4892 = vunpack.c.l.b16 %v4821
          %v4893 = vunpack.c.l.b16 %v4822
          %v4894 = vunpack.c.l.b16 %v4823
          %v4895 = vunpack.c.l.b16 %v4824
          %v4896 = vunpack.c.l.b16 %v4825
          %v4897 = vunpack.c.l.b16 %v4826
          %v4898 = vunpack.c.l.b16 %v4827
          %v4899 = vunpack.c.l.b16 %v4828
          %v4900 = vpack.c.b16 %v4869, %v4868
          %v4901 = vpack.c.b16 %v4871, %v4870
          %v4902 = vpack.c.b16 %v4873, %v4872
          %v4903 = vpack.c.b16 %v4875, %v4874
          %v4904 = vpack.c.b16 %v4877, %v4876
          %v4905 = vpack.c.b16 %v4879, %v4878
          %v4906 = vpack.c.b16 %v4881, %v4880
          %v4907 = vpack.c.b16 %v4883, %v4882
          %v4908 = vpack.c.b16 %v4885, %v4884
          %v4909 = vpack.c.b16 %v4887, %v4886
          %v4910 = vpack.c.b16 %v4889, %v4888
          %v4911 = vpack.c.b16 %v4891, %v4890
          %v4912 = vpack.c.b16 %v4893, %v4892
          %v4913 = vpack.c.b16 %v4895, %v4894
          %v4914 = vpack.c.b16 %v4897, %v4896
          %v4915 = vpack.c.b16 %v4899, %v4898
          %4932 = vmatprep.subr.bf16.mxu0 0
          %4933 = vmatpush1.bf16.msra.mxu0 %v4900
          %4934 = vmatprep.subr.bf16.mxu0 0
          %4935 = vmatpush1.bf16.msra.mxu0 %v4901
          %4936 = vmatprep.subr.bf16.mxu0 0
          %4937 = vmatpush1.bf16.msra.mxu0 %v4902
          %4938 = vmatprep.subr.bf16.mxu0 0
          %4939 = vmatpush1.bf16.msra.mxu0 %v4903
          %4940 = vmatprep.subr.bf16.mxu0 0
          %4941 = vmatpush1.bf16.msra.mxu0 %v4904
          %4942 = vmatprep.subr.bf16.mxu0 0
          %4943 = vmatpush1.bf16.msra.mxu0 %v4905
          %4944 = vmatprep.subr.bf16.mxu0 0
          %4945 = vmatpush1.bf16.msra.mxu0 %v4906
          %4946 = vmatprep.subr.bf16.mxu0 0
          %4947 = vmatpush1.bf16.msra.mxu0 %v4907
          %4948 = vmatprep.subr.bf16.mxu0 0
          %4949 = vmatpush1.bf16.msra.mxu0 %v4908
          %4950 = vmatprep.subr.bf16.mxu0 0
          %4951 = vmatpush1.bf16.msra.mxu0 %v4909
          %4952 = vmatprep.subr.bf16.mxu0 0
          %4953 = vmatpush1.bf16.msra.mxu0 %v4910
          %4954 = vmatprep.subr.bf16.mxu0 0
          %4955 = vmatpush1.bf16.msra.mxu0 %v4911
          %4956 = vmatprep.subr.bf16.mxu0 0
          %4957 = vmatpush1.bf16.msra.mxu0 %v4912
          %4958 = vmatprep.subr.bf16.mxu0 0
          %4959 = vmatpush1.bf16.msra.mxu0 %v4913
          %4960 = vmatprep.subr.bf16.mxu0 0
          %4961 = vmatpush1.bf16.msra.mxu0 %v4914
          %4962 = vmatprep.subr.bf16.mxu0 0
          %4963 = vmatpush1.bf16.msra.mxu0 %v4915
          %4964 = vmatprep.mubr.bf16.mxu0 %v4796
          %4965 = vmatmul.mubr.bf16.gmra.mrb[0].mxu0 %v4795
          %v4966 = vpop.f32.mrb[0].mxu0
          %v4967 = vadd.f32 %v4834, %v4966
          %v4968 = vpop.f32.mrb[0].mxu0
          %v4969 = vpop.f32.mrb[0].mxu0
          %v4970 = vpop.f32.mrb[0].mxu0
          %4971 = vdwg.mxu0
          %4972 = vst [vmem:[#allocation12] sm:$0x3] %v4967
        $region128: #{sequence_classification_forward.1} parent=99 // pred_fallthru
          _
        // Predicated region
        $region129: #{sequence_classification_forward.1} parent=99 // pred_check
          %p4973 = pneg %p532
        $region130: #{sequence_classification_forward.1} parent=99 // pred_check_branch
          %4975 = sbr.rel (%p4973) target = $region132
        $region131: #{sequence_classification_forward.1} parent=99 // pred_region
          %s4977 = ssub.s32 32, 32
          %4978 = vsyncadd [#allocation5], %s4977
          %s4980 = sshll.u32 [#allocation12], 4
          %s4981 = int_to_ptr.vmem [resolvable:$true] %s4980
          %4983 = dma.vmem_to_hbm [thread:$0]  %s4981, 32, %s20, [#allocation5]
        $region132: #{sequence_classification_forward.1} parent=99 // pred_fallthru
          _
        // Predicated region
        $region133: #{sequence_classification_forward.1} parent=99 // pred_check
          %p4984 = pneg %p532
        $region134: #{sequence_classification_forward.1} parent=99 // pred_check_branch
          %4986 = sbr.rel (%p4984) target = $region136
        $region135: #{sequence_classification_forward.1} parent=99 // pred_region
          %4987 = dma.done [#allocation5], 32
        $region136: #{sequence_classification_forward.1} parent=99 // pred_fallthru
          _
      $region100: #{sequence_classification_forward.1} parent=5 // pred_fallthru
        _
      %p4988 = scmp.le.s32.totalorder 2, %s34
      // Predicated region
      $region137: #{sequence_classification_forward.1} parent=5 // pred_check
        %p4989 = pneg %p4988
      $region138: #{sequence_classification_forward.1} parent=5 // pred_check_branch
        %4991 = sbr.rel (%p4989) target = $region140
      $region139: #{sequence_classification_forward.1} parent=5 // pred_region
        %s4992 = ssub.s32 %s34, 2
      $region140: #{sequence_classification_forward.1} parent=5 // pred_fallthru
        _
    $region6: #{sequence_classification_forward.1} parent=1 // loop_footer
      %s38 = sadd.s32 1, %s34
    $region7: #{sequence_classification_forward.1} parent=1 // loop_footer_branch
      %33 = sbr.rel target = $region3
    $region8: #{sequence_classification_forward.1} parent=1 // loop_exit
      _
    %4993 = vsyncpa [#allocation4], 1
    %s4994 = scalar_lea.sflag [#allocation4], 1
    %4995 = vsyncpa %s4994, 1
    %4996 = vsyncpa [#allocation7], 1
    %s4997 = scalar_lea.sflag [#allocation7], 1
    %4998 = vsyncpa %s4997, 1
    %4999 = vsyncpa [#allocation10], 1
    %5000 = vsyncpa [#allocation5], 1
    %s5001 = scalar_lea.sflag [#allocation5], 1
    %5002 = vsyncpa %s5001, 1

</llo_original>
